<compile_context>
chip_gen: v7x
topology: tpu7x:2x2x1
jax: 0.10.0
libtpu: 0.0.40
codegen_flags: <defaults>
</compile_context>

<pallas_src>
import functools

import jax
import jax.numpy as jnp
from jax.experimental import pallas as pl
from jax.experimental.pallas import tpu as pltpu

NEG_SLOPE = 0.01   # LeakyReLU / VNLeakyReLU negative slope (kept identical to previous version)
VN_EPS = 1e-6
LN_EPS = 1e-5
LANE = 128
F32 = jnp.float32
BF16 = jnp.bfloat16


def _round_up(x, m):
    return ((x + m - 1) // m) * m


def _pad_grid(n, tile_max=512):
    """(padded_count, tile): tile divides padded; multiples of 16 (bf16 sublane packing)."""
    if n <= tile_max:
        p = _round_up(max(n, 16), 16)
        return p, p
    return _round_up(n, tile_max), tile_max


def _cparams(block_bytes):
    limit = int(min(100 << 20, 2 * block_bytes + (16 << 20)))
    return pltpu.CompilerParams(dimension_semantics=("parallel",),
                                vmem_limit_bytes=limit)


# ---------------------------------------------------------------------------
# In-kernel helpers (traced inside the Pallas kernels)
# ---------------------------------------------------------------------------
def _mm(x, w_t):
    """(R,128) activation @ (128,128) pre-transposed bf16 weight -> f32 on the MXU."""
    return jnp.dot(x.astype(BF16), w_t, preferred_element_type=F32)


def _leaky(x):
    return jnp.where(x >= 0.0, x, NEG_SLOPE * x)


def _split3(v3, r):
    return v3[0:r], v3[r:2 * r], v3[2 * r:3 * r]


def _vn_leaky(v3, w_dir_t, r):
    """VN LeakyReLU; v3 is (3r, 128) row-stacked xyz (f32)."""
    d3 = _mm(v3, w_dir_t)                                   # one matmul for all 3 components
    vx, vy, vz = _split3(v3, r)
    dx, dy, dz = _split3(d3, r)
    dot = vx * dx + vy * dy + vz * dz
    dsq = dx * dx + dy * dy + dz * dz
    coef = jnp.where(dot >= 0.0, 0.0, dot / (dsq + VN_EPS))  # (r,128)
    out = jnp.concatenate([vx - coef * dx, vy - coef * dy, vz - coef * dz], axis=0)
    return NEG_SLOPE * v3 + (1.0 - NEG_SLOPE) * out


def _gv_linear(w_ref, base, b_gate, sca, vec3, r):
    """GVLinear. Weight-stack layout at [base..base+4]:
       lin_vec^T, lin_sca[:, :dh]^T, lin_sca[:, dh:]^T, lin_vec2^T, gate^T (128,128 bf16)."""
    vi3 = _mm(vec3, w_ref[base + 0])                         # VNLinear (3r,128)
    vx, vy, vz = _split3(vi3, r)
    vnorm = jnp.sqrt(vx * vx + vy * vy + vz * vz)
    out_sca = _mm(vnorm, w_ref[base + 1]) + _mm(sca, w_ref[base + 2])
    ov3 = _mm(vi3, w_ref[base + 3])                          # second VNLinear (3r,128)
    gate = jax.nn.sigmoid(_mm(out_sca, w_ref[base + 4]) + b_gate)   # (r,128)
    ox, oy, oz = _split3(ov3, r)
    out_vec3 = jnp.concatenate([ox * gate, oy * gate, oz * gate], axis=0)
    return out_sca, out_vec3


# ---------------------------------------------------------------------------
# Kernel 1: node GVLinear (message branch) + centroid GVLinear
# ---------------------------------------------------------------------------
def _node_pre_kernel(w_ref, b_ref, sca_ref, vec_ref, nsv_ref, xs_ref, xv_ref, *, tn):
    sca = sca_ref[...].astype(BF16)                          # cast once; feeds 2 matmuls
    vec3 = jnp.concatenate([vec_ref[0], vec_ref[1], vec_ref[2]], axis=0).astype(BF16)

    ns, nv3 = _gv_linear(w_ref, 0, b_ref[0], sca, vec3, tn)   # message-branch node GVLinear
    xs, xv3 = _gv_linear(w_ref, 5, b_ref[1], sca, vec3, tn)   # centroid_lin

    nvx, nvy, nvz = _split3(nv3, tn)
    nsv_ref[...] = jnp.concatenate([ns, nvx, nvy, nvz], axis=1).astype(BF16)
    xs_ref[...] = xs
    xvx, xvy, xvz = _split3(xv3, tn)
    xv_ref[0] = xvx
    xv_ref[1] = xvy
    xv_ref[2] = xvz


# ---------------------------------------------------------------------------
# Kernel 2: edge features + edge GVPerceptron + message math (per edge tile, parallel)
# ---------------------------------------------------------------------------
def _message_kernel(w_ref, b_ref, eslab_ref, esc_ref, msg_ref, *, te, ng, coeff):
    esc = esc_ref[...]                                       # (te, 8) f32
    dist = esc[:, 0:1]
    ann = esc[:, 1:2]                                        # 0 for padded edges
    u3 = jnp.concatenate([esc[:, 2:3], esc[:, 3:4], esc[:, 4:5]], axis=0)   # (3te,1)

    # edge scalar features: Gaussian smearing + pre-shifted one-hot edge types
    lane = jax.lax.broadcasted_iota(jnp.int32, (te, LANE), 1)
    gauss = jnp.exp(coeff * (dist - b_ref[6]) ** 2)          # (te,128)
    edge_sca = jnp.where(lane < ng, gauss, 0.0) + eslab_ref[:, 0:LANE].astype(F32)

    # EdgeExpansion as a VPU outer product with the Linear(1, ec) weight row
    ev3 = u3 * b_ref[5]                                      # (3te,128)

    # edge GVPerceptron
    es, ev3 = _gv_linear(w_ref, 0, b_ref[0], edge_sca, ev3, te)
    ev3 = _vn_leaky(ev3, w_ref[5], te)
    es = _leaky(es).astype(BF16)                             # cast once; feeds 3 matmuls

    # gathered source-node features (bf16; gather done by the wrapper with jnp.take)
    ns_e = eslab_ref[:, LANE:2 * LANE]
    nvx_e = eslab_ref[:, 2 * LANE:3 * LANE].astype(F32)
    nvy_e = eslab_ref[:, 3 * LANE:4 * LANE].astype(F32)
    nvz_e = eslab_ref[:, 4 * LANE:5 * LANE].astype(F32)

    # message math
    y_sca = ns_e.astype(F32) * (_mm(es, w_ref[6]) + b_ref[1])      # sca_linear
    a_e2n = _mm(es, w_ref[7]) + b_ref[2]                            # edge -> node-vec gate
    a_n2e = _mm(ns_e, w_ref[8]) + b_ref[3]                          # node -> edge-vec gate
    ev_vn3 = _mm(ev3, w_ref[9])                                     # edge VNLinear (3te,128)
    evx, evy, evz = _split3(ev_vn3, te)
    y_vec3 = jnp.concatenate([a_e2n * nvx_e + a_n2e * evx,
                              a_e2n * nvy_e + a_n2e * evy,
                              a_e2n * nvz_e + a_n2e * evz], axis=0)
    m_sca, m_vec3 = _gv_linear(w_ref, 10, b_ref[4], y_sca, y_vec3, te)

    # cosine-cutoff annealing (ann == 0 for padded edges -> zero messages before the scatter)
    mvx, mvy, mvz = _split3(m_vec3, te)
    msg_ref[...] = jnp.concatenate([m_sca * ann, mvx * ann, mvy * ann, mvz * ann], axis=1)


# ---------------------------------------------------------------------------
# Kernel 3: residual + LayerNorms + activations + out_transform GVLinear
# ---------------------------------------------------------------------------
def _node_post_kernel(w_ref, b_ref, xs_ref, xv_ref, aggr_ref, os_ref, ov_ref,
                      *, tn, hs, hv):
    lane = jax.lax.broadcasted_iota(jnp.int32, (tn, LANE), 1)

    sca = jnp.where(lane < hs, xs_ref[...] + aggr_ref[:, 0:LANE], 0.0)
    vx = jnp.where(lane < hv, xv_ref[0] + aggr_ref[:, LANE:2 * LANE], 0.0)
    vy = jnp.where(lane < hv, xv_ref[1] + aggr_ref[:, 2 * LANE:3 * LANE], 0.0)
    vz = jnp.where(lane < hv, xv_ref[2] + aggr_ref[:, 3 * LANE:4 * LANE], 0.0)

    # LayerNorm over the hs scalar channels (padded lanes are exactly zero)
    mean_s = jnp.sum(sca, axis=-1, keepdims=True) / hs
    cen_s = jnp.where(lane < hs, sca - mean_s, 0.0)
    var_s = jnp.sum(cen_s * cen_s, axis=-1, keepdims=True) / hs
    sca_ln = cen_s * jax.lax.rsqrt(var_s + LN_EPS) * b_ref[1] + b_ref[2]

    # LayerNorm over the (hv, 3) vector block
    tot = (jnp.sum(vx, axis=-1, keepdims=True) + jnp.sum(vy, axis=-1, keepdims=True)
           + jnp.sum(vz, axis=-1, keepdims=True))
    mean_v = tot / (3.0 * hv)
    cvx = jnp.where(lane < hv, vx - mean_v, 0.0)
    cvy = jnp.where(lane < hv, vy - mean_v, 0.0)
    cvz = jnp.where(lane < hv, vz - mean_v, 0.0)
    var_v = (jnp.sum(cvx * cvx, axis=-1, keepdims=True)
             + jnp.sum(cvy * cvy, axis=-1, keepdims=True)
             + jnp.sum(cvz * cvz, axis=-1, keepdims=True)) / (3.0 * hv)
    inv_v = jax.lax.rsqrt(var_v + LN_EPS)
    vec_ln3 = jnp.concatenate([cvx * inv_v * b_ref[3] + b_ref[6],
                               cvy * inv_v * b_ref[4] + b_ref[7],
                               cvz * inv_v * b_ref[5] + b_ref[8]], axis=0)

    # activations + out_transform
    sca_act = _leaky(sca_ln)
    vec_act3 = _vn_leaky(vec_ln3, w_ref[0], tn)
    out_s, out_v3 = _gv_linear(w_ref, 1, b_ref[0], sca_act, vec_act3, tn)
    os_ref[...] = out_s
    ovx, ovy, ovz = _split3(out_v3, tn)
    ov_ref[0] = ovx
    ov_ref[1] = ovy
    ov_ref[2] = ovz


# ---------------------------------------------------------------------------
# Parameter init (deterministic, PyTorch-Linear-style uniform init)
# ---------------------------------------------------------------------------
def init_linear(key, out_f, in_f, bias=True):
    k1, k2 = jax.random.split(key)
    bound = 1.0 / jnp.sqrt(jnp.float32(in_f))
    w = jax.random.uniform(k1, (out_f, in_f), F32, -bound, bound)
    b = jax.random.uniform(k2, (out_f,), F32, -bound, bound) if bias else None
    return w, b


def init_gvlinear(key, in_s, in_v, out_s, out_v):
    dim_hid = max(in_v, out_v)
    ks = jax.random.split(key, 4)
    return dict(
        dim_hid=dim_hid,
        lin_vec=init_linear(ks[0], dim_hid, in_v, bias=False)[0],
        lin_vec2=init_linear(ks[1], out_v, dim_hid, bias=False)[0],
        gate=init_linear(ks[2], out_v, out_s, bias=True),
        lin_sca=init_linear(ks[3], out_s, dim_hid + in_s, bias=False)[0],
    )


def init_gvperceptron(key, in_s, in_v, out_s, out_v):
    k1, k2 = jax.random.split(key)
    return dict(gv=init_gvlinear(k1, in_s, in_v, out_s, out_v),
                vn_w=init_linear(k2, out_v, out_v, bias=False)[0])


def init_message(key, node_sca, node_vec, edge_sca, edge_vec, out_sca, out_vec):
    ks = jax.random.split(key, 7)
    return dict(
        node_gv=init_gvlinear(ks[0], node_sca, node_vec, out_sca, out_vec),
        edge_gvp=init_gvperceptron(ks[1], edge_sca, edge_vec, edge_sca, edge_vec),
        sca_lin=init_linear(ks[2], out_sca, edge_sca, True),
        e2n=init_linear(ks[3], out_vec, edge_sca, True),
        n2e=init_linear(ks[4], out_vec, out_sca, True),
        edge_vn=init_linear(ks[5], out_vec, edge_vec, False)[0],
        out_gv=init_gvlinear(ks[6], out_sca, out_vec, out_sca, out_vec),
    )


def init_block(key, hs, hv, ec):
    ks = jax.random.split(key, 5)
    return dict(
        edge_exp_w=init_linear(ks[0], ec, 1, False)[0],           # EdgeExpansion Linear(1, ec)
        msg=init_message(ks[1], hs, hv, ec, ec, hs, hv),
        centroid=init_gvlinear(ks[2], hs, hv, hs, hv),
        out_transform=init_gvlinear(ks[3], hs, hv, hs, hv),
        act_vec_w=init_linear(ks[4], hv, hv, False)[0],           # VNLeakyReLU direction map
        ln_sca_g=jnp.ones((hs,), F32), ln_sca_b=jnp.zeros((hs,), F32),
        ln_vec_g=jnp.ones((hv, 3), F32), ln_vec_b=jnp.zeros((hv, 3), F32),
    )


# ---------------------------------------------------------------------------
# One-time weight packing: lane-dense bf16 weight stacks + f32 bias rows
# ---------------------------------------------------------------------------
def _prep_wt(w):
    """(out, in) torch-style weight -> pre-transposed, zero-padded (128,128) bf16."""
    w_t = jnp.transpose(w)
    r, c = w_t.shape
    return jnp.pad(w_t, ((0, LANE - r), (0, LANE - c))).astype(BF16)


def _prep_row(v):
    v = jnp.asarray(v, F32).reshape(-1)
    return jnp.pad(v, (0, LANE - v.shape[0])).reshape(1, LANE)


def _pack_gv(p):
    w = p['lin_sca']
    dh = p['dim_hid']
    gw, gb = p['gate']
    weights = [_prep_wt(p['lin_vec']), _prep_wt(w[:, :dh]), _prep_wt(w[:, dh:]),
               _prep_wt(p['lin_vec2']), _prep_wt(gw)]
    return weights, _prep_row(gb)


def pack_block(p, hs, hv, ec, ng, cutoff):
    assert max(hs, hv, ec) <= LANE, "channel dims must be <= 128 for this packing"
    assert ng >= 2
    # kernel 1
    w_ng, b_ng = _pack_gv(p['msg']['node_gv'])
    w_ce, b_ce = _pack_gv(p['centroid'])
    w1 = jnp.stack(w_ng + w_ce)                                   # (10,128,128) bf16
    b1 = jnp.stack([b_ng, b_ce])                                  # (2,1,128)   f32
    # kernel 2
    w_eg, b_eg = _pack_gv(p['msg']['edge_gvp']['gv'])
    w_og, b_og = _pack_gv(p['msg']['out_gv'])
    sw, sb = p['msg']['sca_lin']
    ew, eb = p['msg']['e2n']
    nw, nb = p['msg']['n2e']
    w2 = jnp.stack(w_eg
                   + [_prep_wt(p['msg']['edge_gvp']['vn_w']), _prep_wt(sw),
                      _prep_wt(ew), _prep_wt(nw), _prep_wt(p['msg']['edge_vn'])]
                   + w_og)                                        # (15,128,128)
    offsets = jnp.linspace(0.0, cutoff, ng)
    b2 = jnp.stack([b_eg, _prep_row(sb), _prep_row(eb), _prep_row(nb), b_og,
                    _prep_row(p['edge_exp_w'][:, 0]), _prep_row(offsets)])   # (7,1,128)
    # kernel 3
    w_ot, b_ot = _pack_gv(p['out_transform'])
    w3 = jnp.stack([_prep_wt(p['act_vec_w'])] + w_ot)             # (6,128,128)
    b3 = jnp.stack([b_ot,
                    _prep_row(p['ln_sca_g']), _prep_row(p['ln_sca_b']),
                    _prep_row(p['ln_vec_g'][:, 0]), _prep_row(p['ln_vec_g'][:, 1]),
                    _prep_row(p['ln_vec_g'][:, 2]),
                    _prep_row(p['ln_vec_b'][:, 0]), _prep_row(p['ln_vec_b'][:, 1]),
                    _prep_row(p['ln_vec_b'][:, 2])])              # (9,1,128)
    return dict(w1=w1, b1=b1, w2=w2, b2=b2, w3=w3, b3=b3)


# ---------------------------------------------------------------------------
# Block forward: pad once -> kernel1 -> take -> kernel2 -> segment_sum -> kernel3 -> slice
# ---------------------------------------------------------------------------
def block_forward(packed, node_sca, node_vec, edge_index, edge_feature, edge_vector,
                  *, hs, hv, ec, net, cutoff):
    n_nodes = node_sca.shape[0]
    n_edges = edge_index.shape[1]
    ng = ec - net
    n_pad, tn = _pad_grid(n_nodes)
    e_pad, te = _pad_grid(n_edges)

    # ---- lane-dense padded node features ----
    sca_p = jnp.zeros((n_pad, LANE), F32).at[:n_nodes, :hs].set(node_sca.astype(F32))
    vec_p = jnp.zeros((3, n_pad, LANE), F32).at[:, :n_nodes, :hv].set(
        jnp.transpose(node_vec.astype(F32), (2, 0, 1)))

    # ---- kernel 1: node GVLinears ----
    k1_bytes = (10 * LANE * LANE * 2 + 2 * LANE * 4
                + 8 * tn * LANE * 4 + tn * 4 * LANE * 2)
    nsv, xs, xv = pl.pallas_call(
        functools.partial(_node_pre_kernel, tn=tn),
        out_shape=(jax.ShapeDtypeStruct((n_pad, 4 * LANE), BF16),
                   jax.ShapeDtypeStruct((n_pad, LANE), F32),
                   jax.ShapeDtypeStruct((3, n_pad, LANE), F32)),
        grid_spec=pltpu.PrefetchScalarGridSpec(
            num_scalar_prefetch=0, grid=(n_pad // tn,),
            in_specs=[pl.BlockSpec((10, LANE, LANE), lambda i: (0, 0, 0)),
                      pl.BlockSpec((2, 1, LANE), lambda i: (0, 0, 0)),
                      pl.BlockSpec((tn, LANE), lambda i: (i, 0)),
                      pl.BlockSpec((3, tn, LANE), lambda i: (0, i, 0))],
            out_specs=[pl.BlockSpec((tn, 4 * LANE), lambda i: (i, 0)),
                       pl.BlockSpec((tn, LANE), lambda i: (i, 0)),
                       pl.BlockSpec((3, tn, LANE), lambda i: (0, i, 0))]),
        compiler_params=_cparams(k1_bytes),
    )(packed['w1'], packed['b1'], sca_p, vec_p)

    # ---- edge geometry + sort by destination row (cheap XLA glue) ----
    row = edge_index[0].astype(jnp.int32)
    col = edge_index[1].astype(jnp.int32)
    ev = edge_vector.astype(F32)
    dist = jnp.sqrt(jnp.sum(ev * ev, axis=-1))
    unit = ev / (dist[:, None] + 1e-7)
    ann = 0.5 * (jnp.cos(dist * jnp.pi / cutoff) + 1.0)
    ann = ann * ((dist <= cutoff) & (dist >= 0.0)).astype(F32)

    order = jnp.argsort(row)
    row_p = jnp.full((e_pad,), n_pad - 1, jnp.int32).at[:n_edges].set(row[order])
    col_p = jnp.zeros((e_pad,), jnp.int32).at[:n_edges].set(col[order])

    esc = jnp.zeros((e_pad, 8), F32)
    esc = esc.at[:n_edges, 0].set(dist[order])
    esc = esc.at[:n_edges, 1].set(ann[order])       # ann == 0 for padded edges -> zero messages
    esc = esc.at[:n_edges, 2:5].set(unit[order])

    efeat = jnp.zeros((e_pad, LANE), BF16).at[:n_edges, ng:ng + net].set(
        edge_feature[order].astype(BF16))
    gathered = jnp.take(nsv, col_p, axis=0)                       # (e_pad, 512) bf16 gather
    eslab = jnp.concatenate([efeat, gathered], axis=1)            # (e_pad, 640) bf16

    # ---- kernel 2: per-edge messages (grid over edge tiles, fully parallel) ----
    coeff = -0.5 / (cutoff / (ng - 1)) ** 2
    k2_bytes = (15 * LANE * LANE * 2 + 7 * LANE * 4
                + te * 5 * LANE * 2 + te * LANE * 4 + te * 4 * LANE * 4)
    msg = pl.pallas_call(
        functools.partial(_message_kernel, te=te, ng=ng, coeff=coeff),
        out_shape=jax.ShapeDtypeStruct((e_pad, 4 * LANE), F32),
        grid_spec=pltpu.PrefetchScalarGridSpec(
            num_scalar_prefetch=0, grid=(e_pad // te,),
            in_specs=[pl.BlockSpec((15, LANE, LANE), lambda i: (0, 0, 0)),
                      pl.BlockSpec((7, 1, LANE), lambda i: (0, 0, 0)),
                      pl.BlockSpec((te, 5 * LANE), lambda i: (i, 0)),
                      pl.BlockSpec((te, 8), lambda i: (i, 0))],
            out_specs=pl.BlockSpec((te, 4 * LANE), lambda i: (i, 0))),
        compiler_params=_cparams(k2_bytes),
    )(packed['w2'], packed['b2'], eslab, esc)

    # ---- sorted segment-sum scatter over destination nodes (O(E), XLA glue) ----
    aggr = jax.ops.segment_sum(msg, row_p, num_segments=n_pad, indices_are_sorted=True)

    # ---- kernel 3: residual + LayerNorms + activations + out_transform ----
    k3_bytes = (6 * LANE * LANE * 2 + 9 * LANE * 4
                + 8 * tn * LANE * 4 + tn * 4 * LANE * 4)
    out_s, out_v = pl.pallas_call(
        functools.partial(_node_post_kernel, tn=tn, hs=hs, hv=hv),
        out_shape=(jax.ShapeDtypeStruct((n_pad, LANE), F32),
                   jax.ShapeDtypeStruct((3, n_pad, LANE), F32)),
        grid_spec=pltpu.PrefetchScalarGridSpec(
            num_scalar_prefetch=0, grid=(n_pad // tn,),
            in_specs=[pl.BlockSpec((6, LANE, LANE), lambda i: (0, 0, 0)),
                      pl.BlockSpec((9, 1, LANE), lambda i: (0, 0, 0)),
                      pl.BlockSpec((tn, LANE), lambda i: (i, 0)),
                      pl.BlockSpec((3, tn, LANE), lambda i: (0, i, 0)),
                      pl.BlockSpec((tn, 4 * LANE), lambda i: (i, 0))],
            out_specs=[pl.BlockSpec((tn, LANE), lambda i: (i, 0)),
                       pl.BlockSpec((3, tn, LANE), lambda i: (0, i, 0))]),
        compiler_params=_cparams(k3_bytes),
    )(packed['w3'], packed['b3'], xs, xv, aggr)

    out_sca = out_s[:n_nodes, :hs]
    out_vec = jnp.transpose(out_v[:, :n_nodes, :hv], (1, 2, 0))
    return out_sca, out_vec


# ---------------------------------------------------------------------------
# Pure-JAX f32 reference (same math, no padding / bf16) for validation
# ---------------------------------------------------------------------------
def reference_forward(p, node_sca, node_vec, edge_index, edge_feature, edge_vector,
                      *, hs, hv, ec, net, cutoff):
    def leaky(x):
        return jnp.where(x >= 0, x, NEG_SLOPE * x)

    def gv_linear(gp, sca, vec):
        vi = jnp.einsum('nvd,hv->nhd', vec, gp['lin_vec'])
        vnorm = jnp.sqrt(jnp.sum(vi * vi, axis=-1))
        out_sca = jnp.concatenate([vnorm, sca], axis=-1) @ gp['lin_sca'].T
        out_vec = jnp.einsum('nhd,oh->nod', vi, gp['lin_vec2'])
        gw, gb = gp['gate']
        gate = jax.nn.sigmoid(out_sca @ gw.T + gb)
        return out_sca, gate[..., None] * out_vec

    def vn_leaky(w, x):
        d = jnp.einsum('ncd,oc->nod', x, w)
        dot = jnp.sum(x * d, axis=-1, keepdims=True)
        dsq = jnp.sum(d * d, axis=-1, keepdims=True)
        mask = (dot >= 0).astype(F32)
        return NEG_SLOPE * x + (1 - NEG_SLOPE) * (
            mask * x + (1 - mask) * (x - (dot / (dsq + VN_EPS)) * d))

    row, col = edge_index[0], edge_index[1]
    n = node_sca.shape[0]
    ng = ec - net
    dist = jnp.sqrt(jnp.sum(edge_vector * edge_vector, axis=-1))
    offsets = jnp.linspace(0.0, cutoff, ng)
    coeff = -0.5 / (cutoff / (ng - 1)) ** 2
    gauss = jnp.exp(coeff * (dist[:, None] - offsets[None, :]) ** 2)
    edge_sca = jnp.concatenate([gauss, edge_feature], axis=-1)
    unit = edge_vector / (dist[:, None] + 1e-7)
    edge_vec = unit[:, None, :] * p['edge_exp_w'][None, :, :]      # (E, ec, 3)

    mp = p['msg']
    ns, nv = gv_linear(mp['node_gv'], node_sca, node_vec)
    ns_e, nv_e = ns[col], nv[col]
    es, ev2 = gv_linear(mp['edge_gvp']['gv'], edge_sca, edge_vec)
    ev2 = vn_leaky(mp['edge_gvp']['vn_w'], ev2)
    es = leaky(es)
    sw, sb = mp['sca_lin']
    ew, eb = mp['e2n']
    nw, nb = mp['n2e']
    y_sca = ns_e * (es @ sw.T + sb)
    y_vec = ((es @ ew.T + eb)[..., None] * nv_e
             + (ns_e @ nw.T + nb)[..., None] * jnp.einsum('ncd,oc->nod', ev2, mp['edge_vn']))
    m_sca, m_vec = gv_linear(mp['out_gv'], y_sca, y_vec)
    c_ann = 0.5 * (jnp.cos(dist * jnp.pi / cutoff) + 1.0)
    c_ann = c_ann * ((dist <= cutoff) & (dist >= 0.0)).astype(F32)
    m_sca = m_sca * c_ann[:, None]
    m_vec = m_vec * c_ann[:, None, None]
    aggr_sca = jax.ops.segment_sum(m_sca, row, num_segments=n)
    aggr_vec = jax.ops.segment_sum(m_vec, row, num_segments=n)

    xs, xv = gv_linear(p['centroid'], node_sca, node_vec)
    out_sca = xs + aggr_sca
    out_vec = xv + aggr_vec
    mu = out_sca.mean(-1, keepdims=True)
    var = out_sca.var(-1, keepdims=True)
    out_sca = (out_sca - mu) / jnp.sqrt(var + LN_EPS) * p['ln_sca_g'] + p['ln_sca_b']
    flat = out_vec.reshape(n, hv * 3)
    mu_v = flat.mean(-1, keepdims=True)
    var_v = flat.var(-1, keepdims=True)
    out_vec = (((flat - mu_v) / jnp.sqrt(var_v + LN_EPS)).reshape(n, hv, 3)
               * p['ln_vec_g'] + p['ln_vec_b'])
    out_sca = leaky(out_sca)
    out_vec = vn_leaky(p['act_vec_w'], out_vec)
    return gv_linear(p['out_transform'], out_sca, out_vec)


# ---------------------------------------------------------------------------
if __name__ == "__main__":
    key = jax.random.PRNGKey(0)

    hidden_channels = [32, 8]
    edge_channels = 16
    num_edge_types = 4
    cutoff = 10.0
    N, E = 12, 24
    hs, hv = hidden_channels
    ec, net = edge_channels, num_edge_types

    kp, k1, k2, k3, k4, k5 = jax.random.split(key, 6)
    params = init_block(kp, hs, hv, ec)
    packed = pack_block(params, hs, hv, ec, ec - net, cutoff)

    node_sca = jax.random.normal(k1, (N, hs), F32)
    node_vec = jax.random.normal(k2, (N, hv, 3), F32)
    pos = 3.0 * jax.random.normal(k3, (N, 3), F32)
    edge_index = jax.random.randint(k4, (2, E), 0, N, dtype=jnp.int32)
    edge_feature = jax.random.normal(k5, (E, net), F32)
    edge_vector = pos[edge_index[0]] - pos[edge_index[1]]

    fwd = jax.jit(functools.partial(block_forward, hs=hs, hv=hv, ec=ec, net=net,
                                    cutoff=cutoff))
    out_sca, out_vec = fwd(packed, node_sca, node_vec, edge_index, edge_feature,
                           edge_vector)
    out_sca = jax.block_until_ready(out_sca)
    out_vec = jax.block_until_ready(out_vec)

    assert out_sca.shape == (N, hs) and out_vec.shape == (N, hv, 3)
    assert bool(jnp.all(jnp.isfinite(out_sca))) and bool(jnp.all(jnp.isfinite(out_vec)))

    ref_sca, ref_vec = reference_forward(params, node_sca, node_vec, edge_index,
                                         edge_feature, edge_vector,
                                         hs=hs, hv=hv, ec=ec, net=net, cutoff=cutoff)
    # bf16 weights / bf16 inter-kernel slab -> loose tolerance vs the f32 reference
    assert bool(jnp.allclose(out_sca, ref_sca, rtol=5e-2, atol=5e-2))
    assert bool(jnp.allclose(out_vec, ref_vec, rtol=5e-2, atol=5e-2))
    print("KERNEL_OK")
</pallas_src>

<mosaic_0001>
module attributes {stable_mosaic.version = 11 : i64} {
  func.func @_node_pre_kernel(%arg0: i32, %arg1: memref<10x128x128xbf16, #tpu.memory_space<vmem>>, %arg2: memref<2x1x128xf32, #tpu.memory_space<vmem>>, %arg3: memref<16x128xf32, #tpu.memory_space<vmem>>, %arg4: memref<3x16x128xf32, #tpu.memory_space<vmem>>, %arg5: memref<16x512xbf16, #tpu.memory_space<vmem>>, %arg6: memref<16x128xf32, #tpu.memory_space<vmem>>, %arg7: memref<3x16x128xf32, #tpu.memory_space<vmem>>) attributes {dimension_semantics = [#tpu.dimension_semantics<parallel>], iteration_bounds = array<i64: 1>, scalar_prefetch = 0 : i64, scratch_operands = 0 : i64, tpu.core_type = #tpu.core_type<tc>, window_params = [{pipeline_mode = #tpu.pipeline_mode<synchronous>, transform_indices = @transform_0, window_bounds = array<i64: 10, 128, 128>}, {pipeline_mode = #tpu.pipeline_mode<synchronous>, transform_indices = @transform_1, window_bounds = array<i64: 2, 1, 128>}, {transform_indices = @transform_2, window_bounds = array<i64: 16, 128>}, {transform_indices = @transform_3, window_bounds = array<i64: 3, 16, 128>}, {transform_indices = @transform_4, window_bounds = array<i64: 16, 512>}, {transform_indices = @transform_5, window_bounds = array<i64: 16, 128>}, {transform_indices = @transform_6, window_bounds = array<i64: 3, 16, 128>}]} {
    %c0 = arith.constant 0 : index
    %c0_0 = arith.constant 0 : index
    %0 = vector.load %arg3[%c0, %c0_0] : memref<16x128xf32, #tpu.memory_space<vmem>>, vector<16x128xf32>
    %1 = arith.truncf %0 : vector<16x128xf32> to vector<16x128xbf16>
    %c0_1 = arith.constant 0 : index
    %c0_2 = arith.constant 0 : index
    %c0_3 = arith.constant 0 : index
    %2 = vector.load %arg4[%c0_1, %c0_2, %c0_3] : memref<3x16x128xf32, #tpu.memory_space<vmem>>, vector<1x16x128xf32>
    %3 = vector.shape_cast %2 : vector<1x16x128xf32> to vector<16x128xf32>
    %c1 = arith.constant 1 : index
    %c0_4 = arith.constant 0 : index
    %c0_5 = arith.constant 0 : index
    %4 = vector.load %arg4[%c1, %c0_4, %c0_5] : memref<3x16x128xf32, #tpu.memory_space<vmem>>, vector<1x16x128xf32>
    %5 = vector.shape_cast %4 : vector<1x16x128xf32> to vector<16x128xf32>
    %c2 = arith.constant 2 : index
    %c0_6 = arith.constant 0 : index
    %c0_7 = arith.constant 0 : index
    %6 = vector.load %arg4[%c2, %c0_6, %c0_7] : memref<3x16x128xf32, #tpu.memory_space<vmem>>, vector<1x16x128xf32>
    %7 = vector.shape_cast %6 : vector<1x16x128xf32> to vector<16x128xf32>
    %8 = tpu.concatenate %3, %5, %7 in 0 : vector<16x128xf32>, vector<16x128xf32>, vector<16x128xf32> -> vector<48x128xf32>
    %9 = arith.truncf %8 : vector<48x128xf32> to vector<48x128xbf16>
    %c0_8 = arith.constant 0 : index
    %c0_9 = arith.constant 0 : index
    %c0_10 = arith.constant 0 : index
    %10 = vector.load %arg2[%c0_8, %c0_9, %c0_10] : memref<2x1x128xf32, #tpu.memory_space<vmem>>, vector<1x1x128xf32>
    %11 = vector.shape_cast %10 : vector<1x1x128xf32> to vector<1x128xf32>
    %c0_11 = arith.constant 0 : index
    %c0_12 = arith.constant 0 : index
    %c0_13 = arith.constant 0 : index
    %12 = vector.load %arg1[%c0_11, %c0_12, %c0_13] : memref<10x128x128xbf16, #tpu.memory_space<vmem>>, vector<1x128x128xbf16>
    %13 = vector.shape_cast %12 : vector<1x128x128xbf16> to vector<128x128xbf16>
    %cst = arith.constant dense<0.000000e+00> : vector<48x128xf32>
    %14 = tpu.matmul %9, %13, %cst {dimension_numbers = #tpu.dot_dimension_numbers<[1], [0], [0], [1], [0, 0, 1, 1], [], []>} : vector<48x128xbf16>, vector<128x128xbf16>, vector<48x128xf32> -> vector<48x128xf32>
    %15 = vector.extract_strided_slice %14 {offsets = [0, 0], sizes = [16, 128], strides = [1, 1]} : vector<48x128xf32> to vector<16x128xf32>
    %16 = vector.extract_strided_slice %14 {offsets = [16, 0], sizes = [16, 128], strides = [1, 1]} : vector<48x128xf32> to vector<16x128xf32>
    %17 = vector.extract_strided_slice %14 {offsets = [32, 0], sizes = [16, 128], strides = [1, 1]} : vector<48x128xf32> to vector<16x128xf32>
    %18 = arith.mulf %15, %15 : vector<16x128xf32>
    %19 = arith.mulf %16, %16 : vector<16x128xf32>
    %20 = arith.addf %18, %19 : vector<16x128xf32>
    %21 = arith.mulf %17, %17 : vector<16x128xf32>
    %22 = arith.addf %20, %21 : vector<16x128xf32>
    %23 = math.sqrt %22 : vector<16x128xf32>
    %c1_14 = arith.constant 1 : index
    %c0_15 = arith.constant 0 : index
    %c0_16 = arith.constant 0 : index
    %24 = vector.load %arg1[%c1_14, %c0_15, %c0_16] : memref<10x128x128xbf16, #tpu.memory_space<vmem>>, vector<1x128x128xbf16>
    %25 = vector.shape_cast %24 : vector<1x128x128xbf16> to vector<128x128xbf16>
    %26 = arith.truncf %23 : vector<16x128xf32> to vector<16x128xbf16>
    %cst_17 = arith.constant dense<0.000000e+00> : vector<16x128xf32>
    %27 = tpu.matmul %26, %25, %cst_17 {dimension_numbers = #tpu.dot_dimension_numbers<[1], [0], [0], [1], [0, 0, 1, 1], [], []>} : vector<16x128xbf16>, vector<128x128xbf16>, vector<16x128xf32> -> vector<16x128xf32>
    %c2_18 = arith.constant 2 : index
    %c0_19 = arith.constant 0 : index
    %c0_20 = arith.constant 0 : index
    %28 = vector.load %arg1[%c2_18, %c0_19, %c0_20] : memref<10x128x128xbf16, #tpu.memory_space<vmem>>, vector<1x128x128xbf16>
    %29 = vector.shape_cast %28 : vector<1x128x128xbf16> to vector<128x128xbf16>
    %cst_21 = arith.constant dense<0.000000e+00> : vector<16x128xf32>
    %30 = tpu.matmul %1, %29, %cst_21 {dimension_numbers = #tpu.dot_dimension_numbers<[1], [0], [0], [1], [0, 0, 1, 1], [], []>} : vector<16x128xbf16>, vector<128x128xbf16>, vector<16x128xf32> -> vector<16x128xf32>
    %31 = arith.addf %27, %30 : vector<16x128xf32>
    %c3 = arith.constant 3 : index
    %c0_22 = arith.constant 0 : index
    %c0_23 = arith.constant 0 : index
    %32 = vector.load %arg1[%c3, %c0_22, %c0_23] : memref<10x128x128xbf16, #tpu.memory_space<vmem>>, vector<1x128x128xbf16>
    %33 = vector.shape_cast %32 : vector<1x128x128xbf16> to vector<128x128xbf16>
    %34 = arith.truncf %14 : vector<48x128xf32> to vector<48x128xbf16>
    %cst_24 = arith.constant dense<0.000000e+00> : vector<48x128xf32>
    %35 = tpu.matmul %34, %33, %cst_24 {dimension_numbers = #tpu.dot_dimension_numbers<[1], [0], [0], [1], [0, 0, 1, 1], [], []>} : vector<48x128xbf16>, vector<128x128xbf16>, vector<48x128xf32> -> vector<48x128xf32>
    %c4 = arith.constant 4 : index
    %c0_25 = arith.constant 0 : index
    %c0_26 = arith.constant 0 : index
    %36 = vector.load %arg1[%c4, %c0_25, %c0_26] : memref<10x128x128xbf16, #tpu.memory_space<vmem>>, vector<1x128x128xbf16>
    %37 = vector.shape_cast %36 : vector<1x128x128xbf16> to vector<128x128xbf16>
    %38 = arith.truncf %31 : vector<16x128xf32> to vector<16x128xbf16>
    %cst_27 = arith.constant dense<0.000000e+00> : vector<16x128xf32>
    %39 = tpu.matmul %38, %37, %cst_27 {dimension_numbers = #tpu.dot_dimension_numbers<[1], [0], [0], [1], [0, 0, 1, 1], [], []>} : vector<16x128xbf16>, vector<128x128xbf16>, vector<16x128xf32> -> vector<16x128xf32>
    %40 = vector.broadcast %11 : vector<1x128xf32> to vector<16x128xf32>
    %41 = arith.addf %39, %40 : vector<16x128xf32>
    %42 = arith.negf %41 : vector<16x128xf32>
    %43 = math.exp %42 : vector<16x128xf32>
    %cst_28 = arith.constant 1.000000e+00 : f32
    %44 = vector.broadcast %cst_28 : f32 to vector<16x128xf32>
    %45 = arith.addf %44, %43 : vector<16x128xf32>
    %46 = arith.divf %44, %45 : vector<16x128xf32>
    %47 = vector.extract_strided_slice %35 {offsets = [0, 0], sizes = [16, 128], strides = [1, 1]} : vector<48x128xf32> to vector<16x128xf32>
    %48 = vector.extract_strided_slice %35 {offsets = [16, 0], sizes = [16, 128], strides = [1, 1]} : vector<48x128xf32> to vector<16x128xf32>
    %49 = vector.extract_strided_slice %35 {offsets = [32, 0], sizes = [16, 128], strides = [1, 1]} : vector<48x128xf32> to vector<16x128xf32>
    %50 = arith.mulf %47, %46 : vector<16x128xf32>
    %51 = arith.mulf %48, %46 : vector<16x128xf32>
    %52 = arith.mulf %49, %46 : vector<16x128xf32>
    %53 = tpu.concatenate %50, %51, %52 in 0 : vector<16x128xf32>, vector<16x128xf32>, vector<16x128xf32> -> vector<48x128xf32>
    %c1_29 = arith.constant 1 : index
    %c0_30 = arith.constant 0 : index
    %c0_31 = arith.constant 0 : index
    %54 = vector.load %arg2[%c1_29, %c0_30, %c0_31] : memref<2x1x128xf32, #tpu.memory_space<vmem>>, vector<1x1x128xf32>
    %55 = vector.shape_cast %54 : vector<1x1x128xf32> to vector<1x128xf32>
    %c5 = arith.constant 5 : index
    %c0_32 = arith.constant 0 : index
    %c0_33 = arith.constant 0 : index
    %56 = vector.load %arg1[%c5, %c0_32, %c0_33] : memref<10x128x128xbf16, #tpu.memory_space<vmem>>, vector<1x128x128xbf16>
    %57 = vector.shape_cast %56 : vector<1x128x128xbf16> to vector<128x128xbf16>
    %cst_34 = arith.constant dense<0.000000e+00> : vector<48x128xf32>
    %58 = tpu.matmul %9, %57, %cst_34 {dimension_numbers = #tpu.dot_dimension_numbers<[1], [0], [0], [1], [0, 0, 1, 1], [], []>} : vector<48x128xbf16>, vector<128x128xbf16>, vector<48x128xf32> -> vector<48x128xf32>
    %59 = vector.extract_strided_slice %58 {offsets = [0, 0], sizes = [16, 128], strides = [1, 1]} : vector<48x128xf32> to vector<16x128xf32>
    %60 = vector.extract_strided_slice %58 {offsets = [16, 0], sizes = [16, 128], strides = [1, 1]} : vector<48x128xf32> to vector<16x128xf32>
    %61 = vector.extract_strided_slice %58 {offsets = [32, 0], sizes = [16, 128], strides = [1, 1]} : vector<48x128xf32> to vector<16x128xf32>
    %62 = arith.mulf %59, %59 : vector<16x128xf32>
    %63 = arith.mulf %60, %60 : vector<16x128xf32>
    %64 = arith.addf %62, %63 : vector<16x128xf32>
    %65 = arith.mulf %61, %61 : vector<16x128xf32>
    %66 = arith.addf %64, %65 : vector<16x128xf32>
    %67 = math.sqrt %66 : vector<16x128xf32>
    %c6 = arith.constant 6 : index
    %c0_35 = arith.constant 0 : index
    %c0_36 = arith.constant 0 : index
    %68 = vector.load %arg1[%c6, %c0_35, %c0_36] : memref<10x128x128xbf16, #tpu.memory_space<vmem>>, vector<1x128x128xbf16>
    %69 = vector.shape_cast %68 : vector<1x128x128xbf16> to vector<128x128xbf16>
    %70 = arith.truncf %67 : vector<16x128xf32> to vector<16x128xbf16>
    %cst_37 = arith.constant dense<0.000000e+00> : vector<16x128xf32>
    %71 = tpu.matmul %70, %69, %cst_37 {dimension_numbers = #tpu.dot_dimension_numbers<[1], [0], [0], [1], [0, 0, 1, 1], [], []>} : vector<16x128xbf16>, vector<128x128xbf16>, vector<16x128xf32> -> vector<16x128xf32>
    %c7 = arith.constant 7 : index
    %c0_38 = arith.constant 0 : index
    %c0_39 = arith.constant 0 : index
    %72 = vector.load %arg1[%c7, %c0_38, %c0_39] : memref<10x128x128xbf16, #tpu.memory_space<vmem>>, vector<1x128x128xbf16>
    %73 = vector.shape_cast %72 : vector<1x128x128xbf16> to vector<128x128xbf16>
    %cst_40 = arith.constant dense<0.000000e+00> : vector<16x128xf32>
    %74 = tpu.matmul %1, %73, %cst_40 {dimension_numbers = #tpu.dot_dimension_numbers<[1], [0], [0], [1], [0, 0, 1, 1], [], []>} : vector<16x128xbf16>, vector<128x128xbf16>, vector<16x128xf32> -> vector<16x128xf32>
    %75 = arith.addf %71, %74 : vector<16x128xf32>
    %c8 = arith.constant 8 : index
    %c0_41 = arith.constant 0 : index
    %c0_42 = arith.constant 0 : index
    %76 = vector.load %arg1[%c8, %c0_41, %c0_42] : memref<10x128x128xbf16, #tpu.memory_space<vmem>>, vector<1x128x128xbf16>
    %77 = vector.shape_cast %76 : vector<1x128x128xbf16> to vector<128x128xbf16>
    %78 = arith.truncf %58 : vector<48x128xf32> to vector<48x128xbf16>
    %cst_43 = arith.constant dense<0.000000e+00> : vector<48x128xf32>
    %79 = tpu.matmul %78, %77, %cst_43 {dimension_numbers = #tpu.dot_dimension_numbers<[1], [0], [0], [1], [0, 0, 1, 1], [], []>} : vector<48x128xbf16>, vector<128x128xbf16>, vector<48x128xf32> -> vector<48x128xf32>
    %c9 = arith.constant 9 : index
    %c0_44 = arith.constant 0 : index
    %c0_45 = arith.constant 0 : index
    %80 = vector.load %arg1[%c9, %c0_44, %c0_45] : memref<10x128x128xbf16, #tpu.memory_space<vmem>>, vector<1x128x128xbf16>
    %81 = vector.shape_cast %80 : vector<1x128x128xbf16> to vector<128x128xbf16>
    %82 = arith.truncf %75 : vector<16x128xf32> to vector<16x128xbf16>
    %cst_46 = arith.constant dense<0.000000e+00> : vector<16x128xf32>
    %83 = tpu.matmul %82, %81, %cst_46 {dimension_numbers = #tpu.dot_dimension_numbers<[1], [0], [0], [1], [0, 0, 1, 1], [], []>} : vector<16x128xbf16>, vector<128x128xbf16>, vector<16x128xf32> -> vector<16x128xf32>
    %84 = vector.broadcast %55 : vector<1x128xf32> to vector<16x128xf32>
    %85 = arith.addf %83, %84 : vector<16x128xf32>
    %86 = arith.negf %85 : vector<16x128xf32>
    %87 = math.exp %86 : vector<16x128xf32>
    %cst_47 = arith.constant 1.000000e+00 : f32
    %88 = vector.broadcast %cst_47 : f32 to vector<16x128xf32>
    %89 = arith.addf %88, %87 : vector<16x128xf32>
    %90 = arith.divf %88, %89 : vector<16x128xf32>
    %91 = vector.extract_strided_slice %79 {offsets = [0, 0], sizes = [16, 128], strides = [1, 1]} : vector<48x128xf32> to vector<16x128xf32>
    %92 = vector.extract_strided_slice %79 {offsets = [16, 0], sizes = [16, 128], strides = [1, 1]} : vector<48x128xf32> to vector<16x128xf32>
    %93 = vector.extract_strided_slice %79 {offsets = [32, 0], sizes = [16, 128], strides = [1, 1]} : vector<48x128xf32> to vector<16x128xf32>
    %94 = arith.mulf %91, %90 : vector<16x128xf32>
    %95 = arith.mulf %92, %90 : vector<16x128xf32>
    %96 = arith.mulf %93, %90 : vector<16x128xf32>
    %97 = tpu.concatenate %94, %95, %96 in 0 : vector<16x128xf32>, vector<16x128xf32>, vector<16x128xf32> -> vector<48x128xf32>
    %98 = vector.extract_strided_slice %53 {offsets = [0, 0], sizes = [16, 128], strides = [1, 1]} : vector<48x128xf32> to vector<16x128xf32>
    %99 = vector.extract_strided_slice %53 {offsets = [16, 0], sizes = [16, 128], strides = [1, 1]} : vector<48x128xf32> to vector<16x128xf32>
    %100 = vector.extract_strided_slice %53 {offsets = [32, 0], sizes = [16, 128], strides = [1, 1]} : vector<48x128xf32> to vector<16x128xf32>
    %101 = tpu.concatenate %31, %98, %99, %100 in 1 : vector<16x128xf32>, vector<16x128xf32>, vector<16x128xf32>, vector<16x128xf32> -> vector<16x512xf32>
    %102 = arith.truncf %101 : vector<16x512xf32> to vector<16x512xbf16>
    %c0_48 = arith.constant 0 : index
    %c0_49 = arith.constant 0 : index
    %103 = vector.load %arg5[%c0_48, %c0_49] : memref<16x512xbf16, #tpu.memory_space<vmem>>, vector<16x512xbf16>
    tpu.vector_store %arg5[%c0_48, %c0_49], %102 {strides = array<i32>} : memref<16x512xbf16, #tpu.memory_space<vmem>>, vector<16x512xbf16>,
    %c0_50 = arith.constant 0 : index
    %c0_51 = arith.constant 0 : index
    %104 = vector.load %arg6[%c0_50, %c0_51] : memref<16x128xf32, #tpu.memory_space<vmem>>, vector<16x128xf32>
    tpu.vector_store %arg6[%c0_50, %c0_51], %75 {strides = array<i32>} : memref<16x128xf32, #tpu.memory_space<vmem>>, vector<16x128xf32>,
    %105 = vector.extract_strided_slice %97 {offsets = [0, 0], sizes = [16, 128], strides = [1, 1]} : vector<48x128xf32> to vector<16x128xf32>
    %106 = vector.extract_strided_slice %97 {offsets = [16, 0], sizes = [16, 128], strides = [1, 1]} : vector<48x128xf32> to vector<16x128xf32>
    %107 = vector.extract_strided_slice %97 {offsets = [32, 0], sizes = [16, 128], strides = [1, 1]} : vector<48x128xf32> to vector<16x128xf32>
    %c0_52 = arith.constant 0 : index
    %c0_53 = arith.constant 0 : index
    %c0_54 = arith.constant 0 : index
    %108 = vector.load %arg7[%c0_52, %c0_53, %c0_54] : memref<3x16x128xf32, #tpu.memory_space<vmem>>, vector<1x16x128xf32>
    %109 = vector.shape_cast %108 : vector<1x16x128xf32> to vector<16x128xf32>
    %110 = vector.shape_cast %105 : vector<16x128xf32> to vector<1x16x128xf32>
    tpu.vector_store %arg7[%c0_52, %c0_53, %c0_54], %110 {strides = array<i32>} : memref<3x16x128xf32, #tpu.memory_space<vmem>>, vector<1x16x128xf32>,
    %c1_55 = arith.constant 1 : index
    %c0_56 = arith.constant 0 : index
    %c0_57 = arith.constant 0 : index
    %111 = vector.load %arg7[%c1_55, %c0_56, %c0_57] : memref<3x16x128xf32, #tpu.memory_space<vmem>>, vector<1x16x128xf32>
    %112 = vector.shape_cast %111 : vector<1x16x128xf32> to vector<16x128xf32>
    %113 = vector.shape_cast %106 : vector<16x128xf32> to vector<1x16x128xf32>
    tpu.vector_store %arg7[%c1_55, %c0_56, %c0_57], %113 {strides = array<i32>} : memref<3x16x128xf32, #tpu.memory_space<vmem>>, vector<1x16x128xf32>,
    %c2_58 = arith.constant 2 : index
    %c0_59 = arith.constant 0 : index
    %c0_60 = arith.constant 0 : index
    %114 = vector.load %arg7[%c2_58, %c0_59, %c0_60] : memref<3x16x128xf32, #tpu.memory_space<vmem>>, vector<1x16x128xf32>
    %115 = vector.shape_cast %114 : vector<1x16x128xf32> to vector<16x128xf32>
    %116 = vector.shape_cast %107 : vector<16x128xf32> to vector<1x16x128xf32>
    tpu.vector_store %arg7[%c2_58, %c0_59, %c0_60], %116 {strides = array<i32>} : memref<3x16x128xf32, #tpu.memory_space<vmem>>, vector<1x16x128xf32>,
    return
  }
  func.func @transform_0(%arg0: i32) -> (i32, i32, i32) {
    %c0_i32 = arith.constant 0 : i32
    %c0_i32_0 = arith.constant 0 : i32
    %c0_i32_1 = arith.constant 0 : i32
    %c0_i32_2 = arith.constant 0 : i32
    return %c0_i32, %c0_i32_0, %c0_i32_1 : i32, i32, i32
  }
  func.func @transform_1(%arg0: i32) -> (i32, i32, i32) {
    %c0_i32 = arith.constant 0 : i32
    %c0_i32_0 = arith.constant 0 : i32
    %c0_i32_1 = arith.constant 0 : i32
    %c0_i32_2 = arith.constant 0 : i32
    return %c0_i32, %c0_i32_0, %c0_i32_1 : i32, i32, i32
  }
  func.func @transform_2(%arg0: i32) -> (i32, i32) {
    %c0_i32 = arith.constant 0 : i32
    %c0_i32_0 = arith.constant 0 : i32
    return %arg0, %c0_i32 : i32, i32
  }
  func.func @transform_3(%arg0: i32) -> (i32, i32, i32) {
    %c0_i32 = arith.constant 0 : i32
    %c0_i32_0 = arith.constant 0 : i32
    %c0_i32_1 = arith.constant 0 : i32
    return %c0_i32, %arg0, %c0_i32_0 : i32, i32, i32
  }
  func.func @transform_4(%arg0: i32) -> (i32, i32) {
    %c0_i32 = arith.constant 0 : i32
    %c0_i32_0 = arith.constant 0 : i32
    return %arg0, %c0_i32 : i32, i32
  }
  func.func @transform_5(%arg0: i32) -> (i32, i32) {
    %c0_i32 = arith.constant 0 : i32
    %c0_i32_0 = arith.constant 0 : i32
    return %arg0, %c0_i32 : i32, i32
  }
  func.func @transform_6(%arg0: i32) -> (i32, i32, i32) {
    %c0_i32 = arith.constant 0 : i32
    %c0_i32_0 = arith.constant 0 : i32
    %c0_i32_1 = arith.constant 0 : i32
    return %c0_i32, %arg0, %c0_i32_0 : i32, i32, i32
  }
}

module attributes {stable_mosaic.version = 11 : i64} {
  func.func @_message_kernel(%arg0: i32, %arg1: memref<15x128x128xbf16, #tpu.memory_space<vmem>>, %arg2: memref<7x1x128xf32, #tpu.memory_space<vmem>>, %arg3: memref<32x640xbf16, #tpu.memory_space<vmem>>, %arg4: memref<32x8xf32, #tpu.memory_space<vmem>>, %arg5: memref<32x512xf32, #tpu.memory_space<vmem>>) attributes {dimension_semantics = [#tpu.dimension_semantics<parallel>], iteration_bounds = array<i64: 1>, scalar_prefetch = 0 : i64, scratch_operands = 0 : i64, tpu.core_type = #tpu.core_type<tc>, window_params = [{pipeline_mode = #tpu.pipeline_mode<synchronous>, transform_indices = @transform_0, window_bounds = array<i64: 15, 128, 128>}, {pipeline_mode = #tpu.pipeline_mode<synchronous>, transform_indices = @transform_1, window_bounds = array<i64: 7, 1, 128>}, {transform_indices = @transform_2, window_bounds = array<i64: 32, 640>}, {transform_indices = @transform_3, window_bounds = array<i64: 32, 8>}, {transform_indices = @transform_4, window_bounds = array<i64: 32, 512>}]} {
    %c0 = arith.constant 0 : index
    %c0_0 = arith.constant 0 : index
    %0 = vector.load %arg4[%c0, %c0_0] : memref<32x8xf32, #tpu.memory_space<vmem>>, vector<32x8xf32>
    %1 = vector.extract_strided_slice %0 {offsets = [0, 0], sizes = [32, 1], strides = [1, 1]} : vector<32x8xf32> to vector<32x1xf32>
    %2 = vector.extract_strided_slice %0 {offsets = [0, 1], sizes = [32, 1], strides = [1, 1]} : vector<32x8xf32> to vector<32x1xf32>
    %3 = vector.extract_strided_slice %0 {offsets = [0, 2], sizes = [32, 1], strides = [1, 1]} : vector<32x8xf32> to vector<32x1xf32>
    %4 = vector.extract_strided_slice %0 {offsets = [0, 3], sizes = [32, 1], strides = [1, 1]} : vector<32x8xf32> to vector<32x1xf32>
    %5 = vector.extract_strided_slice %0 {offsets = [0, 4], sizes = [32, 1], strides = [1, 1]} : vector<32x8xf32> to vector<32x1xf32>
    %6 = tpu.concatenate %3, %4, %5 in 0 : vector<32x1xf32>, vector<32x1xf32>, vector<32x1xf32> -> vector<96x1xf32>
    %7 = tpu.iota {dimensions = array<i32: 1>} : vector<32x128xi32>
    %c6 = arith.constant 6 : index
    %c0_1 = arith.constant 0 : index
    %c0_2 = arith.constant 0 : index
    %8 = vector.load %arg2[%c6, %c0_1, %c0_2] : memref<7x1x128xf32, #tpu.memory_space<vmem>>, vector<1x1x128xf32>
    %9 = vector.shape_cast %8 : vector<1x1x128xf32> to vector<1x128xf32>
    %10 = vector.broadcast %1 : vector<32x1xf32> to vector<32x128xf32>
    %11 = vector.broadcast %9 : vector<1x128xf32> to vector<32x128xf32>
    %12 = arith.subf %10, %11 : vector<32x128xf32>
    %13 = arith.mulf %12, %12 : vector<32x128xf32>
    %cst = arith.constant -6.050000e-01 : f32
    %14 = vector.broadcast %cst : f32 to vector<32x128xf32>
    %15 = arith.mulf %14, %13 : vector<32x128xf32>
    %16 = math.exp %15 : vector<32x128xf32>
    %c12_i32 = arith.constant 12 : i32
    %17 = vector.broadcast %c12_i32 : i32 to vector<32x128xi32>
    %18 = arith.cmpi slt, %7, %17 : vector<32x128xi32>
    %cst_3 = arith.constant 0.000000e+00 : f32
    %19 = vector.broadcast %cst_3 : f32 to vector<32x128xf32>
    %20 = arith.select %18, %16, %19 : vector<32x128xi1>, vector<32x128xf32>
    %c0_4 = arith.constant 0 : index
    %c0_5 = arith.constant 0 : index
    %21 = vector.load %arg3[%c0_4, %c0_5] : memref<32x640xbf16, #tpu.memory_space<vmem>>, vector<32x128xbf16>
    %22 = arith.extf %21 : vector<32x128xbf16> to vector<32x128xf32>
    %23 = arith.addf %20, %22 : vector<32x128xf32>
    %c5 = arith.constant 5 : index
    %c0_6 = arith.constant 0 : index
    %c0_7 = arith.constant 0 : index
    %24 = vector.load %arg2[%c5, %c0_6, %c0_7] : memref<7x1x128xf32, #tpu.memory_space<vmem>>, vector<1x1x128xf32>
    %25 = vector.shape_cast %24 : vector<1x1x128xf32> to vector<1x128xf32>
    %26 = vector.broadcast %6 : vector<96x1xf32> to vector<96x128xf32>
    %27 = vector.broadcast %25 : vector<1x128xf32> to vector<96x128xf32>
    %28 = arith.mulf %26, %27 : vector<96x128xf32>
    %c0_8 = arith.constant 0 : index
    %c0_9 = arith.constant 0 : index
    %c0_10 = arith.constant 0 : index
    %29 = vector.load %arg2[%c0_8, %c0_9, %c0_10] : memref<7x1x128xf32, #tpu.memory_space<vmem>>, vector<1x1x128xf32>
    %30 = vector.shape_cast %29 : vector<1x1x128xf32> to vector<1x128xf32>
    %c0_11 = arith.constant 0 : index
    %c0_12 = arith.constant 0 : index
    %c0_13 = arith.constant 0 : index
    %31 = vector.load %arg1[%c0_11, %c0_12, %c0_13] : memref<15x128x128xbf16, #tpu.memory_space<vmem>>, vector<1x128x128xbf16>
    %32 = vector.shape_cast %31 : vector<1x128x128xbf16> to vector<128x128xbf16>
    %33 = arith.truncf %28 : vector<96x128xf32> to vector<96x128xbf16>
    %cst_14 = arith.constant dense<0.000000e+00> : vector<96x128xf32>
    %34 = tpu.matmul %33, %32, %cst_14 {dimension_numbers = #tpu.dot_dimension_numbers<[1], [0], [0], [1], [0, 0, 1, 1], [], []>} : vector<96x128xbf16>, vector<128x128xbf16>, vector<96x128xf32> -> vector<96x128xf32>
    %35 = vector.extract_strided_slice %34 {offsets = [0, 0], sizes = [32, 128], strides = [1, 1]} : vector<96x128xf32> to vector<32x128xf32>
    %36 = vector.extract_strided_slice %34 {offsets = [32, 0], sizes = [32, 128], strides = [1, 1]} : vector<96x128xf32> to vector<32x128xf32>
    %37 = vector.extract_strided_slice %34 {offsets = [64, 0], sizes = [32, 128], strides = [1, 1]} : vector<96x128xf32> to vector<32x128xf32>
    %38 = arith.mulf %35, %35 : vector<32x128xf32>
    %39 = arith.mulf %36, %36 : vector<32x128xf32>
    %40 = arith.addf %38, %39 : vector<32x128xf32>
    %41 = arith.mulf %37, %37 : vector<32x128xf32>
    %42 = arith.addf %40, %41 : vector<32x128xf32>
    %43 = math.sqrt %42 : vector<32x128xf32>
    %c1 = arith.constant 1 : index
    %c0_15 = arith.constant 0 : index
    %c0_16 = arith.constant 0 : index
    %44 = vector.load %arg1[%c1, %c0_15, %c0_16] : memref<15x128x128xbf16, #tpu.memory_space<vmem>>, vector<1x128x128xbf16>
    %45 = vector.shape_cast %44 : vector<1x128x128xbf16> to vector<128x128xbf16>
    %46 = arith.truncf %43 : vector<32x128xf32> to vector<32x128xbf16>
    %cst_17 = arith.constant dense<0.000000e+00> : vector<32x128xf32>
    %47 = tpu.matmul %46, %45, %cst_17 {dimension_numbers = #tpu.dot_dimension_numbers<[1], [0], [0], [1], [0, 0, 1, 1], [], []>} : vector<32x128xbf16>, vector<128x128xbf16>, vector<32x128xf32> -> vector<32x128xf32>
    %c2 = arith.constant 2 : index
    %c0_18 = arith.constant 0 : index
    %c0_19 = arith.constant 0 : index
    %48 = vector.load %arg1[%c2, %c0_18, %c0_19] : memref<15x128x128xbf16, #tpu.memory_space<vmem>>, vector<1x128x128xbf16>
    %49 = vector.shape_cast %48 : vector<1x128x128xbf16> to vector<128x128xbf16>
    %50 = arith.truncf %23 : vector<32x128xf32> to vector<32x128xbf16>
    %cst_20 = arith.constant dense<0.000000e+00> : vector<32x128xf32>
    %51 = tpu.matmul %50, %49, %cst_20 {dimension_numbers = #tpu.dot_dimension_numbers<[1], [0], [0], [1], [0, 0, 1, 1], [], []>} : vector<32x128xbf16>, vector<128x128xbf16>, vector<32x128xf32> -> vector<32x128xf32>
    %52 = arith.addf %47, %51 : vector<32x128xf32>
    %c3 = arith.constant 3 : index
    %c0_21 = arith.constant 0 : index
    %c0_22 = arith.constant 0 : index
    %53 = vector.load %arg1[%c3, %c0_21, %c0_22] : memref<15x128x128xbf16, #tpu.memory_space<vmem>>, vector<1x128x128xbf16>
    %54 = vector.shape_cast %53 : vector<1x128x128xbf16> to vector<128x128xbf16>
    %55 = arith.truncf %34 : vector<96x128xf32> to vector<96x128xbf16>
    %cst_23 = arith.constant dense<0.000000e+00> : vector<96x128xf32>
    %56 = tpu.matmul %55, %54, %cst_23 {dimension_numbers = #tpu.dot_dimension_numbers<[1], [0], [0], [1], [0, 0, 1, 1], [], []>} : vector<96x128xbf16>, vector<128x128xbf16>, vector<96x128xf32> -> vector<96x128xf32>
    %c4 = arith.constant 4 : index
    %c0_24 = arith.constant 0 : index
    %c0_25 = arith.constant 0 : index
    %57 = vector.load %arg1[%c4, %c0_24, %c0_25] : memref<15x128x128xbf16, #tpu.memory_space<vmem>>, vector<1x128x128xbf16>
    %58 = vector.shape_cast %57 : vector<1x128x128xbf16> to vector<128x128xbf16>
    %59 = arith.truncf %52 : vector<32x128xf32> to vector<32x128xbf16>
    %cst_26 = arith.constant dense<0.000000e+00> : vector<32x128xf32>
    %60 = tpu.matmul %59, %58, %cst_26 {dimension_numbers = #tpu.dot_dimension_numbers<[1], [0], [0], [1], [0, 0, 1, 1], [], []>} : vector<32x128xbf16>, vector<128x128xbf16>, vector<32x128xf32> -> vector<32x128xf32>
    %61 = vector.broadcast %30 : vector<1x128xf32> to vector<32x128xf32>
    %62 = arith.addf %60, %61 : vector<32x128xf32>
    %63 = arith.negf %62 : vector<32x128xf32>
    %64 = math.exp %63 : vector<32x128xf32>
    %cst_27 = arith.constant 1.000000e+00 : f32
    %65 = vector.broadcast %cst_27 : f32 to vector<32x128xf32>
    %66 = arith.addf %65, %64 : vector<32x128xf32>
    %67 = arith.divf %65, %66 : vector<32x128xf32>
    %68 = vector.extract_strided_slice %56 {offsets = [0, 0], sizes = [32, 128], strides = [1, 1]} : vector<96x128xf32> to vector<32x128xf32>
    %69 = vector.extract_strided_slice %56 {offsets = [32, 0], sizes = [32, 128], strides = [1, 1]} : vector<96x128xf32> to vector<32x128xf32>
    %70 = vector.extract_strided_slice %56 {offsets = [64, 0], sizes = [32, 128], strides = [1, 1]} : vector<96x128xf32> to vector<32x128xf32>
    %71 = arith.mulf %68, %67 : vector<32x128xf32>
    %72 = arith.mulf %69, %67 : vector<32x128xf32>
    %73 = arith.mulf %70, %67 : vector<32x128xf32>
    %74 = tpu.concatenate %71, %72, %73 in 0 : vector<32x128xf32>, vector<32x128xf32>, vector<32x128xf32> -> vector<96x128xf32>
    %c5_28 = arith.constant 5 : index
    %c0_29 = arith.constant 0 : index
    %c0_30 = arith.constant 0 : index
    %75 = vector.load %arg1[%c5_28, %c0_29, %c0_30] : memref<15x128x128xbf16, #tpu.memory_space<vmem>>, vector<1x128x128xbf16>
    %76 = vector.shape_cast %75 : vector<1x128x128xbf16> to vector<128x128xbf16>
    %77 = arith.truncf %74 : vector<96x128xf32> to vector<96x128xbf16>
    %cst_31 = arith.constant dense<0.000000e+00> : vector<96x128xf32>
    %78 = tpu.matmul %77, %76, %cst_31 {dimension_numbers = #tpu.dot_dimension_numbers<[1], [0], [0], [1], [0, 0, 1, 1], [], []>} : vector<96x128xbf16>, vector<128x128xbf16>, vector<96x128xf32> -> vector<96x128xf32>
    %79 = vector.extract_strided_slice %74 {offsets = [0, 0], sizes = [32, 128], strides = [1, 1]} : vector<96x128xf32> to vector<32x128xf32>
    %80 = vector.extract_strided_slice %74 {offsets = [32, 0], sizes = [32, 128], strides = [1, 1]} : vector<96x128xf32> to vector<32x128xf32>
    %81 = vector.extract_strided_slice %74 {offsets = [64, 0], sizes = [32, 128], strides = [1, 1]} : vector<96x128xf32> to vector<32x128xf32>
    %82 = vector.extract_strided_slice %78 {offsets = [0, 0], sizes = [32, 128], strides = [1, 1]} : vector<96x128xf32> to vector<32x128xf32>
    %83 = vector.extract_strided_slice %78 {offsets = [32, 0], sizes = [32, 128], strides = [1, 1]} : vector<96x128xf32> to vector<32x128xf32>
    %84 = vector.extract_strided_slice %78 {offsets = [64, 0], sizes = [32, 128], strides = [1, 1]} : vector<96x128xf32> to vector<32x128xf32>
    %85 = arith.mulf %79, %82 : vector<32x128xf32>
    %86 = arith.mulf %80, %83 : vector<32x128xf32>
    %87 = arith.addf %85, %86 : vector<32x128xf32>
    %88 = arith.mulf %81, %84 : vector<32x128xf32>
    %89 = arith.addf %87, %88 : vector<32x128xf32>
    %90 = arith.mulf %82, %82 : vector<32x128xf32>
    %91 = arith.mulf %83, %83 : vector<32x128xf32>
    %92 = arith.addf %90, %91 : vector<32x128xf32>
    %93 = arith.mulf %84, %84 : vector<32x128xf32>
    %94 = arith.addf %92, %93 : vector<32x128xf32>
    %cst_32 = arith.constant 0.000000e+00 : f32
    %95 = vector.broadcast %cst_32 : f32 to vector<32x128xf32>
    %96 = arith.cmpf oge, %89, %95 : vector<32x128xf32>
    %cst_33 = arith.constant 9.99999997E-7 : f32
    %97 = vector.broadcast %cst_33 : f32 to vector<32x128xf32>
    %98 = arith.addf %94, %97 : vector<32x128xf32>
    %99 = arith.divf %89, %98 : vector<32x128xf32>
    %cst_34 = arith.constant 0.000000e+00 : f32
    %100 = vector.broadcast %cst_34 : f32 to vector<32x128xf32>
    %101 = arith.select %96, %100, %99 : vector<32x128xi1>, vector<32x128xf32>
    %102 = arith.mulf %101, %82 : vector<32x128xf32>
    %103 = arith.subf %79, %102 : vector<32x128xf32>
    %104 = arith.mulf %101, %83 : vector<32x128xf32>
    %105 = arith.subf %80, %104 : vector<32x128xf32>
    %106 = arith.mulf %101, %84 : vector<32x128xf32>
    %107 = arith.subf %81, %106 : vector<32x128xf32>
    %108 = tpu.concatenate %103, %105, %107 in 0 : vector<32x128xf32>, vector<32x128xf32>, vector<32x128xf32> -> vector<96x128xf32>
    %cst_35 = arith.constant 0.00999999977 : f32
    %109 = vector.broadcast %cst_35 : f32 to vector<96x128xf32>
    %110 = arith.mulf %109, %74 : vector<96x128xf32>
    %cst_36 = arith.constant 9.900000e-01 : f32
    %111 = vector.broadcast %cst_36 : f32 to vector<96x128xf32>
    %112 = arith.mulf %111, %108 : vector<96x128xf32>
    %113 = arith.addf %110, %112 : vector<96x128xf32>
    %cst_37 = arith.constant 0.000000e+00 : f32
    %114 = vector.broadcast %cst_37 : f32 to vector<32x128xf32>
    %115 = arith.cmpf oge, %52, %114 : vector<32x128xf32>
    %cst_38 = arith.constant 0.00999999977 : f32
    %116 = vector.broadcast %cst_38 : f32 to vector<32x128xf32>
    %117 = arith.mulf %116, %52 : vector<32x128xf32>
    %118 = arith.select %115, %52, %117 : vector<32x128xi1>, vector<32x128xf32>
    %119 = arith.truncf %118 : vector<32x128xf32> to vector<32x128xbf16>
    %c0_39 = arith.constant 0 : index
    %c128 = arith.constant 128 : index
    %120 = vector.load %arg3[%c0_39, %c128] : memref<32x640xbf16, #tpu.memory_space<vmem>>, vector<32x128xbf16>
    %c0_40 = arith.constant 0 : index
    %c256 = arith.constant 256 : index
    %121 = vector.load %arg3[%c0_40, %c256] : memref<32x640xbf16, #tpu.memory_space<vmem>>, vector<32x128xbf16>
    %122 = arith.extf %121 : vector<32x128xbf16> to vector<32x128xf32>
    %c0_41 = arith.constant 0 : index
    %c384 = arith.constant 384 : index
    %123 = vector.load %arg3[%c0_41, %c384] : memref<32x640xbf16, #tpu.memory_space<vmem>>, vector<32x128xbf16>
    %124 = arith.extf %123 : vector<32x128xbf16> to vector<32x128xf32>
    %c0_42 = arith.constant 0 : index
    %c512 = arith.constant 512 : index
    %125 = vector.load %arg3[%c0_42, %c512] : memref<32x640xbf16, #tpu.memory_space<vmem>>, vector<32x128xbf16>
    %126 = arith.extf %125 : vector<32x128xbf16> to vector<32x128xf32>
    %127 = arith.extf %120 : vector<32x128xbf16> to vector<32x128xf32>
    %c6_43 = arith.constant 6 : index
    %c0_44 = arith.constant 0 : index
    %c0_45 = arith.constant 0 : index
    %128 = vector.load %arg1[%c6_43, %c0_44, %c0_45] : memref<15x128x128xbf16, #tpu.memory_space<vmem>>, vector<1x128x128xbf16>
    %129 = vector.shape_cast %128 : vector<1x128x128xbf16> to vector<128x128xbf16>
    %cst_46 = arith.constant dense<0.000000e+00> : vector<32x128xf32>
    %130 = tpu.matmul %119, %129, %cst_46 {dimension_numbers = #tpu.dot_dimension_numbers<[1], [0], [0], [1], [0, 0, 1, 1], [], []>} : vector<32x128xbf16>, vector<128x128xbf16>, vector<32x128xf32> -> vector<32x128xf32>
    %c1_47 = arith.constant 1 : index
    %c0_48 = arith.constant 0 : index
    %c0_49 = arith.constant 0 : index
    %131 = vector.load %arg2[%c1_47, %c0_48, %c0_49] : memref<7x1x128xf32, #tpu.memory_space<vmem>>, vector<1x1x128xf32>
    %132 = vector.shape_cast %131 : vector<1x1x128xf32> to vector<1x128xf32>
    %133 = vector.broadcast %132 : vector<1x128xf32> to vector<32x128xf32>
    %134 = arith.addf %130, %133 : vector<32x128xf32>
    %135 = arith.mulf %127, %134 : vector<32x128xf32>
    %c7 = arith.constant 7 : index
    %c0_50 = arith.constant 0 : index
    %c0_51 = arith.constant 0 : index
    %136 = vector.load %arg1[%c7, %c0_50, %c0_51] : memref<15x128x128xbf16, #tpu.memory_space<vmem>>, vector<1x128x128xbf16>
    %137 = vector.shape_cast %136 : vector<1x128x128xbf16> to vector<128x128xbf16>
    %cst_52 = arith.constant dense<0.000000e+00> : vector<32x128xf32>
    %138 = tpu.matmul %119, %137, %cst_52 {dimension_numbers = #tpu.dot_dimension_numbers<[1], [0], [0], [1], [0, 0, 1, 1], [], []>} : vector<32x128xbf16>, vector<128x128xbf16>, vector<32x128xf32> -> vector<32x128xf32>
    %c2_53 = arith.constant 2 : index
    %c0_54 = arith.constant 0 : index
    %c0_55 = arith.constant 0 : index
    %139 = vector.load %arg2[%c2_53, %c0_54, %c0_55] : memref<7x1x128xf32, #tpu.memory_space<vmem>>, vector<1x1x128xf32>
    %140 = vector.shape_cast %139 : vector<1x1x128xf32> to vector<1x128xf32>
    %141 = vector.broadcast %140 : vector<1x128xf32> to vector<32x128xf32>
    %142 = arith.addf %138, %141 : vector<32x128xf32>
    %c8 = arith.constant 8 : index
    %c0_56 = arith.constant 0 : index
    %c0_57 = arith.constant 0 : index
    %143 = vector.load %arg1[%c8, %c0_56, %c0_57] : memref<15x128x128xbf16, #tpu.memory_space<vmem>>, vector<1x128x128xbf16>
    %144 = vector.shape_cast %143 : vector<1x128x128xbf16> to vector<128x128xbf16>
    %cst_58 = arith.constant dense<0.000000e+00> : vector<32x128xf32>
    %145 = tpu.matmul %120, %144, %cst_58 {dimension_numbers = #tpu.dot_dimension_numbers<[1], [0], [0], [1], [0, 0, 1, 1], [], []>} : vector<32x128xbf16>, vector<128x128xbf16>, vector<32x128xf32> -> vector<32x128xf32>
    %c3_59 = arith.constant 3 : index
    %c0_60 = arith.constant 0 : index
    %c0_61 = arith.constant 0 : index
    %146 = vector.load %arg2[%c3_59, %c0_60, %c0_61] : memref<7x1x128xf32, #tpu.memory_space<vmem>>, vector<1x1x128xf32>
    %147 = vector.shape_cast %146 : vector<1x1x128xf32> to vector<1x128xf32>
    %148 = vector.broadcast %147 : vector<1x128xf32> to vector<32x128xf32>
    %149 = arith.addf %145, %148 : vector<32x128xf32>
    %c9 = arith.constant 9 : index
    %c0_62 = arith.constant 0 : index
    %c0_63 = arith.constant 0 : index
    %150 = vector.load %arg1[%c9, %c0_62, %c0_63] : memref<15x128x128xbf16, #tpu.memory_space<vmem>>, vector<1x128x128xbf16>
    %151 = vector.shape_cast %150 : vector<1x128x128xbf16> to vector<128x128xbf16>
    %152 = arith.truncf %113 : vector<96x128xf32> to vector<96x128xbf16>
    %cst_64 = arith.constant dense<0.000000e+00> : vector<96x128xf32>
    %153 = tpu.matmul %152, %151, %cst_64 {dimension_numbers = #tpu.dot_dimension_numbers<[1], [0], [0], [1], [0, 0, 1, 1], [], []>} : vector<96x128xbf16>, vector<128x128xbf16>, vector<96x128xf32> -> vector<96x128xf32>
    %154 = vector.extract_strided_slice %153 {offsets = [0, 0], sizes = [32, 128], strides = [1, 1]} : vector<96x128xf32> to vector<32x128xf32>
    %155 = vector.extract_strided_slice %153 {offsets = [32, 0], sizes = [32, 128], strides = [1, 1]} : vector<96x128xf32> to vector<32x128xf32>
    %156 = vector.extract_strided_slice %153 {offsets = [64, 0], sizes = [32, 128], strides = [1, 1]} : vector<96x128xf32> to vector<32x128xf32>
    %157 = arith.mulf %142, %122 : vector<32x128xf32>
    %158 = arith.mulf %149, %154 : vector<32x128xf32>
    %159 = arith.addf %157, %158 : vector<32x128xf32>
    %160 = arith.mulf %142, %124 : vector<32x128xf32>
    %161 = arith.mulf %149, %155 : vector<32x128xf32>
    %162 = arith.addf %160, %161 : vector<32x128xf32>
    %163 = arith.mulf %142, %126 : vector<32x128xf32>
    %164 = arith.mulf %149, %156 : vector<32x128xf32>
    %165 = arith.addf %163, %164 : vector<32x128xf32>
    %166 = tpu.concatenate %159, %162, %165 in 0 : vector<32x128xf32>, vector<32x128xf32>, vector<32x128xf32> -> vector<96x128xf32>
    %c4_65 = arith.constant 4 : index
    %c0_66 = arith.constant 0 : index
    %c0_67 = arith.constant 0 : index
    %167 = vector.load %arg2[%c4_65, %c0_66, %c0_67] : memref<7x1x128xf32, #tpu.memory_space<vmem>>, vector<1x1x128xf32>
    %168 = vector.shape_cast %167 : vector<1x1x128xf32> to vector<1x128xf32>
    %c10 = arith.constant 10 : index
    %c0_68 = arith.constant 0 : index
    %c0_69 = arith.constant 0 : index
    %169 = vector.load %arg1[%c10, %c0_68, %c0_69] : memref<15x128x128xbf16, #tpu.memory_space<vmem>>, vector<1x128x128xbf16>
    %170 = vector.shape_cast %169 : vector<1x128x128xbf16> to vector<128x128xbf16>
    %171 = arith.truncf %166 : vector<96x128xf32> to vector<96x128xbf16>
    %cst_70 = arith.constant dense<0.000000e+00> : vector<96x128xf32>
    %172 = tpu.matmul %171, %170, %cst_70 {dimension_numbers = #tpu.dot_dimension_numbers<[1], [0], [0], [1], [0, 0, 1, 1], [], []>} : vector<96x128xbf16>, vector<128x128xbf16>, vector<96x128xf32> -> vector<96x128xf32>
    %173 = vector.extract_strided_slice %172 {offsets = [0, 0], sizes = [32, 128], strides = [1, 1]} : vector<96x128xf32> to vector<32x128xf32>
    %174 = vector.extract_strided_slice %172 {offsets = [32, 0], sizes = [32, 128], strides = [1, 1]} : vector<96x128xf32> to vector<32x128xf32>
    %175 = vector.extract_strided_slice %172 {offsets = [64, 0], sizes = [32, 128], strides = [1, 1]} : vector<96x128xf32> to vector<32x128xf32>
    %176 = arith.mulf %173, %173 : vector<32x128xf32>
    %177 = arith.mulf %174, %174 : vector<32x128xf32>
    %178 = arith.addf %176, %177 : vector<32x128xf32>
    %179 = arith.mulf %175, %175 : vector<32x128xf32>
    %180 = arith.addf %178, %179 : vector<32x128xf32>
    %181 = math.sqrt %180 : vector<32x128xf32>
    %c11 = arith.constant 11 : index
    %c0_71 = arith.constant 0 : index
    %c0_72 = arith.constant 0 : index
    %182 = vector.load %arg1[%c11, %c0_71, %c0_72] : memref<15x128x128xbf16, #tpu.memory_space<vmem>>, vector<1x128x128xbf16>
    %183 = vector.shape_cast %182 : vector<1x128x128xbf16> to vector<128x128xbf16>
    %184 = arith.truncf %181 : vector<32x128xf32> to vector<32x128xbf16>
    %cst_73 = arith.constant dense<0.000000e+00> : vector<32x128xf32>
    %185 = tpu.matmul %184, %183, %cst_73 {dimension_numbers = #tpu.dot_dimension_numbers<[1], [0], [0], [1], [0, 0, 1, 1], [], []>} : vector<32x128xbf16>, vector<128x128xbf16>, vector<32x128xf32> -> vector<32x128xf32>
    %c12 = arith.constant 12 : index
    %c0_74 = arith.constant 0 : index
    %c0_75 = arith.constant 0 : index
    %186 = vector.load %arg1[%c12, %c0_74, %c0_75] : memref<15x128x128xbf16, #tpu.memory_space<vmem>>, vector<1x128x128xbf16>
    %187 = vector.shape_cast %186 : vector<1x128x128xbf16> to vector<128x128xbf16>
    %188 = arith.truncf %135 : vector<32x128xf32> to vector<32x128xbf16>
    %cst_76 = arith.constant dense<0.000000e+00> : vector<32x128xf32>
    %189 = tpu.matmul %188, %187, %cst_76 {dimension_numbers = #tpu.dot_dimension_numbers<[1], [0], [0], [1], [0, 0, 1, 1], [], []>} : vector<32x128xbf16>, vector<128x128xbf16>, vector<32x128xf32> -> vector<32x128xf32>
    %190 = arith.addf %185, %189 : vector<32x128xf32>
    %c13 = arith.constant 13 : index
    %c0_77 = arith.constant 0 : index
    %c0_78 = arith.constant 0 : index
    %191 = vector.load %arg1[%c13, %c0_77, %c0_78] : memref<15x128x128xbf16, #tpu.memory_space<vmem>>, vector<1x128x128xbf16>
    %192 = vector.shape_cast %191 : vector<1x128x128xbf16> to vector<128x128xbf16>
    %193 = arith.truncf %172 : vector<96x128xf32> to vector<96x128xbf16>
    %cst_79 = arith.constant dense<0.000000e+00> : vector<96x128xf32>
    %194 = tpu.matmul %193, %192, %cst_79 {dimension_numbers = #tpu.dot_dimension_numbers<[1], [0], [0], [1], [0, 0, 1, 1], [], []>} : vector<96x128xbf16>, vector<128x128xbf16>, vector<96x128xf32> -> vector<96x128xf32>
    %c14 = arith.constant 14 : index
    %c0_80 = arith.constant 0 : index
    %c0_81 = arith.constant 0 : index
    %195 = vector.load %arg1[%c14, %c0_80, %c0_81] : memref<15x128x128xbf16, #tpu.memory_space<vmem>>, vector<1x128x128xbf16>
    %196 = vector.shape_cast %195 : vector<1x128x128xbf16> to vector<128x128xbf16>
    %197 = arith.truncf %190 : vector<32x128xf32> to vector<32x128xbf16>
    %cst_82 = arith.constant dense<0.000000e+00> : vector<32x128xf32>
    %198 = tpu.matmul %197, %196, %cst_82 {dimension_numbers = #tpu.dot_dimension_numbers<[1], [0], [0], [1], [0, 0, 1, 1], [], []>} : vector<32x128xbf16>, vector<128x128xbf16>, vector<32x128xf32> -> vector<32x128xf32>
    %199 = vector.broadcast %168 : vector<1x128xf32> to vector<32x128xf32>
    %200 = arith.addf %198, %199 : vector<32x128xf32>
    %201 = arith.negf %200 : vector<32x128xf32>
    %202 = math.exp %201 : vector<32x128xf32>
    %cst_83 = arith.constant 1.000000e+00 : f32
    %203 = vector.broadcast %cst_83 : f32 to vector<32x128xf32>
    %204 = arith.addf %203, %202 : vector<32x128xf32>
    %205 = arith.divf %203, %204 : vector<32x128xf32>
    %206 = vector.extract_strided_slice %194 {offsets = [0, 0], sizes = [32, 128], strides = [1, 1]} : vector<96x128xf32> to vector<32x128xf32>
    %207 = vector.extract_strided_slice %194 {offsets = [32, 0], sizes = [32, 128], strides = [1, 1]} : vector<96x128xf32> to vector<32x128xf32>
    %208 = vector.extract_strided_slice %194 {offsets = [64, 0], sizes = [32, 128], strides = [1, 1]} : vector<96x128xf32> to vector<32x128xf32>
    %209 = arith.mulf %206, %205 : vector<32x128xf32>
    %210 = arith.mulf %207, %205 : vector<32x128xf32>
    %211 = arith.mulf %208, %205 : vector<32x128xf32>
    %212 = tpu.concatenate %209, %210, %211 in 0 : vector<32x128xf32>, vector<32x128xf32>, vector<32x128xf32> -> vector<96x128xf32>
    %213 = vector.extract_strided_slice %212 {offsets = [0, 0], sizes = [32, 128], strides = [1, 1]} : vector<96x128xf32> to vector<32x128xf32>
    %214 = vector.extract_strided_slice %212 {offsets = [32, 0], sizes = [32, 128], strides = [1, 1]} : vector<96x128xf32> to vector<32x128xf32>
    %215 = vector.extract_strided_slice %212 {offsets = [64, 0], sizes = [32, 128], strides = [1, 1]} : vector<96x128xf32> to vector<32x128xf32>
    %216 = vector.broadcast %2 : vector<32x1xf32> to vector<32x128xf32>
    %217 = arith.mulf %190, %216 : vector<32x128xf32>
    %218 = vector.broadcast %2 : vector<32x1xf32> to vector<32x128xf32>
    %219 = arith.mulf %213, %218 : vector<32x128xf32>
    %220 = vector.broadcast %2 : vector<32x1xf32> to vector<32x128xf32>
    %221 = arith.mulf %214, %220 : vector<32x128xf32>
    %222 = vector.broadcast %2 : vector<32x1xf32> to vector<32x128xf32>
    %223 = arith.mulf %215, %222 : vector<32x128xf32>
    %224 = tpu.concatenate %217, %219, %221, %223 in 1 : vector<32x128xf32>, vector<32x128xf32>, vector<32x128xf32>, vector<32x128xf32> -> vector<32x512xf32>
    %c0_84 = arith.constant 0 : index
    %c0_85 = arith.constant 0 : index
    %225 = vector.load %arg5[%c0_84, %c0_85] : memref<32x512xf32, #tpu.memory_space<vmem>>, vector<32x512xf32>
    tpu.vector_store %arg5[%c0_84, %c0_85], %224 {strides = array<i32>} : memref<32x512xf32, #tpu.memory_space<vmem>>, vector<32x512xf32>,
    return
  }
  func.func @transform_0(%arg0: i32) -> (i32, i32, i32) {
    %c0_i32 = arith.constant 0 : i32
    %c0_i32_0 = arith.constant 0 : i32
    %c0_i32_1 = arith.constant 0 : i32
    %c0_i32_2 = arith.constant 0 : i32
    return %c0_i32, %c0_i32_0, %c0_i32_1 : i32, i32, i32
  }
  func.func @transform_1(%arg0: i32) -> (i32, i32, i32) {
    %c0_i32 = arith.constant 0 : i32
    %c0_i32_0 = arith.constant 0 : i32
    %c0_i32_1 = arith.constant 0 : i32
    %c0_i32_2 = arith.constant 0 : i32
    return %c0_i32, %c0_i32_0, %c0_i32_1 : i32, i32, i32
  }
  func.func @transform_2(%arg0: i32) -> (i32, i32) {
    %c0_i32 = arith.constant 0 : i32
    %c0_i32_0 = arith.constant 0 : i32
    return %arg0, %c0_i32 : i32, i32
  }
  func.func @transform_3(%arg0: i32) -> (i32, i32) {
    %c0_i32 = arith.constant 0 : i32
    %c0_i32_0 = arith.constant 0 : i32
    return %arg0, %c0_i32 : i32, i32
  }
  func.func @transform_4(%arg0: i32) -> (i32, i32) {
    %c0_i32 = arith.constant 0 : i32
    %c0_i32_0 = arith.constant 0 : i32
    return %arg0, %c0_i32 : i32, i32
  }
}

module attributes {stable_mosaic.version = 11 : i64} {
  func.func @_node_post_kernel(%arg0: i32, %arg1: memref<6x128x128xbf16, #tpu.memory_space<vmem>>, %arg2: memref<9x1x128xf32, #tpu.memory_space<vmem>>, %arg3: memref<16x128xf32, #tpu.memory_space<vmem>>, %arg4: memref<3x16x128xf32, #tpu.memory_space<vmem>>, %arg5: memref<16x512xf32, #tpu.memory_space<vmem>>, %arg6: memref<16x128xf32, #tpu.memory_space<vmem>>, %arg7: memref<3x16x128xf32, #tpu.memory_space<vmem>>) attributes {dimension_semantics = [#tpu.dimension_semantics<parallel>], iteration_bounds = array<i64: 1>, scalar_prefetch = 0 : i64, scratch_operands = 0 : i64, tpu.core_type = #tpu.core_type<tc>, window_params = [{pipeline_mode = #tpu.pipeline_mode<synchronous>, transform_indices = @transform_0, window_bounds = array<i64: 6, 128, 128>}, {pipeline_mode = #tpu.pipeline_mode<synchronous>, transform_indices = @transform_1, window_bounds = array<i64: 9, 1, 128>}, {transform_indices = @transform_2, window_bounds = array<i64: 16, 128>}, {transform_indices = @transform_3, window_bounds = array<i64: 3, 16, 128>}, {transform_indices = @transform_4, window_bounds = array<i64: 16, 512>}, {transform_indices = @transform_5, window_bounds = array<i64: 16, 128>}, {transform_indices = @transform_6, window_bounds = array<i64: 3, 16, 128>}]} {
    %0 = tpu.iota {dimensions = array<i32: 1>} : vector<16x128xi32>
    %c32_i32 = arith.constant 32 : i32
    %1 = vector.broadcast %c32_i32 : i32 to vector<16x128xi32>
    %2 = arith.cmpi slt, %0, %1 : vector<16x128xi32>
    %c0 = arith.constant 0 : index
    %c0_0 = arith.constant 0 : index
    %3 = vector.load %arg3[%c0, %c0_0] : memref<16x128xf32, #tpu.memory_space<vmem>>, vector<16x128xf32>
    %c0_1 = arith.constant 0 : index
    %c0_2 = arith.constant 0 : index
    %4 = vector.load %arg5[%c0_1, %c0_2] : memref<16x512xf32, #tpu.memory_space<vmem>>, vector<16x128xf32>
    %5 = arith.addf %3, %4 : vector<16x128xf32>
    %cst = arith.constant 0.000000e+00 : f32
    %6 = vector.broadcast %cst : f32 to vector<16x128xf32>
    %7 = arith.select %2, %5, %6 : vector<16x128xi1>, vector<16x128xf32>
    %c8_i32 = arith.constant 8 : i32
    %8 = vector.broadcast %c8_i32 : i32 to vector<16x128xi32>
    %9 = arith.cmpi slt, %0, %8 : vector<16x128xi32>
    %c0_3 = arith.constant 0 : index
    %c0_4 = arith.constant 0 : index
    %c0_5 = arith.constant 0 : index
    %10 = vector.load %arg4[%c0_3, %c0_4, %c0_5] : memref<3x16x128xf32, #tpu.memory_space<vmem>>, vector<1x16x128xf32>
    %11 = vector.shape_cast %10 : vector<1x16x128xf32> to vector<16x128xf32>
    %c0_6 = arith.constant 0 : index
    %c128 = arith.constant 128 : index
    %12 = vector.load %arg5[%c0_6, %c128] : memref<16x512xf32, #tpu.memory_space<vmem>>, vector<16x128xf32>
    %13 = arith.addf %11, %12 : vector<16x128xf32>
    %cst_7 = arith.constant 0.000000e+00 : f32
    %14 = vector.broadcast %cst_7 : f32 to vector<16x128xf32>
    %15 = arith.select %9, %13, %14 : vector<16x128xi1>, vector<16x128xf32>
    %c8_i32_8 = arith.constant 8 : i32
    %16 = vector.broadcast %c8_i32_8 : i32 to vector<16x128xi32>
    %17 = arith.cmpi slt, %0, %16 : vector<16x128xi32>
    %c1 = arith.constant 1 : index
    %c0_9 = arith.constant 0 : index
    %c0_10 = arith.constant 0 : index
    %18 = vector.load %arg4[%c1, %c0_9, %c0_10] : memref<3x16x128xf32, #tpu.memory_space<vmem>>, vector<1x16x128xf32>
    %19 = vector.shape_cast %18 : vector<1x16x128xf32> to vector<16x128xf32>
    %c0_11 = arith.constant 0 : index
    %c256 = arith.constant 256 : index
    %20 = vector.load %arg5[%c0_11, %c256] : memref<16x512xf32, #tpu.memory_space<vmem>>, vector<16x128xf32>
    %21 = arith.addf %19, %20 : vector<16x128xf32>
    %cst_12 = arith.constant 0.000000e+00 : f32
    %22 = vector.broadcast %cst_12 : f32 to vector<16x128xf32>
    %23 = arith.select %17, %21, %22 : vector<16x128xi1>, vector<16x128xf32>
    %c8_i32_13 = arith.constant 8 : i32
    %24 = vector.broadcast %c8_i32_13 : i32 to vector<16x128xi32>
    %25 = arith.cmpi slt, %0, %24 : vector<16x128xi32>
    %c2 = arith.constant 2 : index
    %c0_14 = arith.constant 0 : index
    %c0_15 = arith.constant 0 : index
    %26 = vector.load %arg4[%c2, %c0_14, %c0_15] : memref<3x16x128xf32, #tpu.memory_space<vmem>>, vector<1x16x128xf32>
    %27 = vector.shape_cast %26 : vector<1x16x128xf32> to vector<16x128xf32>
    %c0_16 = arith.constant 0 : index
    %c384 = arith.constant 384 : index
    %28 = vector.load %arg5[%c0_16, %c384] : memref<16x512xf32, #tpu.memory_space<vmem>>, vector<16x128xf32>
    %29 = arith.addf %27, %28 : vector<16x128xf32>
    %cst_17 = arith.constant 0.000000e+00 : f32
    %30 = vector.broadcast %cst_17 : f32 to vector<16x128xf32>
    %31 = arith.select %25, %29, %30 : vector<16x128xi1>, vector<16x128xf32>
    %cst_18 = arith.constant dense<0.000000e+00> : vector<16xf32>
    %32 = vector.multi_reduction <add>, %7, %cst_18 [1] : vector<16x128xf32> to vector<16xf32>
    %33 = vector.shape_cast %32 : vector<16xf32> to vector<16x1xf32>
    %cst_19 = arith.constant 3.200000e+01 : f32
    %34 = vector.broadcast %cst_19 : f32 to vector<16x1xf32>
    %35 = arith.divf %33, %34 : vector<16x1xf32>
    %c32_i32_20 = arith.constant 32 : i32
    %36 = vector.broadcast %c32_i32_20 : i32 to vector<16x128xi32>
    %37 = arith.cmpi slt, %0, %36 : vector<16x128xi32>
    %38 = vector.broadcast %35 : vector<16x1xf32> to vector<16x128xf32>
    %39 = arith.subf %7, %38 : vector<16x128xf32>
    %cst_21 = arith.constant 0.000000e+00 : f32
    %40 = vector.broadcast %cst_21 : f32 to vector<16x128xf32>
    %41 = arith.select %37, %39, %40 : vector<16x128xi1>, vector<16x128xf32>
    %42 = arith.mulf %41, %41 : vector<16x128xf32>
    %cst_22 = arith.constant dense<0.000000e+00> : vector<16xf32>
    %43 = vector.multi_reduction <add>, %42, %cst_22 [1] : vector<16x128xf32> to vector<16xf32>
    %44 = vector.shape_cast %43 : vector<16xf32> to vector<16x1xf32>
    %cst_23 = arith.constant 3.200000e+01 : f32
    %45 = vector.broadcast %cst_23 : f32 to vector<16x1xf32>
    %46 = arith.divf %44, %45 : vector<16x1xf32>
    %cst_24 = arith.constant 9.99999974E-6 : f32
    %47 = vector.broadcast %cst_24 : f32 to vector<16x1xf32>
    %48 = arith.addf %46, %47 : vector<16x1xf32>
    %49 = math.rsqrt %48 : vector<16x1xf32>
    %50 = vector.broadcast %49 : vector<16x1xf32> to vector<16x128xf32>
    %51 = arith.mulf %41, %50 : vector<16x128xf32>
    %c1_25 = arith.constant 1 : index
    %c0_26 = arith.constant 0 : index
    %c0_27 = arith.constant 0 : index
    %52 = vector.load %arg2[%c1_25, %c0_26, %c0_27] : memref<9x1x128xf32, #tpu.memory_space<vmem>>, vector<1x1x128xf32>
    %53 = vector.shape_cast %52 : vector<1x1x128xf32> to vector<1x128xf32>
    %54 = vector.broadcast %53 : vector<1x128xf32> to vector<16x128xf32>
    %55 = arith.mulf %51, %54 : vector<16x128xf32>
    %c2_28 = arith.constant 2 : index
    %c0_29 = arith.constant 0 : index
    %c0_30 = arith.constant 0 : index
    %56 = vector.load %arg2[%c2_28, %c0_29, %c0_30] : memref<9x1x128xf32, #tpu.memory_space<vmem>>, vector<1x1x128xf32>
    %57 = vector.shape_cast %56 : vector<1x1x128xf32> to vector<1x128xf32>
    %58 = vector.broadcast %57 : vector<1x128xf32> to vector<16x128xf32>
    %59 = arith.addf %55, %58 : vector<16x128xf32>
    %cst_31 = arith.constant dense<0.000000e+00> : vector<16xf32>
    %60 = vector.multi_reduction <add>, %15, %cst_31 [1] : vector<16x128xf32> to vector<16xf32>
    %61 = vector.shape_cast %60 : vector<16xf32> to vector<16x1xf32>
    %cst_32 = arith.constant dense<0.000000e+00> : vector<16xf32>
    %62 = vector.multi_reduction <add>, %23, %cst_32 [1] : vector<16x128xf32> to vector<16xf32>
    %63 = vector.shape_cast %62 : vector<16xf32> to vector<16x1xf32>
    %64 = arith.addf %61, %63 : vector<16x1xf32>
    %cst_33 = arith.constant dense<0.000000e+00> : vector<16xf32>
    %65 = vector.multi_reduction <add>, %31, %cst_33 [1] : vector<16x128xf32> to vector<16xf32>
    %66 = vector.shape_cast %65 : vector<16xf32> to vector<16x1xf32>
    %67 = arith.addf %64, %66 : vector<16x1xf32>
    %cst_34 = arith.constant 2.400000e+01 : f32
    %68 = vector.broadcast %cst_34 : f32 to vector<16x1xf32>
    %69 = arith.divf %67, %68 : vector<16x1xf32>
    %c8_i32_35 = arith.constant 8 : i32
    %70 = vector.broadcast %c8_i32_35 : i32 to vector<16x128xi32>
    %71 = arith.cmpi slt, %0, %70 : vector<16x128xi32>
    %72 = vector.broadcast %69 : vector<16x1xf32> to vector<16x128xf32>
    %73 = arith.subf %15, %72 : vector<16x128xf32>
    %cst_36 = arith.constant 0.000000e+00 : f32
    %74 = vector.broadcast %cst_36 : f32 to vector<16x128xf32>
    %75 = arith.select %71, %73, %74 : vector<16x128xi1>, vector<16x128xf32>
    %c8_i32_37 = arith.constant 8 : i32
    %76 = vector.broadcast %c8_i32_37 : i32 to vector<16x128xi32>
    %77 = arith.cmpi slt, %0, %76 : vector<16x128xi32>
    %78 = vector.broadcast %69 : vector<16x1xf32> to vector<16x128xf32>
    %79 = arith.subf %23, %78 : vector<16x128xf32>
    %cst_38 = arith.constant 0.000000e+00 : f32
    %80 = vector.broadcast %cst_38 : f32 to vector<16x128xf32>
    %81 = arith.select %77, %79, %80 : vector<16x128xi1>, vector<16x128xf32>
    %c8_i32_39 = arith.constant 8 : i32
    %82 = vector.broadcast %c8_i32_39 : i32 to vector<16x128xi32>
    %83 = arith.cmpi slt, %0, %82 : vector<16x128xi32>
    %84 = vector.broadcast %69 : vector<16x1xf32> to vector<16x128xf32>
    %85 = arith.subf %31, %84 : vector<16x128xf32>
    %cst_40 = arith.constant 0.000000e+00 : f32
    %86 = vector.broadcast %cst_40 : f32 to vector<16x128xf32>
    %87 = arith.select %83, %85, %86 : vector<16x128xi1>, vector<16x128xf32>
    %88 = arith.mulf %75, %75 : vector<16x128xf32>
    %cst_41 = arith.constant dense<0.000000e+00> : vector<16xf32>
    %89 = vector.multi_reduction <add>, %88, %cst_41 [1] : vector<16x128xf32> to vector<16xf32>
    %90 = vector.shape_cast %89 : vector<16xf32> to vector<16x1xf32>
    %91 = arith.mulf %81, %81 : vector<16x128xf32>
    %cst_42 = arith.constant dense<0.000000e+00> : vector<16xf32>
    %92 = vector.multi_reduction <add>, %91, %cst_42 [1] : vector<16x128xf32> to vector<16xf32>
    %93 = vector.shape_cast %92 : vector<16xf32> to vector<16x1xf32>
    %94 = arith.addf %90, %93 : vector<16x1xf32>
    %95 = arith.mulf %87, %87 : vector<16x128xf32>
    %cst_43 = arith.constant dense<0.000000e+00> : vector<16xf32>
    %96 = vector.multi_reduction <add>, %95, %cst_43 [1] : vector<16x128xf32> to vector<16xf32>
    %97 = vector.shape_cast %96 : vector<16xf32> to vector<16x1xf32>
    %98 = arith.addf %94, %97 : vector<16x1xf32>
    %cst_44 = arith.constant 2.400000e+01 : f32
    %99 = vector.broadcast %cst_44 : f32 to vector<16x1xf32>
    %100 = arith.divf %98, %99 : vector<16x1xf32>
    %cst_45 = arith.constant 9.99999974E-6 : f32
    %101 = vector.broadcast %cst_45 : f32 to vector<16x1xf32>
    %102 = arith.addf %100, %101 : vector<16x1xf32>
    %103 = math.rsqrt %102 : vector<16x1xf32>
    %104 = vector.broadcast %103 : vector<16x1xf32> to vector<16x128xf32>
    %105 = arith.mulf %75, %104 : vector<16x128xf32>
    %c3 = arith.constant 3 : index
    %c0_46 = arith.constant 0 : index
    %c0_47 = arith.constant 0 : index
    %106 = vector.load %arg2[%c3, %c0_46, %c0_47] : memref<9x1x128xf32, #tpu.memory_space<vmem>>, vector<1x1x128xf32>
    %107 = vector.shape_cast %106 : vector<1x1x128xf32> to vector<1x128xf32>
    %108 = vector.broadcast %107 : vector<1x128xf32> to vector<16x128xf32>
    %109 = arith.mulf %105, %108 : vector<16x128xf32>
    %c6 = arith.constant 6 : index
    %c0_48 = arith.constant 0 : index
    %c0_49 = arith.constant 0 : index
    %110 = vector.load %arg2[%c6, %c0_48, %c0_49] : memref<9x1x128xf32, #tpu.memory_space<vmem>>, vector<1x1x128xf32>
    %111 = vector.shape_cast %110 : vector<1x1x128xf32> to vector<1x128xf32>
    %112 = vector.broadcast %111 : vector<1x128xf32> to vector<16x128xf32>
    %113 = arith.addf %109, %112 : vector<16x128xf32>
    %114 = vector.broadcast %103 : vector<16x1xf32> to vector<16x128xf32>
    %115 = arith.mulf %81, %114 : vector<16x128xf32>
    %c4 = arith.constant 4 : index
    %c0_50 = arith.constant 0 : index
    %c0_51 = arith.constant 0 : index
    %116 = vector.load %arg2[%c4, %c0_50, %c0_51] : memref<9x1x128xf32, #tpu.memory_space<vmem>>, vector<1x1x128xf32>
    %117 = vector.shape_cast %116 : vector<1x1x128xf32> to vector<1x128xf32>
    %118 = vector.broadcast %117 : vector<1x128xf32> to vector<16x128xf32>
    %119 = arith.mulf %115, %118 : vector<16x128xf32>
    %c7 = arith.constant 7 : index
    %c0_52 = arith.constant 0 : index
    %c0_53 = arith.constant 0 : index
    %120 = vector.load %arg2[%c7, %c0_52, %c0_53] : memref<9x1x128xf32, #tpu.memory_space<vmem>>, vector<1x1x128xf32>
    %121 = vector.shape_cast %120 : vector<1x1x128xf32> to vector<1x128xf32>
    %122 = vector.broadcast %121 : vector<1x128xf32> to vector<16x128xf32>
    %123 = arith.addf %119, %122 : vector<16x128xf32>
    %124 = vector.broadcast %103 : vector<16x1xf32> to vector<16x128xf32>
    %125 = arith.mulf %87, %124 : vector<16x128xf32>
    %c5 = arith.constant 5 : index
    %c0_54 = arith.constant 0 : index
    %c0_55 = arith.constant 0 : index
    %126 = vector.load %arg2[%c5, %c0_54, %c0_55] : memref<9x1x128xf32, #tpu.memory_space<vmem>>, vector<1x1x128xf32>
    %127 = vector.shape_cast %126 : vector<1x1x128xf32> to vector<1x128xf32>
    %128 = vector.broadcast %127 : vector<1x128xf32> to vector<16x128xf32>
    %129 = arith.mulf %125, %128 : vector<16x128xf32>
    %c8 = arith.constant 8 : index
    %c0_56 = arith.constant 0 : index
    %c0_57 = arith.constant 0 : index
    %130 = vector.load %arg2[%c8, %c0_56, %c0_57] : memref<9x1x128xf32, #tpu.memory_space<vmem>>, vector<1x1x128xf32>
    %131 = vector.shape_cast %130 : vector<1x1x128xf32> to vector<1x128xf32>
    %132 = vector.broadcast %131 : vector<1x128xf32> to vector<16x128xf32>
    %133 = arith.addf %129, %132 : vector<16x128xf32>
    %134 = tpu.concatenate %113, %123, %133 in 0 : vector<16x128xf32>, vector<16x128xf32>, vector<16x128xf32> -> vector<48x128xf32>
    %cst_58 = arith.constant 0.000000e+00 : f32
    %135 = vector.broadcast %cst_58 : f32 to vector<16x128xf32>
    %136 = arith.cmpf oge, %59, %135 : vector<16x128xf32>
    %cst_59 = arith.constant 0.00999999977 : f32
    %137 = vector.broadcast %cst_59 : f32 to vector<16x128xf32>
    %138 = arith.mulf %137, %59 : vector<16x128xf32>
    %139 = arith.select %136, %59, %138 : vector<16x128xi1>, vector<16x128xf32>
    %c0_60 = arith.constant 0 : index
    %c0_61 = arith.constant 0 : index
    %c0_62 = arith.constant 0 : index
    %140 = vector.load %arg1[%c0_60, %c0_61, %c0_62] : memref<6x128x128xbf16, #tpu.memory_space<vmem>>, vector<1x128x128xbf16>
    %141 = vector.shape_cast %140 : vector<1x128x128xbf16> to vector<128x128xbf16>
    %142 = arith.truncf %134 : vector<48x128xf32> to vector<48x128xbf16>
    %cst_63 = arith.constant dense<0.000000e+00> : vector<48x128xf32>
    %143 = tpu.matmul %142, %141, %cst_63 {dimension_numbers = #tpu.dot_dimension_numbers<[1], [0], [0], [1], [0, 0, 1, 1], [], []>} : vector<48x128xbf16>, vector<128x128xbf16>, vector<48x128xf32> -> vector<48x128xf32>
    %144 = vector.extract_strided_slice %134 {offsets = [0, 0], sizes = [16, 128], strides = [1, 1]} : vector<48x128xf32> to vector<16x128xf32>
    %145 = vector.extract_strided_slice %134 {offsets = [16, 0], sizes = [16, 128], strides = [1, 1]} : vector<48x128xf32> to vector<16x128xf32>
    %146 = vector.extract_strided_slice %134 {offsets = [32, 0], sizes = [16, 128], strides = [1, 1]} : vector<48x128xf32> to vector<16x128xf32>
    %147 = vector.extract_strided_slice %143 {offsets = [0, 0], sizes = [16, 128], strides = [1, 1]} : vector<48x128xf32> to vector<16x128xf32>
    %148 = vector.extract_strided_slice %143 {offsets = [16, 0], sizes = [16, 128], strides = [1, 1]} : vector<48x128xf32> to vector<16x128xf32>
    %149 = vector.extract_strided_slice %143 {offsets = [32, 0], sizes = [16, 128], strides = [1, 1]} : vector<48x128xf32> to vector<16x128xf32>
    %150 = arith.mulf %144, %147 : vector<16x128xf32>
    %151 = arith.mulf %145, %148 : vector<16x128xf32>
    %152 = arith.addf %150, %151 : vector<16x128xf32>
    %153 = arith.mulf %146, %149 : vector<16x128xf32>
    %154 = arith.addf %152, %153 : vector<16x128xf32>
    %155 = arith.mulf %147, %147 : vector<16x128xf32>
    %156 = arith.mulf %148, %148 : vector<16x128xf32>
    %157 = arith.addf %155, %156 : vector<16x128xf32>
    %158 = arith.mulf %149, %149 : vector<16x128xf32>
    %159 = arith.addf %157, %158 : vector<16x128xf32>
    %cst_64 = arith.constant 0.000000e+00 : f32
    %160 = vector.broadcast %cst_64 : f32 to vector<16x128xf32>
    %161 = arith.cmpf oge, %154, %160 : vector<16x128xf32>
    %cst_65 = arith.constant 9.99999997E-7 : f32
    %162 = vector.broadcast %cst_65 : f32 to vector<16x128xf32>
    %163 = arith.addf %159, %162 : vector<16x128xf32>
    %164 = arith.divf %154, %163 : vector<16x128xf32>
    %cst_66 = arith.constant 0.000000e+00 : f32
    %165 = vector.broadcast %cst_66 : f32 to vector<16x128xf32>
    %166 = arith.select %161, %165, %164 : vector<16x128xi1>, vector<16x128xf32>
    %167 = arith.mulf %166, %147 : vector<16x128xf32>
    %168 = arith.subf %144, %167 : vector<16x128xf32>
    %169 = arith.mulf %166, %148 : vector<16x128xf32>
    %170 = arith.subf %145, %169 : vector<16x128xf32>
    %171 = arith.mulf %166, %149 : vector<16x128xf32>
    %172 = arith.subf %146, %171 : vector<16x128xf32>
    %173 = tpu.concatenate %168, %170, %172 in 0 : vector<16x128xf32>, vector<16x128xf32>, vector<16x128xf32> -> vector<48x128xf32>
    %cst_67 = arith.constant 0.00999999977 : f32
    %174 = vector.broadcast %cst_67 : f32 to vector<48x128xf32>
    %175 = arith.mulf %174, %134 : vector<48x128xf32>
    %cst_68 = arith.constant 9.900000e-01 : f32
    %176 = vector.broadcast %cst_68 : f32 to vector<48x128xf32>
    %177 = arith.mulf %176, %173 : vector<48x128xf32>
    %178 = arith.addf %175, %177 : vector<48x128xf32>
    %c0_69 = arith.constant 0 : index
    %c0_70 = arith.constant 0 : index
    %c0_71 = arith.constant 0 : index
    %179 = vector.load %arg2[%c0_69, %c0_70, %c0_71] : memref<9x1x128xf32, #tpu.memory_space<vmem>>, vector<1x1x128xf32>
    %180 = vector.shape_cast %179 : vector<1x1x128xf32> to vector<1x128xf32>
    %c1_72 = arith.constant 1 : index
    %c0_73 = arith.constant 0 : index
    %c0_74 = arith.constant 0 : index
    %181 = vector.load %arg1[%c1_72, %c0_73, %c0_74] : memref<6x128x128xbf16, #tpu.memory_space<vmem>>, vector<1x128x128xbf16>
    %182 = vector.shape_cast %181 : vector<1x128x128xbf16> to vector<128x128xbf16>
    %183 = arith.truncf %178 : vector<48x128xf32> to vector<48x128xbf16>
    %cst_75 = arith.constant dense<0.000000e+00> : vector<48x128xf32>
    %184 = tpu.matmul %183, %182, %cst_75 {dimension_numbers = #tpu.dot_dimension_numbers<[1], [0], [0], [1], [0, 0, 1, 1], [], []>} : vector<48x128xbf16>, vector<128x128xbf16>, vector<48x128xf32> -> vector<48x128xf32>
    %185 = vector.extract_strided_slice %184 {offsets = [0, 0], sizes = [16, 128], strides = [1, 1]} : vector<48x128xf32> to vector<16x128xf32>
    %186 = vector.extract_strided_slice %184 {offsets = [16, 0], sizes = [16, 128], strides = [1, 1]} : vector<48x128xf32> to vector<16x128xf32>
    %187 = vector.extract_strided_slice %184 {offsets = [32, 0], sizes = [16, 128], strides = [1, 1]} : vector<48x128xf32> to vector<16x128xf32>
    %188 = arith.mulf %185, %185 : vector<16x128xf32>
    %189 = arith.mulf %186, %186 : vector<16x128xf32>
    %190 = arith.addf %188, %189 : vector<16x128xf32>
    %191 = arith.mulf %187, %187 : vector<16x128xf32>
    %192 = arith.addf %190, %191 : vector<16x128xf32>
    %193 = math.sqrt %192 : vector<16x128xf32>
    %c2_76 = arith.constant 2 : index
    %c0_77 = arith.constant 0 : index
    %c0_78 = arith.constant 0 : index
    %194 = vector.load %arg1[%c2_76, %c0_77, %c0_78] : memref<6x128x128xbf16, #tpu.memory_space<vmem>>, vector<1x128x128xbf16>
    %195 = vector.shape_cast %194 : vector<1x128x128xbf16> to vector<128x128xbf16>
    %196 = arith.truncf %193 : vector<16x128xf32> to vector<16x128xbf16>
    %cst_79 = arith.constant dense<0.000000e+00> : vector<16x128xf32>
    %197 = tpu.matmul %196, %195, %cst_79 {dimension_numbers = #tpu.dot_dimension_numbers<[1], [0], [0], [1], [0, 0, 1, 1], [], []>} : vector<16x128xbf16>, vector<128x128xbf16>, vector<16x128xf32> -> vector<16x128xf32>
    %c3_80 = arith.constant 3 : index
    %c0_81 = arith.constant 0 : index
    %c0_82 = arith.constant 0 : index
    %198 = vector.load %arg1[%c3_80, %c0_81, %c0_82] : memref<6x128x128xbf16, #tpu.memory_space<vmem>>, vector<1x128x128xbf16>
    %199 = vector.shape_cast %198 : vector<1x128x128xbf16> to vector<128x128xbf16>
    %200 = arith.truncf %139 : vector<16x128xf32> to vector<16x128xbf16>
    %cst_83 = arith.constant dense<0.000000e+00> : vector<16x128xf32>
    %201 = tpu.matmul %200, %199, %cst_83 {dimension_numbers = #tpu.dot_dimension_numbers<[1], [0], [0], [1], [0, 0, 1, 1], [], []>} : vector<16x128xbf16>, vector<128x128xbf16>, vector<16x128xf32> -> vector<16x128xf32>
    %202 = arith.addf %197, %201 : vector<16x128xf32>
    %c4_84 = arith.constant 4 : index
    %c0_85 = arith.constant 0 : index
    %c0_86 = arith.constant 0 : index
    %203 = vector.load %arg1[%c4_84, %c0_85, %c0_86] : memref<6x128x128xbf16, #tpu.memory_space<vmem>>, vector<1x128x128xbf16>
    %204 = vector.shape_cast %203 : vector<1x128x128xbf16> to vector<128x128xbf16>
    %205 = arith.truncf %184 : vector<48x128xf32> to vector<48x128xbf16>
    %cst_87 = arith.constant dense<0.000000e+00> : vector<48x128xf32>
    %206 = tpu.matmul %205, %204, %cst_87 {dimension_numbers = #tpu.dot_dimension_numbers<[1], [0], [0], [1], [0, 0, 1, 1], [], []>} : vector<48x128xbf16>, vector<128x128xbf16>, vector<48x128xf32> -> vector<48x128xf32>
    %c5_88 = arith.constant 5 : index
    %c0_89 = arith.constant 0 : index
    %c0_90 = arith.constant 0 : index
    %207 = vector.load %arg1[%c5_88, %c0_89, %c0_90] : memref<6x128x128xbf16, #tpu.memory_space<vmem>>, vector<1x128x128xbf16>
    %208 = vector.shape_cast %207 : vector<1x128x128xbf16> to vector<128x128xbf16>
    %209 = arith.truncf %202 : vector<16x128xf32> to vector<16x128xbf16>
    %cst_91 = arith.constant dense<0.000000e+00> : vector<16x128xf32>
    %210 = tpu.matmul %209, %208, %cst_91 {dimension_numbers = #tpu.dot_dimension_numbers<[1], [0], [0], [1], [0, 0, 1, 1], [], []>} : vector<16x128xbf16>, vector<128x128xbf16>, vector<16x128xf32> -> vector<16x128xf32>
    %211 = vector.broadcast %180 : vector<1x128xf32> to vector<16x128xf32>
    %212 = arith.addf %210, %211 : vector<16x128xf32>
    %213 = arith.negf %212 : vector<16x128xf32>
    %214 = math.exp %213 : vector<16x128xf32>
    %cst_92 = arith.constant 1.000000e+00 : f32
    %215 = vector.broadcast %cst_92 : f32 to vector<16x128xf32>
    %216 = arith.addf %215, %214 : vector<16x128xf32>
    %217 = arith.divf %215, %216 : vector<16x128xf32>
    %218 = vector.extract_strided_slice %206 {offsets = [0, 0], sizes = [16, 128], strides = [1, 1]} : vector<48x128xf32> to vector<16x128xf32>
    %219 = vector.extract_strided_slice %206 {offsets = [16, 0], sizes = [16, 128], strides = [1, 1]} : vector<48x128xf32> to vector<16x128xf32>
    %220 = vector.extract_strided_slice %206 {offsets = [32, 0], sizes = [16, 128], strides = [1, 1]} : vector<48x128xf32> to vector<16x128xf32>
    %221 = arith.mulf %218, %217 : vector<16x128xf32>
    %222 = arith.mulf %219, %217 : vector<16x128xf32>
    %223 = arith.mulf %220, %217 : vector<16x128xf32>
    %224 = tpu.concatenate %221, %222, %223 in 0 : vector<16x128xf32>, vector<16x128xf32>, vector<16x128xf32> -> vector<48x128xf32>
    %c0_93 = arith.constant 0 : index
    %c0_94 = arith.constant 0 : index
    %225 = vector.load %arg6[%c0_93, %c0_94] : memref<16x128xf32, #tpu.memory_space<vmem>>, vector<16x128xf32>
    tpu.vector_store %arg6[%c0_93, %c0_94], %202 {strides = array<i32>} : memref<16x128xf32, #tpu.memory_space<vmem>>, vector<16x128xf32>,
    %226 = vector.extract_strided_slice %224 {offsets = [0, 0], sizes = [16, 128], strides = [1, 1]} : vector<48x128xf32> to vector<16x128xf32>
    %227 = vector.extract_strided_slice %224 {offsets = [16, 0], sizes = [16, 128], strides = [1, 1]} : vector<48x128xf32> to vector<16x128xf32>
    %228 = vector.extract_strided_slice %224 {offsets = [32, 0], sizes = [16, 128], strides = [1, 1]} : vector<48x128xf32> to vector<16x128xf32>
    %c0_95 = arith.constant 0 : index
    %c0_96 = arith.constant 0 : index
    %c0_97 = arith.constant 0 : index
    %229 = vector.load %arg7[%c0_95, %c0_96, %c0_97] : memref<3x16x128xf32, #tpu.memory_space<vmem>>, vector<1x16x128xf32>
    %230 = vector.shape_cast %229 : vector<1x16x128xf32> to vector<16x128xf32>
    %231 = vector.shape_cast %226 : vector<16x128xf32> to vector<1x16x128xf32>
    tpu.vector_store %arg7[%c0_95, %c0_96, %c0_97], %231 {strides = array<i32>} : memref<3x16x128xf32, #tpu.memory_space<vmem>>, vector<1x16x128xf32>,
    %c1_98 = arith.constant 1 : index
    %c0_99 = arith.constant 0 : index
    %c0_100 = arith.constant 0 : index
    %232 = vector.load %arg7[%c1_98, %c0_99, %c0_100] : memref<3x16x128xf32, #tpu.memory_space<vmem>>, vector<1x16x128xf32>
    %233 = vector.shape_cast %232 : vector<1x16x128xf32> to vector<16x128xf32>
    %234 = vector.shape_cast %227 : vector<16x128xf32> to vector<1x16x128xf32>
    tpu.vector_store %arg7[%c1_98, %c0_99, %c0_100], %234 {strides = array<i32>} : memref<3x16x128xf32, #tpu.memory_space<vmem>>, vector<1x16x128xf32>,
    %c2_101 = arith.constant 2 : index
    %c0_102 = arith.constant 0 : index
    %c0_103 = arith.constant 0 : index
    %235 = vector.load %arg7[%c2_101, %c0_102, %c0_103] : memref<3x16x128xf32, #tpu.memory_space<vmem>>, vector<1x16x128xf32>
    %236 = vector.shape_cast %235 : vector<1x16x128xf32> to vector<16x128xf32>
    %237 = vector.shape_cast %228 : vector<16x128xf32> to vector<1x16x128xf32>
    tpu.vector_store %arg7[%c2_101, %c0_102, %c0_103], %237 {strides = array<i32>} : memref<3x16x128xf32, #tpu.memory_space<vmem>>, vector<1x16x128xf32>,
    return
  }
  func.func @transform_0(%arg0: i32) -> (i32, i32, i32) {
    %c0_i32 = arith.constant 0 : i32
    %c0_i32_0 = arith.constant 0 : i32
    %c0_i32_1 = arith.constant 0 : i32
    %c0_i32_2 = arith.constant 0 : i32
    return %c0_i32, %c0_i32_0, %c0_i32_1 : i32, i32, i32
  }
  func.func @transform_1(%arg0: i32) -> (i32, i32, i32) {
    %c0_i32 = arith.constant 0 : i32
    %c0_i32_0 = arith.constant 0 : i32
    %c0_i32_1 = arith.constant 0 : i32
    %c0_i32_2 = arith.constant 0 : i32
    return %c0_i32, %c0_i32_0, %c0_i32_1 : i32, i32, i32
  }
  func.func @transform_2(%arg0: i32) -> (i32, i32) {
    %c0_i32 = arith.constant 0 : i32
    %c0_i32_0 = arith.constant 0 : i32
    return %arg0, %c0_i32 : i32, i32
  }
  func.func @transform_3(%arg0: i32) -> (i32, i32, i32) {
    %c0_i32 = arith.constant 0 : i32
    %c0_i32_0 = arith.constant 0 : i32
    %c0_i32_1 = arith.constant 0 : i32
    return %c0_i32, %arg0, %c0_i32_0 : i32, i32, i32
  }
  func.func @transform_4(%arg0: i32) -> (i32, i32) {
    %c0_i32 = arith.constant 0 : i32
    %c0_i32_0 = arith.constant 0 : i32
    return %arg0, %c0_i32 : i32, i32
  }
  func.func @transform_5(%arg0: i32) -> (i32, i32) {
    %c0_i32 = arith.constant 0 : i32
    %c0_i32_0 = arith.constant 0 : i32
    return %arg0, %c0_i32 : i32, i32
  }
  func.func @transform_6(%arg0: i32) -> (i32, i32, i32) {
    %c0_i32 = arith.constant 0 : i32
    %c0_i32_0 = arith.constant 0 : i32
    %c0_i32_1 = arith.constant 0 : i32
    return %c0_i32, %arg0, %c0_i32_0 : i32, i32, i32
  }
}

</mosaic_0001>

<llo_original>
// kernel: block_forward.3
$region0: #{block_forward.3}
  #allocation0 [shape = 'u32[]', space=smem, size = 0x4, offset = 0x4, fixed_abs, tag = 'smem constant byte address 0x4 - core index']
  #allocation1 [shape = 'u32[144,128]{1,0:T(1,128)}', space=vmem, size = 0x12000, scoped, tag = 'internal scratch']
  %s0 = inlined_call_operand.vmem [shape: bf16[10,128,128], index: 0, kind: input, shape index: {}]
  %s1 = inlined_call_operand.vmem [shape: f32[2,1,128], index: 1, kind: input, shape index: {}]
  %s2 = inlined_call_operand.vmem [shape: f32[16,128], index: 2, kind: input, shape index: {}]
  %s3 = inlined_call_operand.vmem [shape: f32[3,16,128], index: 3, kind: input, shape index: {}]
  %s4 = inlined_call_operand.vmem [shape: bf16[16,512], index: 4, kind: output, shape index: {0}]
  %s5 = inlined_call_operand.vmem [shape: f32[16,128], index: 5, kind: output, shape index: {1}]
  %s6 = inlined_call_operand.vmem [shape: f32[3,16,128], index: 6, kind: output, shape index: {2}]
  %7 = xla_tuple %s4, %s5, %s6
  %s8 = sld [smem:[#allocation0]]
  $region42: #{block_forward.3} parent=0
    _
  %s10 = ssub.s32 1, %s8
  %s11 = scalar_select 0, %s10, %s8
  // Predicated region
  $region2: #{block_forward.3} parent=0 // pred_check
    _
  $region3: #{block_forward.3} parent=0 // pred_check_branch
    %13 = sbr.rel (0) target = $region5
  $region4: #{block_forward.3} parent=0 // pred_region
    _
  $region5: #{block_forward.3} parent=0 // pred_fallthru
    _
  // Predicated region
  $region6: #{block_forward.3} parent=0 // pred_check
    _
  $region7: #{block_forward.3} parent=0 // pred_check_branch
    %15 = sbr.rel (0) target = $region9
  $region8: #{block_forward.3} parent=0 // pred_region
    _
  $region9: #{block_forward.3} parent=0 // pred_fallthru
    _
  // Predicated region
  $region10: #{block_forward.3} parent=0 // pred_check
    _
  $region11: #{block_forward.3} parent=0 // pred_check_branch
    %17 = sbr.rel (0) target = $region13
  $region12: #{block_forward.3} parent=0 // pred_region
    _
  $region13: #{block_forward.3} parent=0 // pred_fallthru
    _
  // Predicated region
  $region14: #{block_forward.3} parent=0 // pred_check
    _
  $region15: #{block_forward.3} parent=0 // pred_check_branch
    %19 = sbr.rel (0) target = $region17
  $region16: #{block_forward.3} parent=0 // pred_region
    _
  $region17: #{block_forward.3} parent=0 // pred_fallthru
    _
  %v21 = vld [vmem:[%s2] sm:$0xff]
  %v22 = vld [vmem:[%s2 + $0x8] sm:$0xff]
  %v23 = vpack.c.bf16 %v22, %v21
  %v24 = vld [vmem:[%s3] sm:$0xff]
  %v25 = vld [vmem:[%s3 + $0x8] sm:$0xff]
  %s26 = scalar_lea.vmem %s3, 16
  %v27 = vld [vmem:[%s26] sm:$0xff]
  %v28 = vld [vmem:[%s26 + $0x8] sm:$0xff]
  %s29 = scalar_lea.vmem %s3, 32
  %v30 = vld [vmem:[%s29] sm:$0xff]
  %v31 = vld [vmem:[%s29 + $0x8] sm:$0xff]
  %v32 = vpack.c.bf16 %v25, %v24
  %v33 = vpack.c.bf16 %v28, %v27
  %v34 = vpack.c.bf16 %v31, %v30
  %v35 = vld [vmem:[%s1] sm:$0x1]
  %v36 = vld [vmem:[%s0] sm:$0xf]
  %v37 = vld [vmem:[%s0 + $0x4] sm:$0xf]
  %v38 = vld [vmem:[%s0 + $0x8] sm:$0xf]
  %v39 = vld [vmem:[%s0 + $0xc] sm:$0xf]
  %v40 = vld [vmem:[%s0 + $0x10] sm:$0xf]
  %v41 = vld [vmem:[%s0 + $0x14] sm:$0xf]
  %v42 = vld [vmem:[%s0 + $0x18] sm:$0xf]
  %v43 = vld [vmem:[%s0 + $0x1c] sm:$0xf]
  %v44 = vld [vmem:[%s0 + $0x20] sm:$0xf]
  %v45 = vld [vmem:[%s0 + $0x24] sm:$0xf]
  %v46 = vld [vmem:[%s0 + $0x28] sm:$0xf]
  %v47 = vld [vmem:[%s0 + $0x2c] sm:$0xf]
  %v48 = vld [vmem:[%s0 + $0x30] sm:$0xf]
  %v49 = vld [vmem:[%s0 + $0x34] sm:$0xf]
  %v50 = vld [vmem:[%s0 + $0x38] sm:$0xf]
  %v51 = vld [vmem:[%s0 + $0x3c] sm:$0xf]
  %v68 = vunpack.c.l.b16 %v36
  %v69 = vunpack.c.l.b16 %v37
  %v70 = vunpack.c.l.b16 %v38
  %v71 = vunpack.c.l.b16 %v39
  %v72 = vunpack.c.l.b16 %v40
  %v73 = vunpack.c.l.b16 %v41
  %v74 = vunpack.c.l.b16 %v42
  %v75 = vunpack.c.l.b16 %v43
  %v76 = vunpack.c.l.b16 %v44
  %v77 = vunpack.c.l.b16 %v45
  %v78 = vunpack.c.l.b16 %v46
  %v79 = vunpack.c.l.b16 %v47
  %v80 = vunpack.c.l.b16 %v48
  %v81 = vunpack.c.l.b16 %v49
  %v82 = vunpack.c.l.b16 %v50
  %v83 = vunpack.c.l.b16 %v51
  %v84 = vpack.c.b16 %v69, %v68
  %v85 = vpack.c.b16 %v71, %v70
  %v86 = vpack.c.b16 %v73, %v72
  %v87 = vpack.c.b16 %v75, %v74
  %v88 = vpack.c.b16 %v77, %v76
  %v89 = vpack.c.b16 %v79, %v78
  %v90 = vpack.c.b16 %v81, %v80
  %v91 = vpack.c.b16 %v83, %v82
  %100 = vmatprep.subr.bf16.mxu0 0
  %101 = vmatpush1.bf16.msra.mxu0 %v84
  %102 = vmatprep.subr.bf16.mxu0 0
  %103 = vmatpush1.bf16.msra.mxu0 %v85
  %104 = vmatprep.subr.bf16.mxu0 0
  %105 = vmatpush1.bf16.msra.mxu0 %v86
  %106 = vmatprep.subr.bf16.mxu0 0
  %107 = vmatpush1.bf16.msra.mxu0 %v87
  %108 = vmatprep.subr.bf16.mxu0 0
  %109 = vmatpush1.bf16.msra.mxu0 %v88
  %110 = vmatprep.subr.bf16.mxu0 0
  %111 = vmatpush1.bf16.msra.mxu0 %v89
  %112 = vmatprep.subr.bf16.mxu0 0
  %113 = vmatpush1.bf16.msra.mxu0 %v90
  %114 = vmatprep.subr.bf16.mxu0 0
  %115 = vmatpush1.bf16.msra.mxu0 %v91
  %116 = vmatprep.subr.bf16.mxu0 0
  %117 = vmatpush1.bf16.msra.mxu0 0
  %118 = vmatprep.subr.bf16.mxu0 0
  %119 = vmatpush1.bf16.msra.mxu0 0
  %120 = vmatprep.subr.bf16.mxu0 0
  %121 = vmatpush1.bf16.msra.mxu0 0
  %122 = vmatprep.subr.bf16.mxu0 0
  %123 = vmatpush1.bf16.msra.mxu0 0
  %124 = vmatprep.subr.bf16.mxu0 0
  %125 = vmatpush1.bf16.msra.mxu0 0
  %126 = vmatprep.subr.bf16.mxu0 0
  %127 = vmatpush1.bf16.msra.mxu0 0
  %128 = vmatprep.subr.bf16.mxu0 0
  %129 = vmatpush1.bf16.msra.mxu0 0
  %130 = vmatprep.subr.bf16.mxu0 0
  %131 = vmatpush1.bf16.msra.mxu0 0
  %132 = vmatprep.mubr.bf16.mxu0 0
  %133 = vmatmul.mubr.bf16.gmra.mrb[0].mxu0 %v32
  %v134 = vpop.f32.mrb[0].mxu0
  %v135 = vadd.f32 0.0, %v134
  %v136 = vpop.f32.mrb[0].mxu0
  %v137 = vpop.f32.mrb[0].mxu0
  %v138 = vadd.f32 0.0, %v137
  %v139 = vpop.f32.mrb[0].mxu0
  %140 = vmatprep.mubr.bf16.mxu0 0
  %141 = vmatmul.mubr.bf16.gmra.mrb[0].mxu0 %v33
  %v142 = vpop.f32.mrb[0].mxu0
  %v143 = vadd.f32 0.0, %v142
  %v144 = vpop.f32.mrb[0].mxu0
  %v145 = vpop.f32.mrb[0].mxu0
  %v146 = vadd.f32 0.0, %v145
  %v147 = vpop.f32.mrb[0].mxu0
  %148 = vmatprep.mubr.bf16.mxu0 0
  %149 = vmatmul.mubr.bf16.gmra.mrb[0].mxu0 %v34
  %v150 = vpop.f32.mrb[0].mxu0
  %v151 = vadd.f32 0.0, %v150
  %v152 = vpop.f32.mrb[0].mxu0
  %v153 = vpop.f32.mrb[0].mxu0
  %v154 = vadd.f32 0.0, %v153
  %v155 = vpop.f32.mrb[0].mxu0
  %156 = vdwg.mxu0
  %v157 = vmul.f32 %v135, %v135
  %v158 = vmul.f32 %v138, %v138
  %v159 = vmul.f32 %v143, %v143
  %v160 = vmul.f32 %v146, %v146
  %v161 = vadd.f32 %v157, %v159
  %v162 = vadd.f32 %v158, %v160
  %v163 = vmul.f32 %v151, %v151
  %v164 = vmul.f32 %v154, %v154
  %v165 = vadd.f32 %v161, %v163
  %v166 = vadd.f32 %v162, %v164
  %v167 = vrsqrt.pop %v165
  %v168 = vmul.f32 %v165, %v167
  %vm169 = vcmp.eq.f32.partialorder %v165, inf
  %v170 = vsel %vm169, %v165, %v168
  %vm171 = vcmp.eq.f32.partialorder %v165, 0.0
  %v172 = vand.u32 %v165, 2147483648
  %v173 = vsel %vm171, %v172, %v170
  %v174 = vrsqrt.pop %v166
  %v175 = vmul.f32 %v166, %v174
  %vm176 = vcmp.eq.f32.partialorder %v166, inf
  %v177 = vsel %vm176, %v166, %v175
  %vm178 = vcmp.eq.f32.partialorder %v166, 0.0
  %v179 = vand.u32 %v166, 2147483648
  %v180 = vsel %vm178, %v179, %v177
  %s181 = scalar_lea.vmem %s0, 64
  %v182 = vld [vmem:[%s181] sm:$0xf]
  %v183 = vld [vmem:[%s181 + $0x4] sm:$0xf]
  %v184 = vld [vmem:[%s181 + $0x8] sm:$0xf]
  %v185 = vld [vmem:[%s181 + $0xc] sm:$0xf]
  %v186 = vld [vmem:[%s181 + $0x10] sm:$0xf]
  %v187 = vld [vmem:[%s181 + $0x14] sm:$0xf]
  %v188 = vld [vmem:[%s181 + $0x18] sm:$0xf]
  %v189 = vld [vmem:[%s181 + $0x1c] sm:$0xf]
  %v190 = vld [vmem:[%s181 + $0x20] sm:$0xf]
  %v191 = vld [vmem:[%s181 + $0x24] sm:$0xf]
  %v192 = vld [vmem:[%s181 + $0x28] sm:$0xf]
  %v193 = vld [vmem:[%s181 + $0x2c] sm:$0xf]
  %v194 = vld [vmem:[%s181 + $0x30] sm:$0xf]
  %v195 = vld [vmem:[%s181 + $0x34] sm:$0xf]
  %v196 = vld [vmem:[%s181 + $0x38] sm:$0xf]
  %v197 = vld [vmem:[%s181 + $0x3c] sm:$0xf]
  %v198 = vpack.c.bf16 %v180, %v173
  %s199 = scalar_lea.vmem %s0, 128
  %v200 = vld [vmem:[%s199] sm:$0xf]
  %v201 = vld [vmem:[%s199 + $0x4] sm:$0xf]
  %v202 = vld [vmem:[%s199 + $0x8] sm:$0xf]
  %v203 = vld [vmem:[%s199 + $0xc] sm:$0xf]
  %v204 = vld [vmem:[%s199 + $0x10] sm:$0xf]
  %v205 = vld [vmem:[%s199 + $0x14] sm:$0xf]
  %v206 = vld [vmem:[%s199 + $0x18] sm:$0xf]
  %v207 = vld [vmem:[%s199 + $0x1c] sm:$0xf]
  %v208 = vld [vmem:[%s199 + $0x20] sm:$0xf]
  %v209 = vld [vmem:[%s199 + $0x24] sm:$0xf]
  %v210 = vld [vmem:[%s199 + $0x28] sm:$0xf]
  %v211 = vld [vmem:[%s199 + $0x2c] sm:$0xf]
  %v212 = vld [vmem:[%s199 + $0x30] sm:$0xf]
  %v213 = vld [vmem:[%s199 + $0x34] sm:$0xf]
  %v214 = vld [vmem:[%s199 + $0x38] sm:$0xf]
  %v215 = vld [vmem:[%s199 + $0x3c] sm:$0xf]
  %v232 = vunpack.c.l.b16 %v200
  %v233 = vunpack.c.l.b16 %v201
  %v234 = vunpack.c.l.b16 %v202
  %v235 = vunpack.c.l.b16 %v203
  %v236 = vunpack.c.l.b16 %v204
  %v237 = vunpack.c.l.b16 %v205
  %v238 = vunpack.c.l.b16 %v206
  %v239 = vunpack.c.l.b16 %v207
  %v240 = vunpack.c.l.b16 %v208
  %v241 = vunpack.c.l.b16 %v209
  %v242 = vunpack.c.l.b16 %v210
  %v243 = vunpack.c.l.b16 %v211
  %v244 = vunpack.c.l.b16 %v212
  %v245 = vunpack.c.l.b16 %v213
  %v246 = vunpack.c.l.b16 %v214
  %v247 = vunpack.c.l.b16 %v215
  %v248 = vpack.c.b16 %v233, %v232
  %v249 = vpack.c.b16 %v235, %v234
  %v250 = vpack.c.b16 %v237, %v236
  %v251 = vpack.c.b16 %v239, %v238
  %v252 = vpack.c.b16 %v241, %v240
  %v253 = vpack.c.b16 %v243, %v242
  %v254 = vpack.c.b16 %v245, %v244
  %v255 = vpack.c.b16 %v247, %v246
  %264 = vmatprep.subr.bf16.mxu0 0
  %265 = vmatpush1.bf16.msra.mxu0 %v248
  %266 = vmatprep.subr.bf16.mxu0 0
  %267 = vmatpush1.bf16.msra.mxu0 %v249
  %268 = vmatprep.subr.bf16.mxu0 0
  %269 = vmatpush1.bf16.msra.mxu0 %v250
  %270 = vmatprep.subr.bf16.mxu0 0
  %271 = vmatpush1.bf16.msra.mxu0 %v251
  %272 = vmatprep.subr.bf16.mxu0 0
  %273 = vmatpush1.bf16.msra.mxu0 %v252
  %274 = vmatprep.subr.bf16.mxu0 0
  %275 = vmatpush1.bf16.msra.mxu0 %v253
  %276 = vmatprep.subr.bf16.mxu0 0
  %277 = vmatpush1.bf16.msra.mxu0 %v254
  %278 = vmatprep.subr.bf16.mxu0 0
  %279 = vmatpush1.bf16.msra.mxu0 %v255
  %280 = vmatprep.subr.bf16.mxu0 0
  %281 = vmatpush1.bf16.msra.mxu0 0
  %282 = vmatprep.subr.bf16.mxu0 0
  %283 = vmatpush1.bf16.msra.mxu0 0
  %284 = vmatprep.subr.bf16.mxu0 0
  %285 = vmatpush1.bf16.msra.mxu0 0
  %286 = vmatprep.subr.bf16.mxu0 0
  %287 = vmatpush1.bf16.msra.mxu0 0
  %288 = vmatprep.subr.bf16.mxu0 0
  %289 = vmatpush1.bf16.msra.mxu0 0
  %290 = vmatprep.subr.bf16.mxu0 0
  %291 = vmatpush1.bf16.msra.mxu0 0
  %292 = vmatprep.subr.bf16.mxu0 0
  %293 = vmatpush1.bf16.msra.mxu0 0
  %294 = vmatprep.subr.bf16.mxu0 0
  %295 = vmatpush1.bf16.msra.mxu0 0
  %296 = vmatprep.mubr.bf16.mxu0 0
  %297 = vmatmul.mubr.bf16.gmra.mrb[0].mxu0 %v23
  %v298 = vpop.f32.mrb[0].mxu0
  %v299 = vadd.f32 0.0, %v298
  %v300 = vpop.f32.mrb[0].mxu0
  %v301 = vpop.f32.mrb[0].mxu0
  %v302 = vadd.f32 0.0, %v301
  %v303 = vpop.f32.mrb[0].mxu0
  %304 = vdwg.mxu0
  %v321 = vunpack.c.l.b16 %v182
  %v322 = vunpack.c.l.b16 %v183
  %v323 = vunpack.c.l.b16 %v184
  %v324 = vunpack.c.l.b16 %v185
  %v325 = vunpack.c.l.b16 %v186
  %v326 = vunpack.c.l.b16 %v187
  %v327 = vunpack.c.l.b16 %v188
  %v328 = vunpack.c.l.b16 %v189
  %v329 = vunpack.c.l.b16 %v190
  %v330 = vunpack.c.l.b16 %v191
  %v331 = vunpack.c.l.b16 %v192
  %v332 = vunpack.c.l.b16 %v193
  %v333 = vunpack.c.l.b16 %v194
  %v334 = vunpack.c.l.b16 %v195
  %v335 = vunpack.c.l.b16 %v196
  %v336 = vunpack.c.l.b16 %v197
  %v337 = vpack.c.b16 %v322, %v321
  %v338 = vpack.c.b16 %v324, %v323
  %v339 = vpack.c.b16 %v326, %v325
  %v340 = vpack.c.b16 %v328, %v327
  %v341 = vpack.c.b16 %v330, %v329
  %v342 = vpack.c.b16 %v332, %v331
  %v343 = vpack.c.b16 %v334, %v333
  %v344 = vpack.c.b16 %v336, %v335
  %353 = vmatprep.subr.bf16.mxu0 0
  %354 = vmatpush1.bf16.msra.mxu0 %v337
  %355 = vmatprep.subr.bf16.mxu0 0
  %356 = vmatpush1.bf16.msra.mxu0 %v338
  %357 = vmatprep.subr.bf16.mxu0 0
  %358 = vmatpush1.bf16.msra.mxu0 %v339
  %359 = vmatprep.subr.bf16.mxu0 0
  %360 = vmatpush1.bf16.msra.mxu0 %v340
  %361 = vmatprep.subr.bf16.mxu0 0
  %362 = vmatpush1.bf16.msra.mxu0 %v341
  %363 = vmatprep.subr.bf16.mxu0 0
  %364 = vmatpush1.bf16.msra.mxu0 %v342
  %365 = vmatprep.subr.bf16.mxu0 0
  %366 = vmatpush1.bf16.msra.mxu0 %v343
  %367 = vmatprep.subr.bf16.mxu0 0
  %368 = vmatpush1.bf16.msra.mxu0 %v344
  %369 = vmatprep.subr.bf16.mxu0 0
  %370 = vmatpush1.bf16.msra.mxu0 0
  %371 = vmatprep.subr.bf16.mxu0 0
  %372 = vmatpush1.bf16.msra.mxu0 0
  %373 = vmatprep.subr.bf16.mxu0 0
  %374 = vmatpush1.bf16.msra.mxu0 0
  %375 = vmatprep.subr.bf16.mxu0 0
  %376 = vmatpush1.bf16.msra.mxu0 0
  %377 = vmatprep.subr.bf16.mxu0 0
  %378 = vmatpush1.bf16.msra.mxu0 0
  %379 = vmatprep.subr.bf16.mxu0 0
  %380 = vmatpush1.bf16.msra.mxu0 0
  %381 = vmatprep.subr.bf16.mxu0 0
  %382 = vmatpush1.bf16.msra.mxu0 0
  %383 = vmatprep.subr.bf16.mxu0 0
  %384 = vmatpush1.bf16.msra.mxu0 0
  %385 = vmatprep.mubr.bf16.mxu0 0
  %386 = vmatmul.mubr.bf16.gmra.mrb[0].mxu0 %v198
  %v387 = vpop.f32.mrb[0].mxu0
  %v388 = vadd.f32 %v299, %v387
  %v389 = vpop.f32.mrb[0].mxu0
  %v390 = vpop.f32.mrb[0].mxu0
  %v391 = vadd.f32 %v302, %v390
  %v392 = vpop.f32.mrb[0].mxu0
  %393 = vdwg.mxu0
  %s394 = scalar_lea.vmem %s0, 192
  %v395 = vld [vmem:[%s394] sm:$0xf]
  %v396 = vld [vmem:[%s394 + $0x4] sm:$0xf]
  %v397 = vld [vmem:[%s394 + $0x8] sm:$0xf]
  %v398 = vld [vmem:[%s394 + $0xc] sm:$0xf]
  %v399 = vld [vmem:[%s394 + $0x10] sm:$0xf]
  %v400 = vld [vmem:[%s394 + $0x14] sm:$0xf]
  %v401 = vld [vmem:[%s394 + $0x18] sm:$0xf]
  %v402 = vld [vmem:[%s394 + $0x1c] sm:$0xf]
  %v403 = vld [vmem:[%s394 + $0x20] sm:$0xf]
  %v404 = vld [vmem:[%s394 + $0x24] sm:$0xf]
  %v405 = vld [vmem:[%s394 + $0x28] sm:$0xf]
  %v406 = vld [vmem:[%s394 + $0x2c] sm:$0xf]
  %v407 = vld [vmem:[%s394 + $0x30] sm:$0xf]
  %v408 = vld [vmem:[%s394 + $0x34] sm:$0xf]
  %v409 = vld [vmem:[%s394 + $0x38] sm:$0xf]
  %v410 = vld [vmem:[%s394 + $0x3c] sm:$0xf]
  %v411 = vpack.c.bf16 %v138, %v135
  %v412 = vpack.c.bf16 %v146, %v143
  %v413 = vpack.c.bf16 %v154, %v151
  %v430 = vunpack.c.l.b16 %v395
  %v431 = vunpack.c.l.b16 %v396
  %v432 = vunpack.c.l.b16 %v397
  %v433 = vunpack.c.l.b16 %v398
  %v434 = vunpack.c.l.b16 %v399
  %v435 = vunpack.c.l.b16 %v400
  %v436 = vunpack.c.l.b16 %v401
  %v437 = vunpack.c.l.b16 %v402
  %v438 = vunpack.c.l.b16 %v403
  %v439 = vunpack.c.l.b16 %v404
  %v440 = vunpack.c.l.b16 %v405
  %v441 = vunpack.c.l.b16 %v406
  %v442 = vunpack.c.l.b16 %v407
  %v443 = vunpack.c.l.b16 %v408
  %v444 = vunpack.c.l.b16 %v409
  %v445 = vunpack.c.l.b16 %v410
  %v446 = vpack.c.b16 %v431, %v430
  %v447 = vpack.c.b16 %v433, %v432
  %v448 = vpack.c.b16 %v435, %v434
  %v449 = vpack.c.b16 %v437, %v436
  %v450 = vpack.c.b16 %v439, %v438
  %v451 = vpack.c.b16 %v441, %v440
  %v452 = vpack.c.b16 %v443, %v442
  %v453 = vpack.c.b16 %v445, %v444
  %462 = vmatprep.subr.bf16.mxu0 0
  %463 = vmatpush1.bf16.msra.mxu0 %v446
  %464 = vmatprep.subr.bf16.mxu0 0
  %465 = vmatpush1.bf16.msra.mxu0 %v447
  %466 = vmatprep.subr.bf16.mxu0 0
  %467 = vmatpush1.bf16.msra.mxu0 %v448
  %468 = vmatprep.subr.bf16.mxu0 0
  %469 = vmatpush1.bf16.msra.mxu0 %v449
  %470 = vmatprep.subr.bf16.mxu0 0
  %471 = vmatpush1.bf16.msra.mxu0 %v450
  %472 = vmatprep.subr.bf16.mxu0 0
  %473 = vmatpush1.bf16.msra.mxu0 %v451
  %474 = vmatprep.subr.bf16.mxu0 0
  %475 = vmatpush1.bf16.msra.mxu0 %v452
  %476 = vmatprep.subr.bf16.mxu0 0
  %477 = vmatpush1.bf16.msra.mxu0 %v453
  %478 = vmatprep.subr.bf16.mxu0 0
  %479 = vmatpush1.bf16.msra.mxu0 0
  %480 = vmatprep.subr.bf16.mxu0 0
  %481 = vmatpush1.bf16.msra.mxu0 0
  %482 = vmatprep.subr.bf16.mxu0 0
  %483 = vmatpush1.bf16.msra.mxu0 0
  %484 = vmatprep.subr.bf16.mxu0 0
  %485 = vmatpush1.bf16.msra.mxu0 0
  %486 = vmatprep.subr.bf16.mxu0 0
  %487 = vmatpush1.bf16.msra.mxu0 0
  %488 = vmatprep.subr.bf16.mxu0 0
  %489 = vmatpush1.bf16.msra.mxu0 0
  %490 = vmatprep.subr.bf16.mxu0 0
  %491 = vmatpush1.bf16.msra.mxu0 0
  %492 = vmatprep.subr.bf16.mxu0 0
  %493 = vmatpush1.bf16.msra.mxu0 0
  %494 = vmatprep.mubr.bf16.mxu0 0
  %495 = vmatmul.mubr.bf16.gmra.mrb[0].mxu0 %v411
  %v496 = vpop.f32.mrb[0].mxu0
  %v497 = vadd.f32 0.0, %v496
  %v498 = vpop.f32.mrb[0].mxu0
  %v499 = vpop.f32.mrb[0].mxu0
  %v500 = vadd.f32 0.0, %v499
  %v501 = vpop.f32.mrb[0].mxu0
  %502 = vmatprep.mubr.bf16.mxu0 0
  %503 = vmatmul.mubr.bf16.gmra.mrb[0].mxu0 %v412
  %v504 = vpop.f32.mrb[0].mxu0
  %v505 = vadd.f32 0.0, %v504
  %v506 = vpop.f32.mrb[0].mxu0
  %v507 = vpop.f32.mrb[0].mxu0
  %v508 = vadd.f32 0.0, %v507
  %v509 = vpop.f32.mrb[0].mxu0
  %510 = vmatprep.mubr.bf16.mxu0 0
  %511 = vmatmul.mubr.bf16.gmra.mrb[0].mxu0 %v413
  %v512 = vpop.f32.mrb[0].mxu0
  %v513 = vadd.f32 0.0, %v512
  %v514 = vpop.f32.mrb[0].mxu0
  %v515 = vpop.f32.mrb[0].mxu0
  %v516 = vadd.f32 0.0, %v515
  %v517 = vpop.f32.mrb[0].mxu0
  %518 = vdwg.mxu0
  %s519 = scalar_lea.vmem %s0, 256
  %v520 = vld [vmem:[%s519] sm:$0xf]
  %v521 = vld [vmem:[%s519 + $0x4] sm:$0xf]
  %v522 = vld [vmem:[%s519 + $0x8] sm:$0xf]
  %v523 = vld [vmem:[%s519 + $0xc] sm:$0xf]
  %v524 = vld [vmem:[%s519 + $0x10] sm:$0xf]
  %v525 = vld [vmem:[%s519 + $0x14] sm:$0xf]
  %v526 = vld [vmem:[%s519 + $0x18] sm:$0xf]
  %v527 = vld [vmem:[%s519 + $0x1c] sm:$0xf]
  %v528 = vld [vmem:[%s519 + $0x20] sm:$0xf]
  %v529 = vld [vmem:[%s519 + $0x24] sm:$0xf]
  %v530 = vld [vmem:[%s519 + $0x28] sm:$0xf]
  %v531 = vld [vmem:[%s519 + $0x2c] sm:$0xf]
  %v532 = vld [vmem:[%s519 + $0x30] sm:$0xf]
  %v533 = vld [vmem:[%s519 + $0x34] sm:$0xf]
  %v534 = vld [vmem:[%s519 + $0x38] sm:$0xf]
  %v535 = vld [vmem:[%s519 + $0x3c] sm:$0xf]
  %v536 = vpack.c.bf16 %v391, %v388
  %v538 = vlaneseq
  %v539 = vshrl.u32 %v538, 7
  %v540 = vsub.s32 0, %v539
  %v541 = vrot.slane %v35, %v540
  %v559 = vunpack.c.l.b16 %v520
  %v560 = vunpack.c.l.b16 %v521
  %v561 = vunpack.c.l.b16 %v522
  %v562 = vunpack.c.l.b16 %v523
  %v563 = vunpack.c.l.b16 %v524
  %v564 = vunpack.c.l.b16 %v525
  %v565 = vunpack.c.l.b16 %v526
  %v566 = vunpack.c.l.b16 %v527
  %v567 = vunpack.c.l.b16 %v528
  %v568 = vunpack.c.l.b16 %v529
  %v569 = vunpack.c.l.b16 %v530
  %v570 = vunpack.c.l.b16 %v531
  %v571 = vunpack.c.l.b16 %v532
  %v572 = vunpack.c.l.b16 %v533
  %v573 = vunpack.c.l.b16 %v534
  %v574 = vunpack.c.l.b16 %v535
  %v575 = vpack.c.b16 %v560, %v559
  %v576 = vpack.c.b16 %v562, %v561
  %v577 = vpack.c.b16 %v564, %v563
  %v578 = vpack.c.b16 %v566, %v565
  %v579 = vpack.c.b16 %v568, %v567
  %v580 = vpack.c.b16 %v570, %v569
  %v581 = vpack.c.b16 %v572, %v571
  %v582 = vpack.c.b16 %v574, %v573
  %591 = vmatprep.subr.bf16.mxu0 0
  %592 = vmatpush1.bf16.msra.mxu0 %v575
  %593 = vmatprep.subr.bf16.mxu0 0
  %594 = vmatpush1.bf16.msra.mxu0 %v576
  %595 = vmatprep.subr.bf16.mxu0 0
  %596 = vmatpush1.bf16.msra.mxu0 %v577
  %597 = vmatprep.subr.bf16.mxu0 0
  %598 = vmatpush1.bf16.msra.mxu0 %v578
  %599 = vmatprep.subr.bf16.mxu0 0
  %600 = vmatpush1.bf16.msra.mxu0 %v579
  %601 = vmatprep.subr.bf16.mxu0 0
  %602 = vmatpush1.bf16.msra.mxu0 %v580
  %603 = vmatprep.subr.bf16.mxu0 0
  %604 = vmatpush1.bf16.msra.mxu0 %v581
  %605 = vmatprep.subr.bf16.mxu0 0
  %606 = vmatpush1.bf16.msra.mxu0 %v582
  %607 = vmatprep.subr.bf16.mxu0 0
  %608 = vmatpush1.bf16.msra.mxu0 0
  %609 = vmatprep.subr.bf16.mxu0 0
  %610 = vmatpush1.bf16.msra.mxu0 0
  %611 = vmatprep.subr.bf16.mxu0 0
  %612 = vmatpush1.bf16.msra.mxu0 0
  %613 = vmatprep.subr.bf16.mxu0 0
  %614 = vmatpush1.bf16.msra.mxu0 0
  %615 = vmatprep.subr.bf16.mxu0 0
  %616 = vmatpush1.bf16.msra.mxu0 0
  %617 = vmatprep.subr.bf16.mxu0 0
  %618 = vmatpush1.bf16.msra.mxu0 0
  %619 = vmatprep.subr.bf16.mxu0 0
  %620 = vmatpush1.bf16.msra.mxu0 0
  %621 = vmatprep.subr.bf16.mxu0 0
  %622 = vmatpush1.bf16.msra.mxu0 0
  %623 = vmatprep.mubr.bf16.mxu0 0
  %624 = vmatmul.mubr.bf16.gmra.mrb[0].mxu0 %v536
  %v625 = vpop.f32.mrb[0].mxu0
  %v626 = vadd.f32 %v541, %v625
  %v627 = vpop.f32.mrb[0].mxu0
  %v628 = vpop.f32.mrb[0].mxu0
  %v629 = vadd.f32 %v541, %v628
  %v630 = vpop.f32.mrb[0].mxu0
  %631 = vdwg.mxu0
  %v632 = vxor.u32 %v626, 2147483648
  %v633 = vxor.u32 %v629, 2147483648
  %v634 = vmul.f32 %v632, 1.442695
  %v635 = vpow.pop %v634
  %v636 = vmul.f32 %v633, 1.442695
  %v637 = vpow.pop %v636
  %v638 = vadd.f32 %v635, 1.0
  %v639 = vadd.f32 %v637, 1.0
  %v640 = vrcp.pop %v638
  %v641 = vmul.f32 1.0, %v640
  %v642 = vrcp.pop %v639
  %v643 = vmul.f32 1.0, %v642
  %v644 = vmul.f32 %v497, %v641
  %v645 = vmul.f32 %v500, %v643
  %v646 = vmul.f32 %v505, %v641
  %v647 = vmul.f32 %v508, %v643
  %v648 = vmul.f32 %v513, %v641
  %v649 = vmul.f32 %v516, %v643
  %s650 = scalar_lea.vmem %s1, 1
  %v651 = vld [vmem:[%s650] sm:$0x1]
  %s652 = scalar_lea.vmem %s0, 320
  %v653 = vld [vmem:[%s652] sm:$0xf]
  %v654 = vld [vmem:[%s652 + $0x4] sm:$0xf]
  %v655 = vld [vmem:[%s652 + $0x8] sm:$0xf]
  %v656 = vld [vmem:[%s652 + $0xc] sm:$0xf]
  %v657 = vld [vmem:[%s652 + $0x10] sm:$0xf]
  %v658 = vld [vmem:[%s652 + $0x14] sm:$0xf]
  %v659 = vld [vmem:[%s652 + $0x18] sm:$0xf]
  %v660 = vld [vmem:[%s652 + $0x1c] sm:$0xf]
  %v661 = vld [vmem:[%s652 + $0x20] sm:$0xf]
  %v662 = vld [vmem:[%s652 + $0x24] sm:$0xf]
  %v663 = vld [vmem:[%s652 + $0x28] sm:$0xf]
  %v664 = vld [vmem:[%s652 + $0x2c] sm:$0xf]
  %v665 = vld [vmem:[%s652 + $0x30] sm:$0xf]
  %v666 = vld [vmem:[%s652 + $0x34] sm:$0xf]
  %v667 = vld [vmem:[%s652 + $0x38] sm:$0xf]
  %v668 = vld [vmem:[%s652 + $0x3c] sm:$0xf]
  %v685 = vunpack.c.l.b16 %v653
  %v686 = vunpack.c.l.b16 %v654
  %v687 = vunpack.c.l.b16 %v655
  %v688 = vunpack.c.l.b16 %v656
  %v689 = vunpack.c.l.b16 %v657
  %v690 = vunpack.c.l.b16 %v658
  %v691 = vunpack.c.l.b16 %v659
  %v692 = vunpack.c.l.b16 %v660
  %v693 = vunpack.c.l.b16 %v661
  %v694 = vunpack.c.l.b16 %v662
  %v695 = vunpack.c.l.b16 %v663
  %v696 = vunpack.c.l.b16 %v664
  %v697 = vunpack.c.l.b16 %v665
  %v698 = vunpack.c.l.b16 %v666
  %v699 = vunpack.c.l.b16 %v667
  %v700 = vunpack.c.l.b16 %v668
  %v701 = vpack.c.b16 %v686, %v685
  %v702 = vpack.c.b16 %v688, %v687
  %v703 = vpack.c.b16 %v690, %v689
  %v704 = vpack.c.b16 %v692, %v691
  %v705 = vpack.c.b16 %v694, %v693
  %v706 = vpack.c.b16 %v696, %v695
  %v707 = vpack.c.b16 %v698, %v697
  %v708 = vpack.c.b16 %v700, %v699
  %717 = vmatprep.subr.bf16.mxu0 0
  %718 = vmatpush1.bf16.msra.mxu0 %v701
  %719 = vmatprep.subr.bf16.mxu0 0
  %720 = vmatpush1.bf16.msra.mxu0 %v702
  %721 = vmatprep.subr.bf16.mxu0 0
  %722 = vmatpush1.bf16.msra.mxu0 %v703
  %723 = vmatprep.subr.bf16.mxu0 0
  %724 = vmatpush1.bf16.msra.mxu0 %v704
  %725 = vmatprep.subr.bf16.mxu0 0
  %726 = vmatpush1.bf16.msra.mxu0 %v705
  %727 = vmatprep.subr.bf16.mxu0 0
  %728 = vmatpush1.bf16.msra.mxu0 %v706
  %729 = vmatprep.subr.bf16.mxu0 0
  %730 = vmatpush1.bf16.msra.mxu0 %v707
  %731 = vmatprep.subr.bf16.mxu0 0
  %732 = vmatpush1.bf16.msra.mxu0 %v708
  %733 = vmatprep.subr.bf16.mxu0 0
  %734 = vmatpush1.bf16.msra.mxu0 0
  %735 = vmatprep.subr.bf16.mxu0 0
  %736 = vmatpush1.bf16.msra.mxu0 0
  %737 = vmatprep.subr.bf16.mxu0 0
  %738 = vmatpush1.bf16.msra.mxu0 0
  %739 = vmatprep.subr.bf16.mxu0 0
  %740 = vmatpush1.bf16.msra.mxu0 0
  %741 = vmatprep.subr.bf16.mxu0 0
  %742 = vmatpush1.bf16.msra.mxu0 0
  %743 = vmatprep.subr.bf16.mxu0 0
  %744 = vmatpush1.bf16.msra.mxu0 0
  %745 = vmatprep.subr.bf16.mxu0 0
  %746 = vmatpush1.bf16.msra.mxu0 0
  %747 = vmatprep.subr.bf16.mxu0 0
  %748 = vmatpush1.bf16.msra.mxu0 0
  %749 = vmatprep.mubr.bf16.mxu0 0
  %750 = vmatmul.mubr.bf16.gmra.mrb[0].mxu0 %v32
  %v751 = vpop.f32.mrb[0].mxu0
  %v752 = vadd.f32 0.0, %v751
  %v753 = vpop.f32.mrb[0].mxu0
  %v754 = vpop.f32.mrb[0].mxu0
  %v755 = vadd.f32 0.0, %v754
  %v756 = vpop.f32.mrb[0].mxu0
  %757 = vmatprep.mubr.bf16.mxu0 0
  %758 = vmatmul.mubr.bf16.gmra.mrb[0].mxu0 %v33
  %v759 = vpop.f32.mrb[0].mxu0
  %v760 = vadd.f32 0.0, %v759
  %v761 = vpop.f32.mrb[0].mxu0
  %v762 = vpop.f32.mrb[0].mxu0
  %v763 = vadd.f32 0.0, %v762
  %v764 = vpop.f32.mrb[0].mxu0
  %765 = vmatprep.mubr.bf16.mxu0 0
  %766 = vmatmul.mubr.bf16.gmra.mrb[0].mxu0 %v34
  %v767 = vpop.f32.mrb[0].mxu0
  %v768 = vadd.f32 0.0, %v767
  %v769 = vpop.f32.mrb[0].mxu0
  %v770 = vpop.f32.mrb[0].mxu0
  %v771 = vadd.f32 0.0, %v770
  %v772 = vpop.f32.mrb[0].mxu0
  %773 = vdwg.mxu0
  %v774 = vmul.f32 %v752, %v752
  %v775 = vmul.f32 %v755, %v755
  %v776 = vmul.f32 %v760, %v760
  %v777 = vmul.f32 %v763, %v763
  %v778 = vadd.f32 %v774, %v776
  %v779 = vadd.f32 %v775, %v777
  %v780 = vmul.f32 %v768, %v768
  %v781 = vmul.f32 %v771, %v771
  %v782 = vadd.f32 %v778, %v780
  %v783 = vadd.f32 %v779, %v781
  %v784 = vrsqrt.pop %v782
  %v785 = vmul.f32 %v782, %v784
  %vm786 = vcmp.eq.f32.partialorder %v782, inf
  %v787 = vsel %vm786, %v782, %v785
  %vm788 = vcmp.eq.f32.partialorder %v782, 0.0
  %v789 = vand.u32 %v782, 2147483648
  %v790 = vsel %vm788, %v789, %v787
  %v791 = vrsqrt.pop %v783
  %v792 = vmul.f32 %v783, %v791
  %vm793 = vcmp.eq.f32.partialorder %v783, inf
  %v794 = vsel %vm793, %v783, %v792
  %vm795 = vcmp.eq.f32.partialorder %v783, 0.0
  %v796 = vand.u32 %v783, 2147483648
  %v797 = vsel %vm795, %v796, %v794
  %s798 = scalar_lea.vmem %s0, 384
  %v799 = vld [vmem:[%s798] sm:$0xf]
  %v800 = vld [vmem:[%s798 + $0x4] sm:$0xf]
  %v801 = vld [vmem:[%s798 + $0x8] sm:$0xf]
  %v802 = vld [vmem:[%s798 + $0xc] sm:$0xf]
  %v803 = vld [vmem:[%s798 + $0x10] sm:$0xf]
  %v804 = vld [vmem:[%s798 + $0x14] sm:$0xf]
  %v805 = vld [vmem:[%s798 + $0x18] sm:$0xf]
  %v806 = vld [vmem:[%s798 + $0x1c] sm:$0xf]
  %v807 = vld [vmem:[%s798 + $0x20] sm:$0xf]
  %v808 = vld [vmem:[%s798 + $0x24] sm:$0xf]
  %v809 = vld [vmem:[%s798 + $0x28] sm:$0xf]
  %v810 = vld [vmem:[%s798 + $0x2c] sm:$0xf]
  %v811 = vld [vmem:[%s798 + $0x30] sm:$0xf]
  %v812 = vld [vmem:[%s798 + $0x34] sm:$0xf]
  %v813 = vld [vmem:[%s798 + $0x38] sm:$0xf]
  %v814 = vld [vmem:[%s798 + $0x3c] sm:$0xf]
  %v815 = vpack.c.bf16 %v797, %v790
  %s816 = scalar_lea.vmem %s0, 448
  %v817 = vld [vmem:[%s816] sm:$0xf]
  %v818 = vld [vmem:[%s816 + $0x4] sm:$0xf]
  %v819 = vld [vmem:[%s816 + $0x8] sm:$0xf]
  %v820 = vld [vmem:[%s816 + $0xc] sm:$0xf]
  %v821 = vld [vmem:[%s816 + $0x10] sm:$0xf]
  %v822 = vld [vmem:[%s816 + $0x14] sm:$0xf]
  %v823 = vld [vmem:[%s816 + $0x18] sm:$0xf]
  %v824 = vld [vmem:[%s816 + $0x1c] sm:$0xf]
  %v825 = vld [vmem:[%s816 + $0x20] sm:$0xf]
  %v826 = vld [vmem:[%s816 + $0x24] sm:$0xf]
  %v827 = vld [vmem:[%s816 + $0x28] sm:$0xf]
  %v828 = vld [vmem:[%s816 + $0x2c] sm:$0xf]
  %v829 = vld [vmem:[%s816 + $0x30] sm:$0xf]
  %v830 = vld [vmem:[%s816 + $0x34] sm:$0xf]
  %v831 = vld [vmem:[%s816 + $0x38] sm:$0xf]
  %v832 = vld [vmem:[%s816 + $0x3c] sm:$0xf]
  %v849 = vunpack.c.l.b16 %v817
  %v850 = vunpack.c.l.b16 %v818
  %v851 = vunpack.c.l.b16 %v819
  %v852 = vunpack.c.l.b16 %v820
  %v853 = vunpack.c.l.b16 %v821
  %v854 = vunpack.c.l.b16 %v822
  %v855 = vunpack.c.l.b16 %v823
  %v856 = vunpack.c.l.b16 %v824
  %v857 = vunpack.c.l.b16 %v825
  %v858 = vunpack.c.l.b16 %v826
  %v859 = vunpack.c.l.b16 %v827
  %v860 = vunpack.c.l.b16 %v828
  %v861 = vunpack.c.l.b16 %v829
  %v862 = vunpack.c.l.b16 %v830
  %v863 = vunpack.c.l.b16 %v831
  %v864 = vunpack.c.l.b16 %v832
  %v865 = vpack.c.b16 %v850, %v849
  %v866 = vpack.c.b16 %v852, %v851
  %v867 = vpack.c.b16 %v854, %v853
  %v868 = vpack.c.b16 %v856, %v855
  %v869 = vpack.c.b16 %v858, %v857
  %v870 = vpack.c.b16 %v860, %v859
  %v871 = vpack.c.b16 %v862, %v861
  %v872 = vpack.c.b16 %v864, %v863
  %881 = vmatprep.subr.bf16.mxu0 0
  %882 = vmatpush1.bf16.msra.mxu0 %v865
  %883 = vmatprep.subr.bf16.mxu0 0
  %884 = vmatpush1.bf16.msra.mxu0 %v866
  %885 = vmatprep.subr.bf16.mxu0 0
  %886 = vmatpush1.bf16.msra.mxu0 %v867
  %887 = vmatprep.subr.bf16.mxu0 0
  %888 = vmatpush1.bf16.msra.mxu0 %v868
  %889 = vmatprep.subr.bf16.mxu0 0
  %890 = vmatpush1.bf16.msra.mxu0 %v869
  %891 = vmatprep.subr.bf16.mxu0 0
  %892 = vmatpush1.bf16.msra.mxu0 %v870
  %893 = vmatprep.subr.bf16.mxu0 0
  %894 = vmatpush1.bf16.msra.mxu0 %v871
  %895 = vmatprep.subr.bf16.mxu0 0
  %896 = vmatpush1.bf16.msra.mxu0 %v872
  %897 = vmatprep.subr.bf16.mxu0 0
  %898 = vmatpush1.bf16.msra.mxu0 0
  %899 = vmatprep.subr.bf16.mxu0 0
  %900 = vmatpush1.bf16.msra.mxu0 0
  %901 = vmatprep.subr.bf16.mxu0 0
  %902 = vmatpush1.bf16.msra.mxu0 0
  %903 = vmatprep.subr.bf16.mxu0 0
  %904 = vmatpush1.bf16.msra.mxu0 0
  %905 = vmatprep.subr.bf16.mxu0 0
  %906 = vmatpush1.bf16.msra.mxu0 0
  %907 = vmatprep.subr.bf16.mxu0 0
  %908 = vmatpush1.bf16.msra.mxu0 0
  %909 = vmatprep.subr.bf16.mxu0 0
  %910 = vmatpush1.bf16.msra.mxu0 0
  %911 = vmatprep.subr.bf16.mxu0 0
  %912 = vmatpush1.bf16.msra.mxu0 0
  %913 = vmatprep.mubr.bf16.mxu0 0
  %914 = vmatmul.mubr.bf16.gmra.mrb[0].mxu0 %v23
  %v915 = vpop.f32.mrb[0].mxu0
  %v916 = vadd.f32 0.0, %v915
  %v917 = vpop.f32.mrb[0].mxu0
  %v918 = vpop.f32.mrb[0].mxu0
  %v919 = vadd.f32 0.0, %v918
  %v920 = vpop.f32.mrb[0].mxu0
  %921 = vdwg.mxu0
  %v938 = vunpack.c.l.b16 %v799
  %v939 = vunpack.c.l.b16 %v800
  %v940 = vunpack.c.l.b16 %v801
  %v941 = vunpack.c.l.b16 %v802
  %v942 = vunpack.c.l.b16 %v803
  %v943 = vunpack.c.l.b16 %v804
  %v944 = vunpack.c.l.b16 %v805
  %v945 = vunpack.c.l.b16 %v806
  %v946 = vunpack.c.l.b16 %v807
  %v947 = vunpack.c.l.b16 %v808
  %v948 = vunpack.c.l.b16 %v809
  %v949 = vunpack.c.l.b16 %v810
  %v950 = vunpack.c.l.b16 %v811
  %v951 = vunpack.c.l.b16 %v812
  %v952 = vunpack.c.l.b16 %v813
  %v953 = vunpack.c.l.b16 %v814
  %v954 = vpack.c.b16 %v939, %v938
  %v955 = vpack.c.b16 %v941, %v940
  %v956 = vpack.c.b16 %v943, %v942
  %v957 = vpack.c.b16 %v945, %v944
  %v958 = vpack.c.b16 %v947, %v946
  %v959 = vpack.c.b16 %v949, %v948
  %v960 = vpack.c.b16 %v951, %v950
  %v961 = vpack.c.b16 %v953, %v952
  %970 = vmatprep.subr.bf16.mxu0 0
  %971 = vmatpush1.bf16.msra.mxu0 %v954
  %972 = vmatprep.subr.bf16.mxu0 0
  %973 = vmatpush1.bf16.msra.mxu0 %v955
  %974 = vmatprep.subr.bf16.mxu0 0
  %975 = vmatpush1.bf16.msra.mxu0 %v956
  %976 = vmatprep.subr.bf16.mxu0 0
  %977 = vmatpush1.bf16.msra.mxu0 %v957
  %978 = vmatprep.subr.bf16.mxu0 0
  %979 = vmatpush1.bf16.msra.mxu0 %v958
  %980 = vmatprep.subr.bf16.mxu0 0
  %981 = vmatpush1.bf16.msra.mxu0 %v959
  %982 = vmatprep.subr.bf16.mxu0 0
  %983 = vmatpush1.bf16.msra.mxu0 %v960
  %984 = vmatprep.subr.bf16.mxu0 0
  %985 = vmatpush1.bf16.msra.mxu0 %v961
  %986 = vmatprep.subr.bf16.mxu0 0
  %987 = vmatpush1.bf16.msra.mxu0 0
  %988 = vmatprep.subr.bf16.mxu0 0
  %989 = vmatpush1.bf16.msra.mxu0 0
  %990 = vmatprep.subr.bf16.mxu0 0
  %991 = vmatpush1.bf16.msra.mxu0 0
  %992 = vmatprep.subr.bf16.mxu0 0
  %993 = vmatpush1.bf16.msra.mxu0 0
  %994 = vmatprep.subr.bf16.mxu0 0
  %995 = vmatpush1.bf16.msra.mxu0 0
  %996 = vmatprep.subr.bf16.mxu0 0
  %997 = vmatpush1.bf16.msra.mxu0 0
  %998 = vmatprep.subr.bf16.mxu0 0
  %999 = vmatpush1.bf16.msra.mxu0 0
  %1000 = vmatprep.subr.bf16.mxu0 0
  %1001 = vmatpush1.bf16.msra.mxu0 0
  %1002 = vmatprep.mubr.bf16.mxu0 0
  %1003 = vmatmul.mubr.bf16.gmra.mrb[0].mxu0 %v815
  %v1004 = vpop.f32.mrb[0].mxu0
  %v1005 = vadd.f32 %v916, %v1004
  %v1006 = vpop.f32.mrb[0].mxu0
  %v1007 = vpop.f32.mrb[0].mxu0
  %v1008 = vadd.f32 %v919, %v1007
  %v1009 = vpop.f32.mrb[0].mxu0
  %1010 = vdwg.mxu0
  %s1011 = scalar_lea.vmem %s0, 512
  %v1012 = vld [vmem:[%s1011] sm:$0xf]
  %v1013 = vld [vmem:[%s1011 + $0x4] sm:$0xf]
  %v1014 = vld [vmem:[%s1011 + $0x8] sm:$0xf]
  %v1015 = vld [vmem:[%s1011 + $0xc] sm:$0xf]
  %v1016 = vld [vmem:[%s1011 + $0x10] sm:$0xf]
  %v1017 = vld [vmem:[%s1011 + $0x14] sm:$0xf]
  %v1018 = vld [vmem:[%s1011 + $0x18] sm:$0xf]
  %v1019 = vld [vmem:[%s1011 + $0x1c] sm:$0xf]
  %v1020 = vld [vmem:[%s1011 + $0x20] sm:$0xf]
  %v1021 = vld [vmem:[%s1011 + $0x24] sm:$0xf]
  %v1022 = vld [vmem:[%s1011 + $0x28] sm:$0xf]
  %v1023 = vld [vmem:[%s1011 + $0x2c] sm:$0xf]
  %v1024 = vld [vmem:[%s1011 + $0x30] sm:$0xf]
  %v1025 = vld [vmem:[%s1011 + $0x34] sm:$0xf]
  %v1026 = vld [vmem:[%s1011 + $0x38] sm:$0xf]
  %v1027 = vld [vmem:[%s1011 + $0x3c] sm:$0xf]
  %v1028 = vpack.c.bf16 %v755, %v752
  %v1029 = vpack.c.bf16 %v763, %v760
  %v1030 = vpack.c.bf16 %v771, %v768
  %v1047 = vunpack.c.l.b16 %v1012
  %v1048 = vunpack.c.l.b16 %v1013
  %v1049 = vunpack.c.l.b16 %v1014
  %v1050 = vunpack.c.l.b16 %v1015
  %v1051 = vunpack.c.l.b16 %v1016
  %v1052 = vunpack.c.l.b16 %v1017
  %v1053 = vunpack.c.l.b16 %v1018
  %v1054 = vunpack.c.l.b16 %v1019
  %v1055 = vunpack.c.l.b16 %v1020
  %v1056 = vunpack.c.l.b16 %v1021
  %v1057 = vunpack.c.l.b16 %v1022
  %v1058 = vunpack.c.l.b16 %v1023
  %v1059 = vunpack.c.l.b16 %v1024
  %v1060 = vunpack.c.l.b16 %v1025
  %v1061 = vunpack.c.l.b16 %v1026
  %v1062 = vunpack.c.l.b16 %v1027
  %v1063 = vpack.c.b16 %v1048, %v1047
  %v1064 = vpack.c.b16 %v1050, %v1049
  %v1065 = vpack.c.b16 %v1052, %v1051
  %v1066 = vpack.c.b16 %v1054, %v1053
  %v1067 = vpack.c.b16 %v1056, %v1055
  %v1068 = vpack.c.b16 %v1058, %v1057
  %v1069 = vpack.c.b16 %v1060, %v1059
  %v1070 = vpack.c.b16 %v1062, %v1061
  %1079 = vmatprep.subr.bf16.mxu0 0
  %1080 = vmatpush1.bf16.msra.mxu0 %v1063
  %1081 = vmatprep.subr.bf16.mxu0 0
  %1082 = vmatpush1.bf16.msra.mxu0 %v1064
  %1083 = vmatprep.subr.bf16.mxu0 0
  %1084 = vmatpush1.bf16.msra.mxu0 %v1065
  %1085 = vmatprep.subr.bf16.mxu0 0
  %1086 = vmatpush1.bf16.msra.mxu0 %v1066
  %1087 = vmatprep.subr.bf16.mxu0 0
  %1088 = vmatpush1.bf16.msra.mxu0 %v1067
  %1089 = vmatprep.subr.bf16.mxu0 0
  %1090 = vmatpush1.bf16.msra.mxu0 %v1068
  %1091 = vmatprep.subr.bf16.mxu0 0
  %1092 = vmatpush1.bf16.msra.mxu0 %v1069
  %1093 = vmatprep.subr.bf16.mxu0 0
  %1094 = vmatpush1.bf16.msra.mxu0 %v1070
  %1095 = vmatprep.subr.bf16.mxu0 0
  %1096 = vmatpush1.bf16.msra.mxu0 0
  %1097 = vmatprep.subr.bf16.mxu0 0
  %1098 = vmatpush1.bf16.msra.mxu0 0
  %1099 = vmatprep.subr.bf16.mxu0 0
  %1100 = vmatpush1.bf16.msra.mxu0 0
  %1101 = vmatprep.subr.bf16.mxu0 0
  %1102 = vmatpush1.bf16.msra.mxu0 0
  %1103 = vmatprep.subr.bf16.mxu0 0
  %1104 = vmatpush1.bf16.msra.mxu0 0
  %1105 = vmatprep.subr.bf16.mxu0 0
  %1106 = vmatpush1.bf16.msra.mxu0 0
  %1107 = vmatprep.subr.bf16.mxu0 0
  %1108 = vmatpush1.bf16.msra.mxu0 0
  %1109 = vmatprep.subr.bf16.mxu0 0
  %1110 = vmatpush1.bf16.msra.mxu0 0
  %1111 = vmatprep.mubr.bf16.mxu0 0
  %1112 = vmatmul.mubr.bf16.gmra.mrb[0].mxu0 %v1028
  %v1113 = vpop.f32.mrb[0].mxu0
  %v1114 = vadd.f32 0.0, %v1113
  %v1115 = vpop.f32.mrb[0].mxu0
  %v1116 = vpop.f32.mrb[0].mxu0
  %v1117 = vadd.f32 0.0, %v1116
  %v1118 = vpop.f32.mrb[0].mxu0
  %1119 = vmatprep.mubr.bf16.mxu0 0
  %1120 = vmatmul.mubr.bf16.gmra.mrb[0].mxu0 %v1029
  %v1121 = vpop.f32.mrb[0].mxu0
  %v1122 = vadd.f32 0.0, %v1121
  %v1123 = vpop.f32.mrb[0].mxu0
  %v1124 = vpop.f32.mrb[0].mxu0
  %v1125 = vadd.f32 0.0, %v1124
  %v1126 = vpop.f32.mrb[0].mxu0
  %1127 = vmatprep.mubr.bf16.mxu0 0
  %1128 = vmatmul.mubr.bf16.gmra.mrb[0].mxu0 %v1030
  %v1129 = vpop.f32.mrb[0].mxu0
  %v1130 = vadd.f32 0.0, %v1129
  %v1131 = vpop.f32.mrb[0].mxu0
  %v1132 = vpop.f32.mrb[0].mxu0
  %v1133 = vadd.f32 0.0, %v1132
  %v1134 = vpop.f32.mrb[0].mxu0
  %1135 = vdwg.mxu0
  %s1136 = scalar_lea.vmem %s0, 576
  %v1137 = vld [vmem:[%s1136] sm:$0xf]
  %v1138 = vld [vmem:[%s1136 + $0x4] sm:$0xf]
  %v1139 = vld [vmem:[%s1136 + $0x8] sm:$0xf]
  %v1140 = vld [vmem:[%s1136 + $0xc] sm:$0xf]
  %v1141 = vld [vmem:[%s1136 + $0x10] sm:$0xf]
  %v1142 = vld [vmem:[%s1136 + $0x14] sm:$0xf]
  %v1143 = vld [vmem:[%s1136 + $0x18] sm:$0xf]
  %v1144 = vld [vmem:[%s1136 + $0x1c] sm:$0xf]
  %v1145 = vld [vmem:[%s1136 + $0x20] sm:$0xf]
  %v1146 = vld [vmem:[%s1136 + $0x24] sm:$0xf]
  %v1147 = vld [vmem:[%s1136 + $0x28] sm:$0xf]
  %v1148 = vld [vmem:[%s1136 + $0x2c] sm:$0xf]
  %v1149 = vld [vmem:[%s1136 + $0x30] sm:$0xf]
  %v1150 = vld [vmem:[%s1136 + $0x34] sm:$0xf]
  %v1151 = vld [vmem:[%s1136 + $0x38] sm:$0xf]
  %v1152 = vld [vmem:[%s1136 + $0x3c] sm:$0xf]
  %v1153 = vpack.c.bf16 %v1008, %v1005
  %v1155 = vlaneseq
  %v1156 = vshrl.u32 %v1155, 7
  %v1157 = vsub.s32 0, %v1156
  %v1158 = vrot.slane %v651, %v1157
  %v1176 = vunpack.c.l.b16 %v1137
  %v1177 = vunpack.c.l.b16 %v1138
  %v1178 = vunpack.c.l.b16 %v1139
  %v1179 = vunpack.c.l.b16 %v1140
  %v1180 = vunpack.c.l.b16 %v1141
  %v1181 = vunpack.c.l.b16 %v1142
  %v1182 = vunpack.c.l.b16 %v1143
  %v1183 = vunpack.c.l.b16 %v1144
  %v1184 = vunpack.c.l.b16 %v1145
  %v1185 = vunpack.c.l.b16 %v1146
  %v1186 = vunpack.c.l.b16 %v1147
  %v1187 = vunpack.c.l.b16 %v1148
  %v1188 = vunpack.c.l.b16 %v1149
  %v1189 = vunpack.c.l.b16 %v1150
  %v1190 = vunpack.c.l.b16 %v1151
  %v1191 = vunpack.c.l.b16 %v1152
  %v1192 = vpack.c.b16 %v1177, %v1176
  %v1193 = vpack.c.b16 %v1179, %v1178
  %v1194 = vpack.c.b16 %v1181, %v1180
  %v1195 = vpack.c.b16 %v1183, %v1182
  %v1196 = vpack.c.b16 %v1185, %v1184
  %v1197 = vpack.c.b16 %v1187, %v1186
  %v1198 = vpack.c.b16 %v1189, %v1188
  %v1199 = vpack.c.b16 %v1191, %v1190
  %1208 = vmatprep.subr.bf16.mxu0 0
  %1209 = vmatpush1.bf16.msra.mxu0 %v1192
  %1210 = vmatprep.subr.bf16.mxu0 0
  %1211 = vmatpush1.bf16.msra.mxu0 %v1193
  %1212 = vmatprep.subr.bf16.mxu0 0
  %1213 = vmatpush1.bf16.msra.mxu0 %v1194
  %1214 = vmatprep.subr.bf16.mxu0 0
  %1215 = vmatpush1.bf16.msra.mxu0 %v1195
  %1216 = vmatprep.subr.bf16.mxu0 0
  %1217 = vmatpush1.bf16.msra.mxu0 %v1196
  %1218 = vmatprep.subr.bf16.mxu0 0
  %1219 = vmatpush1.bf16.msra.mxu0 %v1197
  %1220 = vmatprep.subr.bf16.mxu0 0
  %1221 = vmatpush1.bf16.msra.mxu0 %v1198
  %1222 = vmatprep.subr.bf16.mxu0 0
  %1223 = vmatpush1.bf16.msra.mxu0 %v1199
  %1224 = vmatprep.subr.bf16.mxu0 0
  %1225 = vmatpush1.bf16.msra.mxu0 0
  %1226 = vmatprep.subr.bf16.mxu0 0
  %1227 = vmatpush1.bf16.msra.mxu0 0
  %1228 = vmatprep.subr.bf16.mxu0 0
  %1229 = vmatpush1.bf16.msra.mxu0 0
  %1230 = vmatprep.subr.bf16.mxu0 0
  %1231 = vmatpush1.bf16.msra.mxu0 0
  %1232 = vmatprep.subr.bf16.mxu0 0
  %1233 = vmatpush1.bf16.msra.mxu0 0
  %1234 = vmatprep.subr.bf16.mxu0 0
  %1235 = vmatpush1.bf16.msra.mxu0 0
  %1236 = vmatprep.subr.bf16.mxu0 0
  %1237 = vmatpush1.bf16.msra.mxu0 0
  %1238 = vmatprep.subr.bf16.mxu0 0
  %1239 = vmatpush1.bf16.msra.mxu0 0
  %1240 = vmatprep.mubr.bf16.mxu0 0
  %1241 = vmatmul.mubr.bf16.gmra.mrb[0].mxu0 %v1153
  %v1242 = vpop.f32.mrb[0].mxu0
  %v1243 = vadd.f32 %v1158, %v1242
  %v1244 = vpop.f32.mrb[0].mxu0
  %v1245 = vpop.f32.mrb[0].mxu0
  %v1246 = vadd.f32 %v1158, %v1245
  %v1247 = vpop.f32.mrb[0].mxu0
  %1248 = vdwg.mxu0
  %v1249 = vxor.u32 %v1243, 2147483648
  %v1250 = vxor.u32 %v1246, 2147483648
  %v1251 = vmul.f32 %v1249, 1.442695
  %v1252 = vpow.pop %v1251
  %v1253 = vmul.f32 %v1250, 1.442695
  %v1254 = vpow.pop %v1253
  %v1255 = vadd.f32 %v1252, 1.0
  %v1256 = vadd.f32 %v1254, 1.0
  %v1257 = vrcp.pop %v1255
  %v1258 = vmul.f32 1.0, %v1257
  %v1259 = vrcp.pop %v1256
  %v1260 = vmul.f32 1.0, %v1259
  %v1261 = vmul.f32 %v1114, %v1258
  %v1262 = vmul.f32 %v1117, %v1260
  %v1263 = vmul.f32 %v1122, %v1258
  %v1264 = vmul.f32 %v1125, %v1260
  %v1265 = vmul.f32 %v1130, %v1258
  %v1266 = vmul.f32 %v1133, %v1260
  %v1267 = vpack.c.bf16 %v645, %v644
  %v1268 = vpack.c.bf16 %v647, %v646
  %v1269 = vpack.c.bf16 %v649, %v648
  %v1274 = vunpack.c.l.b16 %v536
  %v1275 = vunpack.c.l.b16 %v1267
  %v1276 = vunpack.c.l.b16 %v1268
  %v1277 = vunpack.c.l.b16 %v1269
  %v1278 = vunpack.c.h.b16 %v536
  %v1279 = vunpack.c.h.b16 %v1267
  %v1280 = vunpack.c.h.b16 %v1268
  %v1281 = vunpack.c.h.b16 %v1269
  %v1282 = vpack.c.b16 %v1275, %v1274
  %v1283 = vpack.c.b16 %v1277, %v1276
  %v1284 = vpack.c.b16 %v1279, %v1278
  %v1285 = vpack.c.b16 %v1281, %v1280
  %1290 = vst [vmem:[%s4] sm:$0xff] %v1282
  %1291 = vst [vmem:[%s4 + $0x8] sm:$0xff] %v1283
  %1292 = vst [vmem:[%s4 + $0x10] sm:$0xff] %v1284
  %1293 = vst [vmem:[%s4 + $0x18] sm:$0xff] %v1285
  %1294 = vst [vmem:[%s5] sm:$0xff] %v1005
  %1295 = vst [vmem:[%s5 + $0x8] sm:$0xff] %v1008
  %1296 = vst [vmem:[%s6] sm:$0xff] %v1261
  %1297 = vst [vmem:[%s6 + $0x8] sm:$0xff] %v1262
  %s1298 = scalar_lea.vmem %s6, 16
  %1299 = vst [vmem:[%s1298] sm:$0xff] %v1263
  %1300 = vst [vmem:[%s1298 + $0x8] sm:$0xff] %v1264
  %s1301 = scalar_lea.vmem %s6, 32
  %1302 = vst [vmem:[%s1301] sm:$0xff] %v1265
  %1303 = vst [vmem:[%s1301 + $0x8] sm:$0xff] %v1266
  // Predicated region
  $region18: #{block_forward.3} parent=0 // pred_check
    _
  $region19: #{block_forward.3} parent=0 // pred_check_branch
    %1305 = sbr.rel (0) target = $region21
  $region20: #{block_forward.3} parent=0 // pred_region
    _
  $region21: #{block_forward.3} parent=0 // pred_fallthru
    _
  // Predicated region
  $region22: #{block_forward.3} parent=0 // pred_check
    _
  $region23: #{block_forward.3} parent=0 // pred_check_branch
    %1307 = sbr.rel (0) target = $region25
  $region24: #{block_forward.3} parent=0 // pred_region
    _
  $region25: #{block_forward.3} parent=0 // pred_fallthru
    _
  // Predicated region
  $region26: #{block_forward.3} parent=0 // pred_check
    _
  $region27: #{block_forward.3} parent=0 // pred_check_branch
    %1309 = sbr.rel (0) target = $region29
  $region28: #{block_forward.3} parent=0 // pred_region
    _
  $region29: #{block_forward.3} parent=0 // pred_fallthru
    _
  // Predicated region
  $region30: #{block_forward.3} parent=0 // pred_check
    _
  $region31: #{block_forward.3} parent=0 // pred_check_branch
    %1311 = sbr.rel (0) target = $region33
  $region32: #{block_forward.3} parent=0 // pred_region
    _
  $region33: #{block_forward.3} parent=0 // pred_fallthru
    _
  // Predicated region
  $region34: #{block_forward.3} parent=0 // pred_check
    _
  $region35: #{block_forward.3} parent=0 // pred_check_branch
    %1313 = sbr.rel (0) target = $region37
  $region36: #{block_forward.3} parent=0 // pred_region
    _
  $region37: #{block_forward.3} parent=0 // pred_fallthru
    _
  // Predicated region
  $region38: #{block_forward.3} parent=0 // pred_check
    _
  $region39: #{block_forward.3} parent=0 // pred_check_branch
    %1315 = sbr.rel (0) target = $region41
  $region40: #{block_forward.3} parent=0 // pred_region
    _
  $region41: #{block_forward.3} parent=0 // pred_fallthru
    _

// kernel: block_forward.5
$region0: #{block_forward.5}
  #allocation0 [shape = 'u32[]', space=smem, size = 0x4, offset = 0x4, fixed_abs, tag = 'smem constant byte address 0x4 - core index']
  #allocation1 [shape = 'u32[144,128]{1,0:T(1,128)}', space=vmem, size = 0x12000, scoped, tag = 'internal scratch']
  %s0 = inlined_call_operand.vmem [shape: bf16[6,128,128], index: 0, kind: input, shape index: {}]
  %s1 = inlined_call_operand.vmem [shape: f32[9,1,128], index: 1, kind: input, shape index: {}]
  %s2 = inlined_call_operand.vmem [shape: f32[16,128], index: 2, kind: input, shape index: {}]
  %s3 = inlined_call_operand.vmem [shape: f32[3,16,128], index: 3, kind: input, shape index: {}]
  %s4 = inlined_call_operand.vmem [shape: f32[16,512], index: 4, kind: input, shape index: {}]
  %s5 = inlined_call_operand.hbm [shape: f32[16,128], index: 5, kind: output, shape index: {0}]
  %s6 = inlined_call_operand.vmem [shape: f32[3,16,128], index: 6, kind: output, shape index: {1}]
  %7 = xla_tuple %s5, %s6
  %s8 = sld [smem:[#allocation0]]
  $region38: #{block_forward.5} parent=0
    _
  %s10 = ssub.s32 1, %s8
  %s11 = scalar_select 0, %s10, %s8
  $region1: #{block_forward.5} parent=0
    #allocation2 [shape = 'u8[8192]{0}', space=vmem, size = 0x2000, scoped, tag = 'output window, operand 0, single buffered']
    #allocation3 [shape = 's32[1]{0}', space=sflag, size = 0x4, scoped, tag = 'scoped memory for block_forward.5']
    %12 = vsyncpa [#allocation3], 0
    // Predicated region
    $region2: #{block_forward.5} parent=1 // pred_check
      _
    $region3: #{block_forward.5} parent=1 // pred_check_branch
      %14 = sbr.rel (0) target = $region5
    $region4: #{block_forward.5} parent=1 // pred_region
      _
    $region5: #{block_forward.5} parent=1 // pred_fallthru
      _
    // Predicated region
    $region6: #{block_forward.5} parent=1 // pred_check
      _
    $region7: #{block_forward.5} parent=1 // pred_check_branch
      %16 = sbr.rel (0) target = $region9
    $region8: #{block_forward.5} parent=1 // pred_region
      _
    $region9: #{block_forward.5} parent=1 // pred_fallthru
      _
    // Predicated region
    $region10: #{block_forward.5} parent=1 // pred_check
      _
    $region11: #{block_forward.5} parent=1 // pred_check_branch
      %18 = sbr.rel (0) target = $region13
    $region12: #{block_forward.5} parent=1 // pred_region
      _
    $region13: #{block_forward.5} parent=1 // pred_fallthru
      _
    // Predicated region
    $region14: #{block_forward.5} parent=1 // pred_check
      _
    $region15: #{block_forward.5} parent=1 // pred_check_branch
      %20 = sbr.rel (0) target = $region17
    $region16: #{block_forward.5} parent=1 // pred_region
      _
    $region17: #{block_forward.5} parent=1 // pred_fallthru
      _
    // Predicated region
    $region18: #{block_forward.5} parent=1 // pred_check
      _
    $region19: #{block_forward.5} parent=1 // pred_check_branch
      %22 = sbr.rel (0) target = $region21
    $region20: #{block_forward.5} parent=1 // pred_region
      _
    $region21: #{block_forward.5} parent=1 // pred_fallthru
      _
    %v24 = vlaneseq
    %v25 = vand.u32 %v24, 127
    %vm26 = vcmp.lt.s32.totalorder %v25, 32
    %v27 = vld [vmem:[%s2] sm:$0xff]
    %v28 = vld [vmem:[%s2 + $0x8] sm:$0xff]
    %v29 = vld [vmem:[%s4] sm:$0xff]
    %v30 = vld [vmem:[%s4 + $0x20] sm:$0xff]
    %v31 = vadd.f32 %v27, %v29
    %v32 = vadd.f32 %v28, %v30
    %v33 = vsel %vm26, %v31, 0.0
    %v34 = vsel %vm26, %v32, 0.0
    %vm35 = vcmp.lt.s32.totalorder %v25, 8
    %v36 = vld [vmem:[%s3] sm:$0xff]
    %v37 = vld [vmem:[%s3 + $0x8] sm:$0xff]
    %v38 = vld [vmem:[%s4 + $0x8] sm:$0xff]
    %v39 = vld [vmem:[%s4 + $0x28] sm:$0xff]
    %v40 = vadd.f32 %v36, %v38
    %v41 = vadd.f32 %v37, %v39
    %v42 = vsel %vm35, %v40, 0.0
    %v43 = vsel %vm35, %v41, 0.0
    %s44 = scalar_lea.vmem %s3, 16
    %v45 = vld [vmem:[%s44] sm:$0xff]
    %v46 = vld [vmem:[%s44 + $0x8] sm:$0xff]
    %v47 = vld [vmem:[%s4 + $0x10] sm:$0xff]
    %v48 = vld [vmem:[%s4 + $0x30] sm:$0xff]
    %v49 = vadd.f32 %v45, %v47
    %v50 = vadd.f32 %v46, %v48
    %v51 = vsel %vm35, %v49, 0.0
    %v52 = vsel %vm35, %v50, 0.0
    %s53 = scalar_lea.vmem %s3, 32
    %v54 = vld [vmem:[%s53] sm:$0xff]
    %v55 = vld [vmem:[%s53 + $0x8] sm:$0xff]
    %v56 = vld [vmem:[%s4 + $0x18] sm:$0xff]
    %v57 = vld [vmem:[%s4 + $0x38] sm:$0xff]
    %v58 = vadd.f32 %v54, %v56
    %v59 = vadd.f32 %v55, %v57
    %v60 = vsel %vm35, %v58, 0.0
    %v61 = vsel %vm35, %v59, 0.0
    %62 = vadd.xlane.f32.xlu0 %v33
    %v63 = vpop.xlane.xlu0 %62
    %64 = vadd.xlane.f32.xlu0 %v34
    %v65 = vpop.xlane.xlu0 %64
    %v66 = vrcp.pop 32.0
    %v67 = vmul.f32 %v63, %v66
    %v68 = vmul.f32 %v65, %v66
    %v69 = vsub.f32 %v33, %v67
    %v70 = vsub.f32 %v34, %v68
    %v71 = vsel %vm26, %v69, 0.0
    %v72 = vsel %vm26, %v70, 0.0
    %v73 = vmul.f32 %v71, %v71
    %v74 = vmul.f32 %v72, %v72
    %75 = vadd.xlane.f32.xlu0 %v73
    %v76 = vpop.xlane.xlu0 %75
    %77 = vadd.xlane.f32.xlu0 %v74
    %v78 = vpop.xlane.xlu0 %77
    %v79 = vmul.f32 %v76, %v66
    %v80 = vmul.f32 %v78, %v66
    %v81 = vadd.f32 %v79, 1e-05
    %v82 = vadd.f32 %v80, 1e-05
    %v83 = vrsqrt.pop %v81
    %v84 = vrsqrt.pop %v82
    %v85 = vmul.f32 %v71, %v83
    %v86 = vmul.f32 %v72, %v84
    %s87 = scalar_lea.vmem %s1, 1
    %v88 = vld [vmem:[%s87] sm:$0x1]
    %v90 = vlaneseq
    %v91 = vshrl.u32 %v90, 7
    %v92 = vsub.s32 0, %v91
    %v93 = vrot.slane %v88, %v92
    %v95 = vmul.f32 %v85, %v93
    %v96 = vmul.f32 %v86, %v93
    %s97 = scalar_lea.vmem %s1, 2
    %v98 = vld [vmem:[%s97] sm:$0x1]
    %v100 = vlaneseq
    %v101 = vshrl.u32 %v100, 7
    %v102 = vsub.s32 0, %v101
    %v103 = vrot.slane %v98, %v102
    %v105 = vadd.f32 %v95, %v103
    %v106 = vadd.f32 %v96, %v103
    %107 = vadd.xlane.f32.xlu0 %v42
    %v108 = vpop.xlane.xlu0 %107
    %109 = vadd.xlane.f32.xlu0 %v43
    %v110 = vpop.xlane.xlu0 %109
    %111 = vadd.xlane.f32.xlu0 %v51
    %v112 = vpop.xlane.xlu0 %111
    %113 = vadd.xlane.f32.xlu0 %v52
    %v114 = vpop.xlane.xlu0 %113
    %v115 = vadd.f32 %v108, %v112
    %v116 = vadd.f32 %v110, %v114
    %117 = vadd.xlane.f32.xlu0 %v60
    %v118 = vpop.xlane.xlu0 %117
    %119 = vadd.xlane.f32.xlu0 %v61
    %v120 = vpop.xlane.xlu0 %119
    %v121 = vadd.f32 %v115, %v118
    %v122 = vadd.f32 %v116, %v120
    %v123 = vrcp.pop 24.0
    %v124 = vmul.f32 %v121, %v123
    %v125 = vmul.f32 %v122, %v123
    %v126 = vsub.f32 %v42, %v124
    %v127 = vsub.f32 %v43, %v125
    %v128 = vsel %vm35, %v126, 0.0
    %v129 = vsel %vm35, %v127, 0.0
    %v130 = vsub.f32 %v51, %v124
    %v131 = vsub.f32 %v52, %v125
    %v132 = vsel %vm35, %v130, 0.0
    %v133 = vsel %vm35, %v131, 0.0
    %v134 = vsub.f32 %v60, %v124
    %v135 = vsub.f32 %v61, %v125
    %v136 = vsel %vm35, %v134, 0.0
    %v137 = vsel %vm35, %v135, 0.0
    %v138 = vmul.f32 %v128, %v128
    %v139 = vmul.f32 %v129, %v129
    %140 = vadd.xlane.f32.xlu0 %v138
    %v141 = vpop.xlane.xlu0 %140
    %142 = vadd.xlane.f32.xlu0 %v139
    %v143 = vpop.xlane.xlu0 %142
    %v144 = vmul.f32 %v132, %v132
    %v145 = vmul.f32 %v133, %v133
    %146 = vadd.xlane.f32.xlu0 %v144
    %v147 = vpop.xlane.xlu0 %146
    %148 = vadd.xlane.f32.xlu0 %v145
    %v149 = vpop.xlane.xlu0 %148
    %v150 = vadd.f32 %v141, %v147
    %v151 = vadd.f32 %v143, %v149
    %v152 = vmul.f32 %v136, %v136
    %v153 = vmul.f32 %v137, %v137
    %154 = vadd.xlane.f32.xlu0 %v152
    %v155 = vpop.xlane.xlu0 %154
    %156 = vadd.xlane.f32.xlu0 %v153
    %v157 = vpop.xlane.xlu0 %156
    %v158 = vadd.f32 %v150, %v155
    %v159 = vadd.f32 %v151, %v157
    %v160 = vmul.f32 %v158, %v123
    %v161 = vmul.f32 %v159, %v123
    %v162 = vadd.f32 %v160, 1e-05
    %v163 = vadd.f32 %v161, 1e-05
    %v164 = vrsqrt.pop %v162
    %v165 = vrsqrt.pop %v163
    %v166 = vmul.f32 %v128, %v164
    %v167 = vmul.f32 %v129, %v165
    %s168 = scalar_lea.vmem %s1, 3
    %v169 = vld [vmem:[%s168] sm:$0x1]
    %v171 = vlaneseq
    %v172 = vshrl.u32 %v171, 7
    %v173 = vsub.s32 0, %v172
    %v174 = vrot.slane %v169, %v173
    %v176 = vmul.f32 %v166, %v174
    %v177 = vmul.f32 %v167, %v174
    %s178 = scalar_lea.vmem %s1, 6
    %v179 = vld [vmem:[%s178] sm:$0x1]
    %v181 = vlaneseq
    %v182 = vshrl.u32 %v181, 7
    %v183 = vsub.s32 0, %v182
    %v184 = vrot.slane %v179, %v183
    %v186 = vadd.f32 %v176, %v184
    %v187 = vadd.f32 %v177, %v184
    %v188 = vmul.f32 %v132, %v164
    %v189 = vmul.f32 %v133, %v165
    %s190 = scalar_lea.vmem %s1, 4
    %v191 = vld [vmem:[%s190] sm:$0x1]
    %v193 = vlaneseq
    %v194 = vshrl.u32 %v193, 7
    %v195 = vsub.s32 0, %v194
    %v196 = vrot.slane %v191, %v195
    %v198 = vmul.f32 %v188, %v196
    %v199 = vmul.f32 %v189, %v196
    %s200 = scalar_lea.vmem %s1, 7
    %v201 = vld [vmem:[%s200] sm:$0x1]
    %v203 = vlaneseq
    %v204 = vshrl.u32 %v203, 7
    %v205 = vsub.s32 0, %v204
    %v206 = vrot.slane %v201, %v205
    %v208 = vadd.f32 %v198, %v206
    %v209 = vadd.f32 %v199, %v206
    %v210 = vmul.f32 %v136, %v164
    %v211 = vmul.f32 %v137, %v165
    %s212 = scalar_lea.vmem %s1, 5
    %v213 = vld [vmem:[%s212] sm:$0x1]
    %v215 = vlaneseq
    %v216 = vshrl.u32 %v215, 7
    %v217 = vsub.s32 0, %v216
    %v218 = vrot.slane %v213, %v217
    %v220 = vmul.f32 %v210, %v218
    %v221 = vmul.f32 %v211, %v218
    %s222 = scalar_lea.vmem %s1, 8
    %v223 = vld [vmem:[%s222] sm:$0x1]
    %v225 = vlaneseq
    %v226 = vshrl.u32 %v225, 7
    %v227 = vsub.s32 0, %v226
    %v228 = vrot.slane %v223, %v227
    %v230 = vadd.f32 %v220, %v228
    %v231 = vadd.f32 %v221, %v228
    %vm232 = vcmp.ge.f32.partialorder %v105, 0.0
    %vm233 = vcmp.ge.f32.partialorder %v106, 0.0
    %v234 = vmul.f32 %v105, 0.01
    %v235 = vmul.f32 %v106, 0.01
    %v236 = vsel %vm232, %v105, %v234
    %v237 = vsel %vm233, %v106, %v235
    %v238 = vld [vmem:[%s0] sm:$0xf]
    %v239 = vld [vmem:[%s0 + $0x4] sm:$0xf]
    %v240 = vld [vmem:[%s0 + $0x8] sm:$0xf]
    %v241 = vld [vmem:[%s0 + $0xc] sm:$0xf]
    %v242 = vld [vmem:[%s0 + $0x10] sm:$0xf]
    %v243 = vld [vmem:[%s0 + $0x14] sm:$0xf]
    %v244 = vld [vmem:[%s0 + $0x18] sm:$0xf]
    %v245 = vld [vmem:[%s0 + $0x1c] sm:$0xf]
    %v246 = vld [vmem:[%s0 + $0x20] sm:$0xf]
    %v247 = vld [vmem:[%s0 + $0x24] sm:$0xf]
    %v248 = vld [vmem:[%s0 + $0x28] sm:$0xf]
    %v249 = vld [vmem:[%s0 + $0x2c] sm:$0xf]
    %v250 = vld [vmem:[%s0 + $0x30] sm:$0xf]
    %v251 = vld [vmem:[%s0 + $0x34] sm:$0xf]
    %v252 = vld [vmem:[%s0 + $0x38] sm:$0xf]
    %v253 = vld [vmem:[%s0 + $0x3c] sm:$0xf]
    %v254 = vpack.c.bf16 %v187, %v186
    %v255 = vpack.c.bf16 %v209, %v208
    %v256 = vpack.c.bf16 %v231, %v230
    %v273 = vunpack.c.l.b16 %v238
    %v274 = vunpack.c.l.b16 %v239
    %v275 = vunpack.c.l.b16 %v240
    %v276 = vunpack.c.l.b16 %v241
    %v277 = vunpack.c.l.b16 %v242
    %v278 = vunpack.c.l.b16 %v243
    %v279 = vunpack.c.l.b16 %v244
    %v280 = vunpack.c.l.b16 %v245
    %v281 = vunpack.c.l.b16 %v246
    %v282 = vunpack.c.l.b16 %v247
    %v283 = vunpack.c.l.b16 %v248
    %v284 = vunpack.c.l.b16 %v249
    %v285 = vunpack.c.l.b16 %v250
    %v286 = vunpack.c.l.b16 %v251
    %v287 = vunpack.c.l.b16 %v252
    %v288 = vunpack.c.l.b16 %v253
    %v289 = vpack.c.b16 %v274, %v273
    %v290 = vpack.c.b16 %v276, %v275
    %v291 = vpack.c.b16 %v278, %v277
    %v292 = vpack.c.b16 %v280, %v279
    %v293 = vpack.c.b16 %v282, %v281
    %v294 = vpack.c.b16 %v284, %v283
    %v295 = vpack.c.b16 %v286, %v285
    %v296 = vpack.c.b16 %v288, %v287
    %305 = vmatprep.subr.bf16.mxu0 0
    %306 = vmatpush1.bf16.msra.mxu0 %v289
    %307 = vmatprep.subr.bf16.mxu0 0
    %308 = vmatpush1.bf16.msra.mxu0 %v290
    %309 = vmatprep.subr.bf16.mxu0 0
    %310 = vmatpush1.bf16.msra.mxu0 %v291
    %311 = vmatprep.subr.bf16.mxu0 0
    %312 = vmatpush1.bf16.msra.mxu0 %v292
    %313 = vmatprep.subr.bf16.mxu0 0
    %314 = vmatpush1.bf16.msra.mxu0 %v293
    %315 = vmatprep.subr.bf16.mxu0 0
    %316 = vmatpush1.bf16.msra.mxu0 %v294
    %317 = vmatprep.subr.bf16.mxu0 0
    %318 = vmatpush1.bf16.msra.mxu0 %v295
    %319 = vmatprep.subr.bf16.mxu0 0
    %320 = vmatpush1.bf16.msra.mxu0 %v296
    %321 = vmatprep.subr.bf16.mxu0 0
    %322 = vmatpush1.bf16.msra.mxu0 0
    %323 = vmatprep.subr.bf16.mxu0 0
    %324 = vmatpush1.bf16.msra.mxu0 0
    %325 = vmatprep.subr.bf16.mxu0 0
    %326 = vmatpush1.bf16.msra.mxu0 0
    %327 = vmatprep.subr.bf16.mxu0 0
    %328 = vmatpush1.bf16.msra.mxu0 0
    %329 = vmatprep.subr.bf16.mxu0 0
    %330 = vmatpush1.bf16.msra.mxu0 0
    %331 = vmatprep.subr.bf16.mxu0 0
    %332 = vmatpush1.bf16.msra.mxu0 0
    %333 = vmatprep.subr.bf16.mxu0 0
    %334 = vmatpush1.bf16.msra.mxu0 0
    %335 = vmatprep.subr.bf16.mxu0 0
    %336 = vmatpush1.bf16.msra.mxu0 0
    %337 = vmatprep.mubr.bf16.mxu0 0
    %338 = vmatmul.mubr.bf16.gmra.mrb[0].mxu0 %v254
    %v339 = vpop.f32.mrb[0].mxu0
    %v340 = vadd.f32 0.0, %v339
    %v341 = vpop.f32.mrb[0].mxu0
    %v342 = vpop.f32.mrb[0].mxu0
    %v343 = vadd.f32 0.0, %v342
    %v344 = vpop.f32.mrb[0].mxu0
    %345 = vmatprep.mubr.bf16.mxu0 0
    %346 = vmatmul.mubr.bf16.gmra.mrb[0].mxu0 %v255
    %v347 = vpop.f32.mrb[0].mxu0
    %v348 = vadd.f32 0.0, %v347
    %v349 = vpop.f32.mrb[0].mxu0
    %v350 = vpop.f32.mrb[0].mxu0
    %v351 = vadd.f32 0.0, %v350
    %v352 = vpop.f32.mrb[0].mxu0
    %353 = vmatprep.mubr.bf16.mxu0 0
    %354 = vmatmul.mubr.bf16.gmra.mrb[0].mxu0 %v256
    %v355 = vpop.f32.mrb[0].mxu0
    %v356 = vadd.f32 0.0, %v355
    %v357 = vpop.f32.mrb[0].mxu0
    %v358 = vpop.f32.mrb[0].mxu0
    %v359 = vadd.f32 0.0, %v358
    %v360 = vpop.f32.mrb[0].mxu0
    %361 = vdwg.mxu0
    %v362 = vmul.f32 %v186, %v340
    %v363 = vmul.f32 %v187, %v343
    %v364 = vmul.f32 %v208, %v348
    %v365 = vmul.f32 %v209, %v351
    %v366 = vadd.f32 %v362, %v364
    %v367 = vadd.f32 %v363, %v365
    %v368 = vmul.f32 %v230, %v356
    %v369 = vmul.f32 %v231, %v359
    %v370 = vadd.f32 %v366, %v368
    %v371 = vadd.f32 %v367, %v369
    %v372 = vmul.f32 %v340, %v340
    %v373 = vmul.f32 %v343, %v343
    %v374 = vmul.f32 %v348, %v348
    %v375 = vmul.f32 %v351, %v351
    %v376 = vadd.f32 %v372, %v374
    %v377 = vadd.f32 %v373, %v375
    %v378 = vmul.f32 %v356, %v356
    %v379 = vmul.f32 %v359, %v359
    %v380 = vadd.f32 %v376, %v378
    %v381 = vadd.f32 %v377, %v379
    %vm382 = vcmp.ge.f32.partialorder %v370, 0.0
    %vm383 = vcmp.ge.f32.partialorder %v371, 0.0
    %v384 = vadd.f32 %v380, 1e-06
    %v385 = vadd.f32 %v381, 1e-06
    %v386 = vrcp.pop %v384
    %v387 = vmul.f32 %v370, %v386
    %v388 = vrcp.pop %v385
    %v389 = vmul.f32 %v371, %v388
    %v390 = vsel %vm382, 0.0, %v387
    %v391 = vsel %vm383, 0.0, %v389
    %v392 = vmul.f32 %v390, %v340
    %v393 = vmul.f32 %v391, %v343
    %v394 = vsub.f32 %v186, %v392
    %v395 = vsub.f32 %v187, %v393
    %v396 = vmul.f32 %v390, %v348
    %v397 = vmul.f32 %v391, %v351
    %v398 = vsub.f32 %v208, %v396
    %v399 = vsub.f32 %v209, %v397
    %v400 = vmul.f32 %v390, %v356
    %v401 = vmul.f32 %v391, %v359
    %v402 = vsub.f32 %v230, %v400
    %v403 = vsub.f32 %v231, %v401
    %v404 = vmul.f32 %v186, 0.01
    %v405 = vmul.f32 %v187, 0.01
    %v406 = vmul.f32 %v208, 0.01
    %v407 = vmul.f32 %v209, 0.01
    %v408 = vmul.f32 %v230, 0.01
    %v409 = vmul.f32 %v231, 0.01
    %v410 = vmul.f32 %v394, 0.99
    %v411 = vmul.f32 %v395, 0.99
    %v412 = vmul.f32 %v398, 0.99
    %v413 = vmul.f32 %v399, 0.99
    %v414 = vmul.f32 %v402, 0.99
    %v415 = vmul.f32 %v403, 0.99
    %v416 = vadd.f32 %v404, %v410
    %v417 = vadd.f32 %v405, %v411
    %v418 = vadd.f32 %v406, %v412
    %v419 = vadd.f32 %v407, %v413
    %v420 = vadd.f32 %v408, %v414
    %v421 = vadd.f32 %v409, %v415
    %v422 = vld [vmem:[%s1] sm:$0x1]
    %s423 = scalar_lea.vmem %s0, 64
    %v424 = vld [vmem:[%s423] sm:$0xf]
    %v425 = vld [vmem:[%s423 + $0x4] sm:$0xf]
    %v426 = vld [vmem:[%s423 + $0x8] sm:$0xf]
    %v427 = vld [vmem:[%s423 + $0xc] sm:$0xf]
    %v428 = vld [vmem:[%s423 + $0x10] sm:$0xf]
    %v429 = vld [vmem:[%s423 + $0x14] sm:$0xf]
    %v430 = vld [vmem:[%s423 + $0x18] sm:$0xf]
    %v431 = vld [vmem:[%s423 + $0x1c] sm:$0xf]
    %v432 = vld [vmem:[%s423 + $0x20] sm:$0xf]
    %v433 = vld [vmem:[%s423 + $0x24] sm:$0xf]
    %v434 = vld [vmem:[%s423 + $0x28] sm:$0xf]
    %v435 = vld [vmem:[%s423 + $0x2c] sm:$0xf]
    %v436 = vld [vmem:[%s423 + $0x30] sm:$0xf]
    %v437 = vld [vmem:[%s423 + $0x34] sm:$0xf]
    %v438 = vld [vmem:[%s423 + $0x38] sm:$0xf]
    %v439 = vld [vmem:[%s423 + $0x3c] sm:$0xf]
    %v440 = vpack.c.bf16 %v417, %v416
    %v441 = vpack.c.bf16 %v419, %v418
    %v442 = vpack.c.bf16 %v421, %v420
    %v459 = vunpack.c.l.b16 %v424
    %v460 = vunpack.c.l.b16 %v425
    %v461 = vunpack.c.l.b16 %v426
    %v462 = vunpack.c.l.b16 %v427
    %v463 = vunpack.c.l.b16 %v428
    %v464 = vunpack.c.l.b16 %v429
    %v465 = vunpack.c.l.b16 %v430
    %v466 = vunpack.c.l.b16 %v431
    %v467 = vunpack.c.l.b16 %v432
    %v468 = vunpack.c.l.b16 %v433
    %v469 = vunpack.c.l.b16 %v434
    %v470 = vunpack.c.l.b16 %v435
    %v471 = vunpack.c.l.b16 %v436
    %v472 = vunpack.c.l.b16 %v437
    %v473 = vunpack.c.l.b16 %v438
    %v474 = vunpack.c.l.b16 %v439
    %v475 = vpack.c.b16 %v460, %v459
    %v476 = vpack.c.b16 %v462, %v461
    %v477 = vpack.c.b16 %v464, %v463
    %v478 = vpack.c.b16 %v466, %v465
    %v479 = vpack.c.b16 %v468, %v467
    %v480 = vpack.c.b16 %v470, %v469
    %v481 = vpack.c.b16 %v472, %v471
    %v482 = vpack.c.b16 %v474, %v473
    %491 = vmatprep.subr.bf16.mxu0 0
    %492 = vmatpush1.bf16.msra.mxu0 %v475
    %493 = vmatprep.subr.bf16.mxu0 0
    %494 = vmatpush1.bf16.msra.mxu0 %v476
    %495 = vmatprep.subr.bf16.mxu0 0
    %496 = vmatpush1.bf16.msra.mxu0 %v477
    %497 = vmatprep.subr.bf16.mxu0 0
    %498 = vmatpush1.bf16.msra.mxu0 %v478
    %499 = vmatprep.subr.bf16.mxu0 0
    %500 = vmatpush1.bf16.msra.mxu0 %v479
    %501 = vmatprep.subr.bf16.mxu0 0
    %502 = vmatpush1.bf16.msra.mxu0 %v480
    %503 = vmatprep.subr.bf16.mxu0 0
    %504 = vmatpush1.bf16.msra.mxu0 %v481
    %505 = vmatprep.subr.bf16.mxu0 0
    %506 = vmatpush1.bf16.msra.mxu0 %v482
    %507 = vmatprep.subr.bf16.mxu0 0
    %508 = vmatpush1.bf16.msra.mxu0 0
    %509 = vmatprep.subr.bf16.mxu0 0
    %510 = vmatpush1.bf16.msra.mxu0 0
    %511 = vmatprep.subr.bf16.mxu0 0
    %512 = vmatpush1.bf16.msra.mxu0 0
    %513 = vmatprep.subr.bf16.mxu0 0
    %514 = vmatpush1.bf16.msra.mxu0 0
    %515 = vmatprep.subr.bf16.mxu0 0
    %516 = vmatpush1.bf16.msra.mxu0 0
    %517 = vmatprep.subr.bf16.mxu0 0
    %518 = vmatpush1.bf16.msra.mxu0 0
    %519 = vmatprep.subr.bf16.mxu0 0
    %520 = vmatpush1.bf16.msra.mxu0 0
    %521 = vmatprep.subr.bf16.mxu0 0
    %522 = vmatpush1.bf16.msra.mxu0 0
    %523 = vmatprep.mubr.bf16.mxu0 0
    %524 = vmatmul.mubr.bf16.gmra.mrb[0].mxu0 %v440
    %v525 = vpop.f32.mrb[0].mxu0
    %v526 = vadd.f32 0.0, %v525
    %v527 = vpop.f32.mrb[0].mxu0
    %v528 = vpop.f32.mrb[0].mxu0
    %v529 = vadd.f32 0.0, %v528
    %v530 = vpop.f32.mrb[0].mxu0
    %531 = vmatprep.mubr.bf16.mxu0 0
    %532 = vmatmul.mubr.bf16.gmra.mrb[0].mxu0 %v441
    %v533 = vpop.f32.mrb[0].mxu0
    %v534 = vadd.f32 0.0, %v533
    %v535 = vpop.f32.mrb[0].mxu0
    %v536 = vpop.f32.mrb[0].mxu0
    %v537 = vadd.f32 0.0, %v536
    %v538 = vpop.f32.mrb[0].mxu0
    %539 = vmatprep.mubr.bf16.mxu0 0
    %540 = vmatmul.mubr.bf16.gmra.mrb[0].mxu0 %v442
    %v541 = vpop.f32.mrb[0].mxu0
    %v542 = vadd.f32 0.0, %v541
    %v543 = vpop.f32.mrb[0].mxu0
    %v544 = vpop.f32.mrb[0].mxu0
    %v545 = vadd.f32 0.0, %v544
    %v546 = vpop.f32.mrb[0].mxu0
    %547 = vdwg.mxu0
    %v548 = vmul.f32 %v526, %v526
    %v549 = vmul.f32 %v529, %v529
    %v550 = vmul.f32 %v534, %v534
    %v551 = vmul.f32 %v537, %v537
    %v552 = vadd.f32 %v548, %v550
    %v553 = vadd.f32 %v549, %v551
    %v554 = vmul.f32 %v542, %v542
    %v555 = vmul.f32 %v545, %v545
    %v556 = vadd.f32 %v552, %v554
    %v557 = vadd.f32 %v553, %v555
    %v558 = vrsqrt.pop %v556
    %v559 = vmul.f32 %v556, %v558
    %vm560 = vcmp.eq.f32.partialorder %v556, inf
    %v561 = vsel %vm560, %v556, %v559
    %vm562 = vcmp.eq.f32.partialorder %v556, 0.0
    %v563 = vand.u32 %v556, 2147483648
    %v564 = vsel %vm562, %v563, %v561
    %v565 = vrsqrt.pop %v557
    %v566 = vmul.f32 %v557, %v565
    %vm567 = vcmp.eq.f32.partialorder %v557, inf
    %v568 = vsel %vm567, %v557, %v566
    %vm569 = vcmp.eq.f32.partialorder %v557, 0.0
    %v570 = vand.u32 %v557, 2147483648
    %v571 = vsel %vm569, %v570, %v568
    %s572 = scalar_lea.vmem %s0, 128
    %v573 = vld [vmem:[%s572] sm:$0xf]
    %v574 = vld [vmem:[%s572 + $0x4] sm:$0xf]
    %v575 = vld [vmem:[%s572 + $0x8] sm:$0xf]
    %v576 = vld [vmem:[%s572 + $0xc] sm:$0xf]
    %v577 = vld [vmem:[%s572 + $0x10] sm:$0xf]
    %v578 = vld [vmem:[%s572 + $0x14] sm:$0xf]
    %v579 = vld [vmem:[%s572 + $0x18] sm:$0xf]
    %v580 = vld [vmem:[%s572 + $0x1c] sm:$0xf]
    %v581 = vld [vmem:[%s572 + $0x20] sm:$0xf]
    %v582 = vld [vmem:[%s572 + $0x24] sm:$0xf]
    %v583 = vld [vmem:[%s572 + $0x28] sm:$0xf]
    %v584 = vld [vmem:[%s572 + $0x2c] sm:$0xf]
    %v585 = vld [vmem:[%s572 + $0x30] sm:$0xf]
    %v586 = vld [vmem:[%s572 + $0x34] sm:$0xf]
    %v587 = vld [vmem:[%s572 + $0x38] sm:$0xf]
    %v588 = vld [vmem:[%s572 + $0x3c] sm:$0xf]
    %v589 = vpack.c.bf16 %v571, %v564
    %s590 = scalar_lea.vmem %s0, 192
    %v591 = vld [vmem:[%s590] sm:$0xf]
    %v592 = vld [vmem:[%s590 + $0x4] sm:$0xf]
    %v593 = vld [vmem:[%s590 + $0x8] sm:$0xf]
    %v594 = vld [vmem:[%s590 + $0xc] sm:$0xf]
    %v595 = vld [vmem:[%s590 + $0x10] sm:$0xf]
    %v596 = vld [vmem:[%s590 + $0x14] sm:$0xf]
    %v597 = vld [vmem:[%s590 + $0x18] sm:$0xf]
    %v598 = vld [vmem:[%s590 + $0x1c] sm:$0xf]
    %v599 = vld [vmem:[%s590 + $0x20] sm:$0xf]
    %v600 = vld [vmem:[%s590 + $0x24] sm:$0xf]
    %v601 = vld [vmem:[%s590 + $0x28] sm:$0xf]
    %v602 = vld [vmem:[%s590 + $0x2c] sm:$0xf]
    %v603 = vld [vmem:[%s590 + $0x30] sm:$0xf]
    %v604 = vld [vmem:[%s590 + $0x34] sm:$0xf]
    %v605 = vld [vmem:[%s590 + $0x38] sm:$0xf]
    %v606 = vld [vmem:[%s590 + $0x3c] sm:$0xf]
    %v607 = vpack.c.bf16 %v237, %v236
    %v624 = vunpack.c.l.b16 %v591
    %v625 = vunpack.c.l.b16 %v592
    %v626 = vunpack.c.l.b16 %v593
    %v627 = vunpack.c.l.b16 %v594
    %v628 = vunpack.c.l.b16 %v595
    %v629 = vunpack.c.l.b16 %v596
    %v630 = vunpack.c.l.b16 %v597
    %v631 = vunpack.c.l.b16 %v598
    %v632 = vunpack.c.l.b16 %v599
    %v633 = vunpack.c.l.b16 %v600
    %v634 = vunpack.c.l.b16 %v601
    %v635 = vunpack.c.l.b16 %v602
    %v636 = vunpack.c.l.b16 %v603
    %v637 = vunpack.c.l.b16 %v604
    %v638 = vunpack.c.l.b16 %v605
    %v639 = vunpack.c.l.b16 %v606
    %v640 = vpack.c.b16 %v625, %v624
    %v641 = vpack.c.b16 %v627, %v626
    %v642 = vpack.c.b16 %v629, %v628
    %v643 = vpack.c.b16 %v631, %v630
    %v644 = vpack.c.b16 %v633, %v632
    %v645 = vpack.c.b16 %v635, %v634
    %v646 = vpack.c.b16 %v637, %v636
    %v647 = vpack.c.b16 %v639, %v638
    %656 = vmatprep.subr.bf16.mxu0 0
    %657 = vmatpush1.bf16.msra.mxu0 %v640
    %658 = vmatprep.subr.bf16.mxu0 0
    %659 = vmatpush1.bf16.msra.mxu0 %v641
    %660 = vmatprep.subr.bf16.mxu0 0
    %661 = vmatpush1.bf16.msra.mxu0 %v642
    %662 = vmatprep.subr.bf16.mxu0 0
    %663 = vmatpush1.bf16.msra.mxu0 %v643
    %664 = vmatprep.subr.bf16.mxu0 0
    %665 = vmatpush1.bf16.msra.mxu0 %v644
    %666 = vmatprep.subr.bf16.mxu0 0
    %667 = vmatpush1.bf16.msra.mxu0 %v645
    %668 = vmatprep.subr.bf16.mxu0 0
    %669 = vmatpush1.bf16.msra.mxu0 %v646
    %670 = vmatprep.subr.bf16.mxu0 0
    %671 = vmatpush1.bf16.msra.mxu0 %v647
    %672 = vmatprep.subr.bf16.mxu0 0
    %673 = vmatpush1.bf16.msra.mxu0 0
    %674 = vmatprep.subr.bf16.mxu0 0
    %675 = vmatpush1.bf16.msra.mxu0 0
    %676 = vmatprep.subr.bf16.mxu0 0
    %677 = vmatpush1.bf16.msra.mxu0 0
    %678 = vmatprep.subr.bf16.mxu0 0
    %679 = vmatpush1.bf16.msra.mxu0 0
    %680 = vmatprep.subr.bf16.mxu0 0
    %681 = vmatpush1.bf16.msra.mxu0 0
    %682 = vmatprep.subr.bf16.mxu0 0
    %683 = vmatpush1.bf16.msra.mxu0 0
    %684 = vmatprep.subr.bf16.mxu0 0
    %685 = vmatpush1.bf16.msra.mxu0 0
    %686 = vmatprep.subr.bf16.mxu0 0
    %687 = vmatpush1.bf16.msra.mxu0 0
    %688 = vmatprep.mubr.bf16.mxu0 0
    %689 = vmatmul.mubr.bf16.gmra.mrb[0].mxu0 %v607
    %v690 = vpop.f32.mrb[0].mxu0
    %v691 = vadd.f32 0.0, %v690
    %v692 = vpop.f32.mrb[0].mxu0
    %v693 = vpop.f32.mrb[0].mxu0
    %v694 = vadd.f32 0.0, %v693
    %v695 = vpop.f32.mrb[0].mxu0
    %696 = vdwg.mxu0
    %v713 = vunpack.c.l.b16 %v573
    %v714 = vunpack.c.l.b16 %v574
    %v715 = vunpack.c.l.b16 %v575
    %v716 = vunpack.c.l.b16 %v576
    %v717 = vunpack.c.l.b16 %v577
    %v718 = vunpack.c.l.b16 %v578
    %v719 = vunpack.c.l.b16 %v579
    %v720 = vunpack.c.l.b16 %v580
    %v721 = vunpack.c.l.b16 %v581
    %v722 = vunpack.c.l.b16 %v582
    %v723 = vunpack.c.l.b16 %v583
    %v724 = vunpack.c.l.b16 %v584
    %v725 = vunpack.c.l.b16 %v585
    %v726 = vunpack.c.l.b16 %v586
    %v727 = vunpack.c.l.b16 %v587
    %v728 = vunpack.c.l.b16 %v588
    %v729 = vpack.c.b16 %v714, %v713
    %v730 = vpack.c.b16 %v716, %v715
    %v731 = vpack.c.b16 %v718, %v717
    %v732 = vpack.c.b16 %v720, %v719
    %v733 = vpack.c.b16 %v722, %v721
    %v734 = vpack.c.b16 %v724, %v723
    %v735 = vpack.c.b16 %v726, %v725
    %v736 = vpack.c.b16 %v728, %v727
    %745 = vmatprep.subr.bf16.mxu0 0
    %746 = vmatpush1.bf16.msra.mxu0 %v729
    %747 = vmatprep.subr.bf16.mxu0 0
    %748 = vmatpush1.bf16.msra.mxu0 %v730
    %749 = vmatprep.subr.bf16.mxu0 0
    %750 = vmatpush1.bf16.msra.mxu0 %v731
    %751 = vmatprep.subr.bf16.mxu0 0
    %752 = vmatpush1.bf16.msra.mxu0 %v732
    %753 = vmatprep.subr.bf16.mxu0 0
    %754 = vmatpush1.bf16.msra.mxu0 %v733
    %755 = vmatprep.subr.bf16.mxu0 0
    %756 = vmatpush1.bf16.msra.mxu0 %v734
    %757 = vmatprep.subr.bf16.mxu0 0
    %758 = vmatpush1.bf16.msra.mxu0 %v735
    %759 = vmatprep.subr.bf16.mxu0 0
    %760 = vmatpush1.bf16.msra.mxu0 %v736
    %761 = vmatprep.subr.bf16.mxu0 0
    %762 = vmatpush1.bf16.msra.mxu0 0
    %763 = vmatprep.subr.bf16.mxu0 0
    %764 = vmatpush1.bf16.msra.mxu0 0
    %765 = vmatprep.subr.bf16.mxu0 0
    %766 = vmatpush1.bf16.msra.mxu0 0
    %767 = vmatprep.subr.bf16.mxu0 0
    %768 = vmatpush1.bf16.msra.mxu0 0
    %769 = vmatprep.subr.bf16.mxu0 0
    %770 = vmatpush1.bf16.msra.mxu0 0
    %771 = vmatprep.subr.bf16.mxu0 0
    %772 = vmatpush1.bf16.msra.mxu0 0
    %773 = vmatprep.subr.bf16.mxu0 0
    %774 = vmatpush1.bf16.msra.mxu0 0
    %775 = vmatprep.subr.bf16.mxu0 0
    %776 = vmatpush1.bf16.msra.mxu0 0
    %777 = vmatprep.mubr.bf16.mxu0 0
    %778 = vmatmul.mubr.bf16.gmra.mrb[0].mxu0 %v589
    %v779 = vpop.f32.mrb[0].mxu0
    %v780 = vadd.f32 %v691, %v779
    %v781 = vpop.f32.mrb[0].mxu0
    %v782 = vpop.f32.mrb[0].mxu0
    %v783 = vadd.f32 %v694, %v782
    %v784 = vpop.f32.mrb[0].mxu0
    %785 = vdwg.mxu0
    %s786 = scalar_lea.vmem %s0, 256
    %v787 = vld [vmem:[%s786] sm:$0xf]
    %v788 = vld [vmem:[%s786 + $0x4] sm:$0xf]
    %v789 = vld [vmem:[%s786 + $0x8] sm:$0xf]
    %v790 = vld [vmem:[%s786 + $0xc] sm:$0xf]
    %v791 = vld [vmem:[%s786 + $0x10] sm:$0xf]
    %v792 = vld [vmem:[%s786 + $0x14] sm:$0xf]
    %v793 = vld [vmem:[%s786 + $0x18] sm:$0xf]
    %v794 = vld [vmem:[%s786 + $0x1c] sm:$0xf]
    %v795 = vld [vmem:[%s786 + $0x20] sm:$0xf]
    %v796 = vld [vmem:[%s786 + $0x24] sm:$0xf]
    %v797 = vld [vmem:[%s786 + $0x28] sm:$0xf]
    %v798 = vld [vmem:[%s786 + $0x2c] sm:$0xf]
    %v799 = vld [vmem:[%s786 + $0x30] sm:$0xf]
    %v800 = vld [vmem:[%s786 + $0x34] sm:$0xf]
    %v801 = vld [vmem:[%s786 + $0x38] sm:$0xf]
    %v802 = vld [vmem:[%s786 + $0x3c] sm:$0xf]
    %v803 = vpack.c.bf16 %v529, %v526
    %v804 = vpack.c.bf16 %v537, %v534
    %v805 = vpack.c.bf16 %v545, %v542
    %v822 = vunpack.c.l.b16 %v787
    %v823 = vunpack.c.l.b16 %v788
    %v824 = vunpack.c.l.b16 %v789
    %v825 = vunpack.c.l.b16 %v790
    %v826 = vunpack.c.l.b16 %v791
    %v827 = vunpack.c.l.b16 %v792
    %v828 = vunpack.c.l.b16 %v793
    %v829 = vunpack.c.l.b16 %v794
    %v830 = vunpack.c.l.b16 %v795
    %v831 = vunpack.c.l.b16 %v796
    %v832 = vunpack.c.l.b16 %v797
    %v833 = vunpack.c.l.b16 %v798
    %v834 = vunpack.c.l.b16 %v799
    %v835 = vunpack.c.l.b16 %v800
    %v836 = vunpack.c.l.b16 %v801
    %v837 = vunpack.c.l.b16 %v802
    %v838 = vpack.c.b16 %v823, %v822
    %v839 = vpack.c.b16 %v825, %v824
    %v840 = vpack.c.b16 %v827, %v826
    %v841 = vpack.c.b16 %v829, %v828
    %v842 = vpack.c.b16 %v831, %v830
    %v843 = vpack.c.b16 %v833, %v832
    %v844 = vpack.c.b16 %v835, %v834
    %v845 = vpack.c.b16 %v837, %v836
    %854 = vmatprep.subr.bf16.mxu0 0
    %855 = vmatpush1.bf16.msra.mxu0 %v838
    %856 = vmatprep.subr.bf16.mxu0 0
    %857 = vmatpush1.bf16.msra.mxu0 %v839
    %858 = vmatprep.subr.bf16.mxu0 0
    %859 = vmatpush1.bf16.msra.mxu0 %v840
    %860 = vmatprep.subr.bf16.mxu0 0
    %861 = vmatpush1.bf16.msra.mxu0 %v841
    %862 = vmatprep.subr.bf16.mxu0 0
    %863 = vmatpush1.bf16.msra.mxu0 %v842
    %864 = vmatprep.subr.bf16.mxu0 0
    %865 = vmatpush1.bf16.msra.mxu0 %v843
    %866 = vmatprep.subr.bf16.mxu0 0
    %867 = vmatpush1.bf16.msra.mxu0 %v844
    %868 = vmatprep.subr.bf16.mxu0 0
    %869 = vmatpush1.bf16.msra.mxu0 %v845
    %870 = vmatprep.subr.bf16.mxu0 0
    %871 = vmatpush1.bf16.msra.mxu0 0
    %872 = vmatprep.subr.bf16.mxu0 0
    %873 = vmatpush1.bf16.msra.mxu0 0
    %874 = vmatprep.subr.bf16.mxu0 0
    %875 = vmatpush1.bf16.msra.mxu0 0
    %876 = vmatprep.subr.bf16.mxu0 0
    %877 = vmatpush1.bf16.msra.mxu0 0
    %878 = vmatprep.subr.bf16.mxu0 0
    %879 = vmatpush1.bf16.msra.mxu0 0
    %880 = vmatprep.subr.bf16.mxu0 0
    %881 = vmatpush1.bf16.msra.mxu0 0
    %882 = vmatprep.subr.bf16.mxu0 0
    %883 = vmatpush1.bf16.msra.mxu0 0
    %884 = vmatprep.subr.bf16.mxu0 0
    %885 = vmatpush1.bf16.msra.mxu0 0
    %886 = vmatprep.mubr.bf16.mxu0 0
    %887 = vmatmul.mubr.bf16.gmra.mrb[0].mxu0 %v803
    %v888 = vpop.f32.mrb[0].mxu0
    %v889 = vadd.f32 0.0, %v888
    %v890 = vpop.f32.mrb[0].mxu0
    %v891 = vpop.f32.mrb[0].mxu0
    %v892 = vadd.f32 0.0, %v891
    %v893 = vpop.f32.mrb[0].mxu0
    %894 = vmatprep.mubr.bf16.mxu0 0
    %895 = vmatmul.mubr.bf16.gmra.mrb[0].mxu0 %v804
    %v896 = vpop.f32.mrb[0].mxu0
    %v897 = vadd.f32 0.0, %v896
    %v898 = vpop.f32.mrb[0].mxu0
    %v899 = vpop.f32.mrb[0].mxu0
    %v900 = vadd.f32 0.0, %v899
    %v901 = vpop.f32.mrb[0].mxu0
    %902 = vmatprep.mubr.bf16.mxu0 0
    %903 = vmatmul.mubr.bf16.gmra.mrb[0].mxu0 %v805
    %v904 = vpop.f32.mrb[0].mxu0
    %v905 = vadd.f32 0.0, %v904
    %v906 = vpop.f32.mrb[0].mxu0
    %v907 = vpop.f32.mrb[0].mxu0
    %v908 = vadd.f32 0.0, %v907
    %v909 = vpop.f32.mrb[0].mxu0
    %910 = vdwg.mxu0
    %s911 = scalar_lea.vmem %s0, 320
    %v912 = vld [vmem:[%s911] sm:$0xf]
    %v913 = vld [vmem:[%s911 + $0x4] sm:$0xf]
    %v914 = vld [vmem:[%s911 + $0x8] sm:$0xf]
    %v915 = vld [vmem:[%s911 + $0xc] sm:$0xf]
    %v916 = vld [vmem:[%s911 + $0x10] sm:$0xf]
    %v917 = vld [vmem:[%s911 + $0x14] sm:$0xf]
    %v918 = vld [vmem:[%s911 + $0x18] sm:$0xf]
    %v919 = vld [vmem:[%s911 + $0x1c] sm:$0xf]
    %v920 = vld [vmem:[%s911 + $0x20] sm:$0xf]
    %v921 = vld [vmem:[%s911 + $0x24] sm:$0xf]
    %v922 = vld [vmem:[%s911 + $0x28] sm:$0xf]
    %v923 = vld [vmem:[%s911 + $0x2c] sm:$0xf]
    %v924 = vld [vmem:[%s911 + $0x30] sm:$0xf]
    %v925 = vld [vmem:[%s911 + $0x34] sm:$0xf]
    %v926 = vld [vmem:[%s911 + $0x38] sm:$0xf]
    %v927 = vld [vmem:[%s911 + $0x3c] sm:$0xf]
    %v928 = vpack.c.bf16 %v783, %v780
    %v930 = vlaneseq
    %v931 = vshrl.u32 %v930, 7
    %v932 = vsub.s32 0, %v931
    %v933 = vrot.slane %v422, %v932
    %v951 = vunpack.c.l.b16 %v912
    %v952 = vunpack.c.l.b16 %v913
    %v953 = vunpack.c.l.b16 %v914
    %v954 = vunpack.c.l.b16 %v915
    %v955 = vunpack.c.l.b16 %v916
    %v956 = vunpack.c.l.b16 %v917
    %v957 = vunpack.c.l.b16 %v918
    %v958 = vunpack.c.l.b16 %v919
    %v959 = vunpack.c.l.b16 %v920
    %v960 = vunpack.c.l.b16 %v921
    %v961 = vunpack.c.l.b16 %v922
    %v962 = vunpack.c.l.b16 %v923
    %v963 = vunpack.c.l.b16 %v924
    %v964 = vunpack.c.l.b16 %v925
    %v965 = vunpack.c.l.b16 %v926
    %v966 = vunpack.c.l.b16 %v927
    %v967 = vpack.c.b16 %v952, %v951
    %v968 = vpack.c.b16 %v954, %v953
    %v969 = vpack.c.b16 %v956, %v955
    %v970 = vpack.c.b16 %v958, %v957
    %v971 = vpack.c.b16 %v960, %v959
    %v972 = vpack.c.b16 %v962, %v961
    %v973 = vpack.c.b16 %v964, %v963
    %v974 = vpack.c.b16 %v966, %v965
    %983 = vmatprep.subr.bf16.mxu0 0
    %984 = vmatpush1.bf16.msra.mxu0 %v967
    %985 = vmatprep.subr.bf16.mxu0 0
    %986 = vmatpush1.bf16.msra.mxu0 %v968
    %987 = vmatprep.subr.bf16.mxu0 0
    %988 = vmatpush1.bf16.msra.mxu0 %v969
    %989 = vmatprep.subr.bf16.mxu0 0
    %990 = vmatpush1.bf16.msra.mxu0 %v970
    %991 = vmatprep.subr.bf16.mxu0 0
    %992 = vmatpush1.bf16.msra.mxu0 %v971
    %993 = vmatprep.subr.bf16.mxu0 0
    %994 = vmatpush1.bf16.msra.mxu0 %v972
    %995 = vmatprep.subr.bf16.mxu0 0
    %996 = vmatpush1.bf16.msra.mxu0 %v973
    %997 = vmatprep.subr.bf16.mxu0 0
    %998 = vmatpush1.bf16.msra.mxu0 %v974
    %999 = vmatprep.subr.bf16.mxu0 0
    %1000 = vmatpush1.bf16.msra.mxu0 0
    %1001 = vmatprep.subr.bf16.mxu0 0
    %1002 = vmatpush1.bf16.msra.mxu0 0
    %1003 = vmatprep.subr.bf16.mxu0 0
    %1004 = vmatpush1.bf16.msra.mxu0 0
    %1005 = vmatprep.subr.bf16.mxu0 0
    %1006 = vmatpush1.bf16.msra.mxu0 0
    %1007 = vmatprep.subr.bf16.mxu0 0
    %1008 = vmatpush1.bf16.msra.mxu0 0
    %1009 = vmatprep.subr.bf16.mxu0 0
    %1010 = vmatpush1.bf16.msra.mxu0 0
    %1011 = vmatprep.subr.bf16.mxu0 0
    %1012 = vmatpush1.bf16.msra.mxu0 0
    %1013 = vmatprep.subr.bf16.mxu0 0
    %1014 = vmatpush1.bf16.msra.mxu0 0
    %1015 = vmatprep.mubr.bf16.mxu0 0
    %1016 = vmatmul.mubr.bf16.gmra.mrb[0].mxu0 %v928
    %v1017 = vpop.f32.mrb[0].mxu0
    %v1018 = vadd.f32 %v933, %v1017
    %v1019 = vpop.f32.mrb[0].mxu0
    %v1020 = vpop.f32.mrb[0].mxu0
    %v1021 = vadd.f32 %v933, %v1020
    %v1022 = vpop.f32.mrb[0].mxu0
    %1023 = vdwg.mxu0
    %v1024 = vxor.u32 %v1018, 2147483648
    %v1025 = vxor.u32 %v1021, 2147483648
    %v1026 = vmul.f32 %v1024, 1.442695
    %v1027 = vpow.pop %v1026
    %v1028 = vmul.f32 %v1025, 1.442695
    %v1029 = vpow.pop %v1028
    %v1030 = vadd.f32 %v1027, 1.0
    %v1031 = vadd.f32 %v1029, 1.0
    %v1032 = vrcp.pop %v1030
    %v1033 = vmul.f32 1.0, %v1032
    %v1034 = vrcp.pop %v1031
    %v1035 = vmul.f32 1.0, %v1034
    %v1036 = vmul.f32 %v889, %v1033
    %v1037 = vmul.f32 %v892, %v1035
    %v1038 = vmul.f32 %v897, %v1033
    %v1039 = vmul.f32 %v900, %v1035
    %v1040 = vmul.f32 %v905, %v1033
    %v1041 = vmul.f32 %v908, %v1035
    %1042 = vst [vmem:[#allocation2] sm:$0xff] %v780
    %1043 = vst [vmem:[#allocation2 + $0x8] sm:$0xff] %v783
    %1044 = vst [vmem:[%s6] sm:$0xff] %v1036
    %1045 = vst [vmem:[%s6 + $0x8] sm:$0xff] %v1037
    %s1046 = scalar_lea.vmem %s6, 16
    %1047 = vst [vmem:[%s1046] sm:$0xff] %v1038
    %1048 = vst [vmem:[%s1046 + $0x8] sm:$0xff] %v1039
    %s1049 = scalar_lea.vmem %s6, 32
    %1050 = vst [vmem:[%s1049] sm:$0xff] %v1040
    %1051 = vst [vmem:[%s1049 + $0x8] sm:$0xff] %v1041
    // Predicated region
    $region22: #{block_forward.5} parent=1 // pred_check
      _
    $region23: #{block_forward.5} parent=1 // pred_check_branch
      %1053 = sbr.rel (0) target = $region25
    $region24: #{block_forward.5} parent=1 // pred_region
      %s1055 = ssub.s32 256, 256
      %1056 = vsyncadd [#allocation3], %s1055
      %s1057 = sshll.u32 [#allocation2], 4
      %s1058 = int_to_ptr.vmem [resolvable:$true] %s1057
      %1063 = dma.vmem_to_hbm [thread:$0]  %s1058, 256, %s5, [#allocation3], 128, 128, 8
    $region25: #{block_forward.5} parent=1 // pred_fallthru
      _
    // Predicated region
    $region26: #{block_forward.5} parent=1 // pred_check
      _
    $region27: #{block_forward.5} parent=1 // pred_check_branch
      %1065 = sbr.rel (0) target = $region29
    $region28: #{block_forward.5} parent=1 // pred_region
      _
    $region29: #{block_forward.5} parent=1 // pred_fallthru
      _
    // Predicated region
    $region30: #{block_forward.5} parent=1 // pred_check
      _
    $region31: #{block_forward.5} parent=1 // pred_check_branch
      %1067 = sbr.rel (0) target = $region33
    $region32: #{block_forward.5} parent=1 // pred_region
      %1068 = dma.done [#allocation3], 256
    $region33: #{block_forward.5} parent=1 // pred_fallthru
      _
    // Predicated region
    $region34: #{block_forward.5} parent=1 // pred_check
      _
    $region35: #{block_forward.5} parent=1 // pred_check_branch
      %1070 = sbr.rel (0) target = $region37
    $region36: #{block_forward.5} parent=1 // pred_region
      _
    $region37: #{block_forward.5} parent=1 // pred_fallthru
      _
    %1071 = vsyncpa [#allocation3], 1

// kernel: block_forward.4
$region0: #{block_forward.4}
  #allocation0 [shape = 'u32[]', space=smem, size = 0x4, offset = 0x4, fixed_abs, tag = 'smem constant byte address 0x4 - core index']
  #allocation1 [shape = 'u32[144,128]{1,0:T(1,128)}', space=vmem, size = 0x12000, scoped, tag = 'internal scratch']
  %s0 = inlined_call_operand.vmem [shape: bf16[15,128,128], index: 0, kind: input, shape index: {}]
  %s1 = inlined_call_operand.vmem [shape: f32[7,1,128], index: 1, kind: input, shape index: {}]
  %s2 = inlined_call_operand.vmem [shape: bf16[32,640], index: 2, kind: input, shape index: {}]
  %s3 = inlined_call_operand.vmem [shape: f32[32,8], index: 3, kind: input, shape index: {}]
  %s4 = inlined_call_operand.vmem [shape: f32[32,512], index: 4, kind: output, shape index: {}]
  %s5 = sld [smem:[#allocation0]]
  $region26: #{block_forward.4} parent=0
    _
  %s7 = ssub.s32 1, %s5
  %s8 = scalar_select 0, %s7, %s5
  // Predicated region
  $region2: #{block_forward.4} parent=0 // pred_check
    _
  $region3: #{block_forward.4} parent=0 // pred_check_branch
    %10 = sbr.rel (0) target = $region5
  $region4: #{block_forward.4} parent=0 // pred_region
    _
  $region5: #{block_forward.4} parent=0 // pred_fallthru
    _
  // Predicated region
  $region6: #{block_forward.4} parent=0 // pred_check
    _
  $region7: #{block_forward.4} parent=0 // pred_check_branch
    %12 = sbr.rel (0) target = $region9
  $region8: #{block_forward.4} parent=0 // pred_region
    _
  $region9: #{block_forward.4} parent=0 // pred_fallthru
    _
  // Predicated region
  $region10: #{block_forward.4} parent=0 // pred_check
    _
  $region11: #{block_forward.4} parent=0 // pred_check_branch
    %14 = sbr.rel (0) target = $region13
  $region12: #{block_forward.4} parent=0 // pred_region
    _
  $region13: #{block_forward.4} parent=0 // pred_fallthru
    _
  // Predicated region
  $region14: #{block_forward.4} parent=0 // pred_check
    _
  $region15: #{block_forward.4} parent=0 // pred_check_branch
    %16 = sbr.rel (0) target = $region17
  $region16: #{block_forward.4} parent=0 // pred_region
    _
  $region17: #{block_forward.4} parent=0 // pred_fallthru
    _
  %v18 = vld [vmem:[%s3] sm:$0xff]
  %v19 = vld [vmem:[%s3 + $0x8] sm:$0xff]
  %v20 = vld [vmem:[%s3 + $0x10] sm:$0xff]
  %v21 = vld [vmem:[%s3 + $0x18] sm:$0xff]
  %26 = vrot.lane.b32.xlu0 %v18, 127
  %v27 = vpop.permute.xlu0 %26
  %28 = vrot.lane.b32.xlu0 %v19, 127
  %v29 = vpop.permute.xlu0 %28
  %30 = vrot.lane.b32.xlu0 %v20, 127
  %v31 = vpop.permute.xlu0 %30
  %32 = vrot.lane.b32.xlu0 %v21, 127
  %v33 = vpop.permute.xlu0 %32
  %34 = vrot.lane.b32.xlu0 %v18, 126
  %v35 = vpop.permute.xlu0 %34
  %36 = vrot.lane.b32.xlu0 %v19, 126
  %v37 = vpop.permute.xlu0 %36
  %38 = vrot.lane.b32.xlu0 %v20, 126
  %v39 = vpop.permute.xlu0 %38
  %40 = vrot.lane.b32.xlu0 %v21, 126
  %v41 = vpop.permute.xlu0 %40
  %v42 = vlaneseq
  %v43 = vand.u32 %v42, 127
  %s44 = scalar_lea.vmem %s1, 6
  %v45 = vld [vmem:[%s44] sm:$0x1]
  %46 = vset.pattern.permute.xlu0 0
  %47 = vperm.xlu0 %46, %v18
  %v48 = vpop.permute.xlu0 %47
  %50 = vset.pattern.permute.xlu0 0
  %51 = vperm.xlu0 %50, %v19
  %v52 = vpop.permute.xlu0 %51
  %54 = vset.pattern.permute.xlu0 0
  %55 = vperm.xlu0 %54, %v20
  %v56 = vpop.permute.xlu0 %55
  %58 = vset.pattern.permute.xlu0 0
  %59 = vperm.xlu0 %58, %v21
  %v60 = vpop.permute.xlu0 %59
  %v63 = vlaneseq
  %v64 = vshrl.u32 %v63, 7
  %v65 = vsub.s32 0, %v64
  %v66 = vrot.slane %v45, %v65
  %v68 = vsub.f32 %v48, %v66
  %v69 = vsub.f32 %v52, %v66
  %v70 = vsub.f32 %v56, %v66
  %v71 = vsub.f32 %v60, %v66
  %v72 = vmul.f32 %v68, %v68
  %v73 = vmul.f32 %v69, %v69
  %v74 = vmul.f32 %v70, %v70
  %v75 = vmul.f32 %v71, %v71
  %v76 = vmul.f32 %v72, -0.605
  %v77 = vmul.f32 %v73, -0.605
  %v78 = vmul.f32 %v74, -0.605
  %v79 = vmul.f32 %v75, -0.605
  %v80 = vmul.f32 %v76, 1.442695
  %v81 = vpow.pop %v80
  %v82 = vmul.f32 %v77, 1.442695
  %v83 = vpow.pop %v82
  %v84 = vmul.f32 %v78, 1.442695
  %v85 = vpow.pop %v84
  %v86 = vmul.f32 %v79, 1.442695
  %v87 = vpow.pop %v86
  %vm88 = vcmp.lt.s32.totalorder %v43, 12
  %v89 = vsel %vm88, %v81, 0.0
  %v90 = vsel %vm88, %v83, 0.0
  %v91 = vsel %vm88, %v85, 0.0
  %v92 = vsel %vm88, %v87, 0.0
  %v93 = vld [vmem:[%s2] sm:$0xf]
  %v94 = vld [vmem:[%s2 + $0x14] sm:$0xf]
  %v95 = vld [vmem:[%s2 + $0x28] sm:$0xf]
  %v96 = vld [vmem:[%s2 + $0x3c] sm:$0xf]
  %v97 = vunpack.c.l.bf16 %v93
  %v98 = vunpack.c.l.bf16 %v94
  %v99 = vunpack.c.l.bf16 %v95
  %v100 = vunpack.c.l.bf16 %v96
  %v101 = vadd.f32 %v89, %v97
  %v102 = vadd.f32 %v90, %v98
  %v103 = vadd.f32 %v91, %v99
  %v104 = vadd.f32 %v92, %v100
  %s105 = scalar_lea.vmem %s1, 5
  %v106 = vld [vmem:[%s105] sm:$0x1]
  %107 = vset.pattern.permute.xlu0 2
  %108 = vperm.xlu0 %107, %v18
  %v109 = vpop.permute.xlu0 %108
  %111 = vset.pattern.permute.xlu0 2
  %112 = vperm.xlu0 %111, %v19
  %v113 = vpop.permute.xlu0 %112
  %115 = vset.pattern.permute.xlu0 2
  %116 = vperm.xlu0 %115, %v20
  %v117 = vpop.permute.xlu0 %116
  %119 = vset.pattern.permute.xlu0 2
  %120 = vperm.xlu0 %119, %v21
  %v121 = vpop.permute.xlu0 %120
  %123 = vset.pattern.permute.xlu0 2
  %124 = vperm.xlu0 %123, %v27
  %v125 = vpop.permute.xlu0 %124
  %127 = vset.pattern.permute.xlu0 2
  %128 = vperm.xlu0 %127, %v29
  %v129 = vpop.permute.xlu0 %128
  %131 = vset.pattern.permute.xlu0 2
  %132 = vperm.xlu0 %131, %v31
  %v133 = vpop.permute.xlu0 %132
  %135 = vset.pattern.permute.xlu0 2
  %136 = vperm.xlu0 %135, %v33
  %v137 = vpop.permute.xlu0 %136
  %139 = vset.pattern.permute.xlu0 2
  %140 = vperm.xlu0 %139, %v35
  %v141 = vpop.permute.xlu0 %140
  %143 = vset.pattern.permute.xlu0 2
  %144 = vperm.xlu0 %143, %v37
  %v145 = vpop.permute.xlu0 %144
  %147 = vset.pattern.permute.xlu0 2
  %148 = vperm.xlu0 %147, %v39
  %v149 = vpop.permute.xlu0 %148
  %151 = vset.pattern.permute.xlu0 2
  %152 = vperm.xlu0 %151, %v41
  %v153 = vpop.permute.xlu0 %152
  %v156 = vlaneseq
  %v157 = vshrl.u32 %v156, 7
  %v158 = vsub.s32 0, %v157
  %v159 = vrot.slane %v106, %v158
  %v161 = vmul.f32 %v109, %v159
  %v162 = vmul.f32 %v113, %v159
  %v163 = vmul.f32 %v117, %v159
  %v164 = vmul.f32 %v121, %v159
  %v165 = vmul.f32 %v125, %v159
  %v166 = vmul.f32 %v129, %v159
  %v167 = vmul.f32 %v133, %v159
  %v168 = vmul.f32 %v137, %v159
  %v169 = vmul.f32 %v141, %v159
  %v170 = vmul.f32 %v145, %v159
  %v171 = vmul.f32 %v149, %v159
  %v172 = vmul.f32 %v153, %v159
  %v173 = vld [vmem:[%s1] sm:$0x1]
  %v174 = vld [vmem:[%s0] sm:$0xf]
  %v175 = vld [vmem:[%s0 + $0x4] sm:$0xf]
  %v176 = vld [vmem:[%s0 + $0x8] sm:$0xf]
  %v177 = vld [vmem:[%s0 + $0xc] sm:$0xf]
  %v178 = vld [vmem:[%s0 + $0x10] sm:$0xf]
  %v179 = vld [vmem:[%s0 + $0x14] sm:$0xf]
  %v180 = vld [vmem:[%s0 + $0x18] sm:$0xf]
  %v181 = vld [vmem:[%s0 + $0x1c] sm:$0xf]
  %v182 = vld [vmem:[%s0 + $0x20] sm:$0xf]
  %v183 = vld [vmem:[%s0 + $0x24] sm:$0xf]
  %v184 = vld [vmem:[%s0 + $0x28] sm:$0xf]
  %v185 = vld [vmem:[%s0 + $0x2c] sm:$0xf]
  %v186 = vld [vmem:[%s0 + $0x30] sm:$0xf]
  %v187 = vld [vmem:[%s0 + $0x34] sm:$0xf]
  %v188 = vld [vmem:[%s0 + $0x38] sm:$0xf]
  %v189 = vld [vmem:[%s0 + $0x3c] sm:$0xf]
  %v190 = vpack.c.bf16 %v162, %v161
  %v191 = vpack.c.bf16 %v164, %v163
  %v192 = vpack.c.bf16 %v166, %v165
  %v193 = vpack.c.bf16 %v168, %v167
  %v194 = vpack.c.bf16 %v170, %v169
  %v195 = vpack.c.bf16 %v172, %v171
  %v212 = vunpack.c.l.b16 %v174
  %v213 = vunpack.c.l.b16 %v175
  %v214 = vunpack.c.l.b16 %v176
  %v215 = vunpack.c.l.b16 %v177
  %v216 = vunpack.c.l.b16 %v178
  %v217 = vunpack.c.l.b16 %v179
  %v218 = vunpack.c.l.b16 %v180
  %v219 = vunpack.c.l.b16 %v181
  %v220 = vunpack.c.l.b16 %v182
  %v221 = vunpack.c.l.b16 %v183
  %v222 = vunpack.c.l.b16 %v184
  %v223 = vunpack.c.l.b16 %v185
  %v224 = vunpack.c.l.b16 %v186
  %v225 = vunpack.c.l.b16 %v187
  %v226 = vunpack.c.l.b16 %v188
  %v227 = vunpack.c.l.b16 %v189
  %v228 = vpack.c.b16 %v213, %v212
  %v229 = vpack.c.b16 %v215, %v214
  %v230 = vpack.c.b16 %v217, %v216
  %v231 = vpack.c.b16 %v219, %v218
  %v232 = vpack.c.b16 %v221, %v220
  %v233 = vpack.c.b16 %v223, %v222
  %v234 = vpack.c.b16 %v225, %v224
  %v235 = vpack.c.b16 %v227, %v226
  %244 = vmatprep.subr.bf16.mxu0 0
  %245 = vmatpush1.bf16.msra.mxu0 %v228
  %246 = vmatprep.subr.bf16.mxu0 0
  %247 = vmatpush1.bf16.msra.mxu0 %v229
  %248 = vmatprep.subr.bf16.mxu0 0
  %249 = vmatpush1.bf16.msra.mxu0 %v230
  %250 = vmatprep.subr.bf16.mxu0 0
  %251 = vmatpush1.bf16.msra.mxu0 %v231
  %252 = vmatprep.subr.bf16.mxu0 0
  %253 = vmatpush1.bf16.msra.mxu0 %v232
  %254 = vmatprep.subr.bf16.mxu0 0
  %255 = vmatpush1.bf16.msra.mxu0 %v233
  %256 = vmatprep.subr.bf16.mxu0 0
  %257 = vmatpush1.bf16.msra.mxu0 %v234
  %258 = vmatprep.subr.bf16.mxu0 0
  %259 = vmatpush1.bf16.msra.mxu0 %v235
  %260 = vmatprep.subr.bf16.mxu0 0
  %261 = vmatpush1.bf16.msra.mxu0 0
  %262 = vmatprep.subr.bf16.mxu0 0
  %263 = vmatpush1.bf16.msra.mxu0 0
  %264 = vmatprep.subr.bf16.mxu0 0
  %265 = vmatpush1.bf16.msra.mxu0 0
  %266 = vmatprep.subr.bf16.mxu0 0
  %267 = vmatpush1.bf16.msra.mxu0 0
  %268 = vmatprep.subr.bf16.mxu0 0
  %269 = vmatpush1.bf16.msra.mxu0 0
  %270 = vmatprep.subr.bf16.mxu0 0
  %271 = vmatpush1.bf16.msra.mxu0 0
  %272 = vmatprep.subr.bf16.mxu0 0
  %273 = vmatpush1.bf16.msra.mxu0 0
  %274 = vmatprep.subr.bf16.mxu0 0
  %275 = vmatpush1.bf16.msra.mxu0 0
  %276 = vmatprep.mubr.bf16.mxu0 0
  %277 = vmatmul.mubr.bf16.gmra.mrb[0].mxu0 %v190
  %v278 = vpop.f32.mrb[0].mxu0
  %v279 = vadd.f32 0.0, %v278
  %v280 = vpop.f32.mrb[0].mxu0
  %v281 = vpop.f32.mrb[0].mxu0
  %v282 = vadd.f32 0.0, %v281
  %v283 = vpop.f32.mrb[0].mxu0
  %284 = vmatprep.mubr.bf16.mxu0 0
  %285 = vmatmul.mubr.bf16.gmra.mrb[0].mxu0 %v191
  %v286 = vpop.f32.mrb[0].mxu0
  %v287 = vadd.f32 0.0, %v286
  %v288 = vpop.f32.mrb[0].mxu0
  %v289 = vpop.f32.mrb[0].mxu0
  %v290 = vadd.f32 0.0, %v289
  %v291 = vpop.f32.mrb[0].mxu0
  %292 = vmatprep.mubr.bf16.mxu0 0
  %293 = vmatmul.mubr.bf16.gmra.mrb[0].mxu0 %v192
  %v294 = vpop.f32.mrb[0].mxu0
  %v295 = vadd.f32 0.0, %v294
  %v296 = vpop.f32.mrb[0].mxu0
  %v297 = vpop.f32.mrb[0].mxu0
  %v298 = vadd.f32 0.0, %v297
  %v299 = vpop.f32.mrb[0].mxu0
  %300 = vmatprep.mubr.bf16.mxu0 0
  %301 = vmatmul.mubr.bf16.gmra.mrb[0].mxu0 %v193
  %v302 = vpop.f32.mrb[0].mxu0
  %v303 = vadd.f32 0.0, %v302
  %v304 = vpop.f32.mrb[0].mxu0
  %v305 = vpop.f32.mrb[0].mxu0
  %v306 = vadd.f32 0.0, %v305
  %v307 = vpop.f32.mrb[0].mxu0
  %308 = vmatprep.mubr.bf16.mxu0 0
  %309 = vmatmul.mubr.bf16.gmra.mrb[0].mxu0 %v194
  %v310 = vpop.f32.mrb[0].mxu0
  %v311 = vadd.f32 0.0, %v310
  %v312 = vpop.f32.mrb[0].mxu0
  %v313 = vpop.f32.mrb[0].mxu0
  %v314 = vadd.f32 0.0, %v313
  %v315 = vpop.f32.mrb[0].mxu0
  %316 = vmatprep.mubr.bf16.mxu0 0
  %317 = vmatmul.mubr.bf16.gmra.mrb[0].mxu0 %v195
  %v318 = vpop.f32.mrb[0].mxu0
  %v319 = vadd.f32 0.0, %v318
  %v320 = vpop.f32.mrb[0].mxu0
  %v321 = vpop.f32.mrb[0].mxu0
  %v322 = vadd.f32 0.0, %v321
  %v323 = vpop.f32.mrb[0].mxu0
  %324 = vdwg.mxu0
  %v325 = vmul.f32 %v279, %v279
  %v326 = vmul.f32 %v282, %v282
  %v327 = vmul.f32 %v287, %v287
  %v328 = vmul.f32 %v290, %v290
  %v329 = vmul.f32 %v295, %v295
  %v330 = vmul.f32 %v298, %v298
  %v331 = vmul.f32 %v303, %v303
  %v332 = vmul.f32 %v306, %v306
  %v333 = vadd.f32 %v325, %v329
  %v334 = vadd.f32 %v326, %v330
  %v335 = vadd.f32 %v327, %v331
  %v336 = vadd.f32 %v328, %v332
  %v337 = vmul.f32 %v311, %v311
  %v338 = vmul.f32 %v314, %v314
  %v339 = vmul.f32 %v319, %v319
  %v340 = vmul.f32 %v322, %v322
  %v341 = vadd.f32 %v333, %v337
  %v342 = vadd.f32 %v334, %v338
  %v343 = vadd.f32 %v335, %v339
  %v344 = vadd.f32 %v336, %v340
  %v345 = vrsqrt.pop %v341
  %v346 = vmul.f32 %v341, %v345
  %vm347 = vcmp.eq.f32.partialorder %v341, inf
  %v348 = vsel %vm347, %v341, %v346
  %vm349 = vcmp.eq.f32.partialorder %v341, 0.0
  %v350 = vand.u32 %v341, 2147483648
  %v351 = vsel %vm349, %v350, %v348
  %v352 = vrsqrt.pop %v342
  %v353 = vmul.f32 %v342, %v352
  %vm354 = vcmp.eq.f32.partialorder %v342, inf
  %v355 = vsel %vm354, %v342, %v353
  %vm356 = vcmp.eq.f32.partialorder %v342, 0.0
  %v357 = vand.u32 %v342, 2147483648
  %v358 = vsel %vm356, %v357, %v355
  %v359 = vrsqrt.pop %v343
  %v360 = vmul.f32 %v343, %v359
  %vm361 = vcmp.eq.f32.partialorder %v343, inf
  %v362 = vsel %vm361, %v343, %v360
  %vm363 = vcmp.eq.f32.partialorder %v343, 0.0
  %v364 = vand.u32 %v343, 2147483648
  %v365 = vsel %vm363, %v364, %v362
  %v366 = vrsqrt.pop %v344
  %v367 = vmul.f32 %v344, %v366
  %vm368 = vcmp.eq.f32.partialorder %v344, inf
  %v369 = vsel %vm368, %v344, %v367
  %vm370 = vcmp.eq.f32.partialorder %v344, 0.0
  %v371 = vand.u32 %v344, 2147483648
  %v372 = vsel %vm370, %v371, %v369
  %s373 = scalar_lea.vmem %s0, 64
  %v374 = vld [vmem:[%s373] sm:$0xf]
  %v375 = vld [vmem:[%s373 + $0x4] sm:$0xf]
  %v376 = vld [vmem:[%s373 + $0x8] sm:$0xf]
  %v377 = vld [vmem:[%s373 + $0xc] sm:$0xf]
  %v378 = vld [vmem:[%s373 + $0x10] sm:$0xf]
  %v379 = vld [vmem:[%s373 + $0x14] sm:$0xf]
  %v380 = vld [vmem:[%s373 + $0x18] sm:$0xf]
  %v381 = vld [vmem:[%s373 + $0x1c] sm:$0xf]
  %v382 = vld [vmem:[%s373 + $0x20] sm:$0xf]
  %v383 = vld [vmem:[%s373 + $0x24] sm:$0xf]
  %v384 = vld [vmem:[%s373 + $0x28] sm:$0xf]
  %v385 = vld [vmem:[%s373 + $0x2c] sm:$0xf]
  %v386 = vld [vmem:[%s373 + $0x30] sm:$0xf]
  %v387 = vld [vmem:[%s373 + $0x34] sm:$0xf]
  %v388 = vld [vmem:[%s373 + $0x38] sm:$0xf]
  %v389 = vld [vmem:[%s373 + $0x3c] sm:$0xf]
  %v390 = vpack.c.bf16 %v358, %v351
  %v391 = vpack.c.bf16 %v372, %v365
  %s392 = scalar_lea.vmem %s0, 128
  %v393 = vld [vmem:[%s392] sm:$0xf]
  %v394 = vld [vmem:[%s392 + $0x4] sm:$0xf]
  %v395 = vld [vmem:[%s392 + $0x8] sm:$0xf]
  %v396 = vld [vmem:[%s392 + $0xc] sm:$0xf]
  %v397 = vld [vmem:[%s392 + $0x10] sm:$0xf]
  %v398 = vld [vmem:[%s392 + $0x14] sm:$0xf]
  %v399 = vld [vmem:[%s392 + $0x18] sm:$0xf]
  %v400 = vld [vmem:[%s392 + $0x1c] sm:$0xf]
  %v401 = vld [vmem:[%s392 + $0x20] sm:$0xf]
  %v402 = vld [vmem:[%s392 + $0x24] sm:$0xf]
  %v403 = vld [vmem:[%s392 + $0x28] sm:$0xf]
  %v404 = vld [vmem:[%s392 + $0x2c] sm:$0xf]
  %v405 = vld [vmem:[%s392 + $0x30] sm:$0xf]
  %v406 = vld [vmem:[%s392 + $0x34] sm:$0xf]
  %v407 = vld [vmem:[%s392 + $0x38] sm:$0xf]
  %v408 = vld [vmem:[%s392 + $0x3c] sm:$0xf]
  %v409 = vpack.c.bf16 %v102, %v101
  %v410 = vpack.c.bf16 %v104, %v103
  %v427 = vunpack.c.l.b16 %v393
  %v428 = vunpack.c.l.b16 %v394
  %v429 = vunpack.c.l.b16 %v395
  %v430 = vunpack.c.l.b16 %v396
  %v431 = vunpack.c.l.b16 %v397
  %v432 = vunpack.c.l.b16 %v398
  %v433 = vunpack.c.l.b16 %v399
  %v434 = vunpack.c.l.b16 %v400
  %v435 = vunpack.c.l.b16 %v401
  %v436 = vunpack.c.l.b16 %v402
  %v437 = vunpack.c.l.b16 %v403
  %v438 = vunpack.c.l.b16 %v404
  %v439 = vunpack.c.l.b16 %v405
  %v440 = vunpack.c.l.b16 %v406
  %v441 = vunpack.c.l.b16 %v407
  %v442 = vunpack.c.l.b16 %v408
  %v443 = vpack.c.b16 %v428, %v427
  %v444 = vpack.c.b16 %v430, %v429
  %v445 = vpack.c.b16 %v432, %v431
  %v446 = vpack.c.b16 %v434, %v433
  %v447 = vpack.c.b16 %v436, %v435
  %v448 = vpack.c.b16 %v438, %v437
  %v449 = vpack.c.b16 %v440, %v439
  %v450 = vpack.c.b16 %v442, %v441
  %459 = vmatprep.subr.bf16.mxu0 0
  %460 = vmatpush1.bf16.msra.mxu0 %v443
  %461 = vmatprep.subr.bf16.mxu0 0
  %462 = vmatpush1.bf16.msra.mxu0 %v444
  %463 = vmatprep.subr.bf16.mxu0 0
  %464 = vmatpush1.bf16.msra.mxu0 %v445
  %465 = vmatprep.subr.bf16.mxu0 0
  %466 = vmatpush1.bf16.msra.mxu0 %v446
  %467 = vmatprep.subr.bf16.mxu0 0
  %468 = vmatpush1.bf16.msra.mxu0 %v447
  %469 = vmatprep.subr.bf16.mxu0 0
  %470 = vmatpush1.bf16.msra.mxu0 %v448
  %471 = vmatprep.subr.bf16.mxu0 0
  %472 = vmatpush1.bf16.msra.mxu0 %v449
  %473 = vmatprep.subr.bf16.mxu0 0
  %474 = vmatpush1.bf16.msra.mxu0 %v450
  %475 = vmatprep.subr.bf16.mxu0 0
  %476 = vmatpush1.bf16.msra.mxu0 0
  %477 = vmatprep.subr.bf16.mxu0 0
  %478 = vmatpush1.bf16.msra.mxu0 0
  %479 = vmatprep.subr.bf16.mxu0 0
  %480 = vmatpush1.bf16.msra.mxu0 0
  %481 = vmatprep.subr.bf16.mxu0 0
  %482 = vmatpush1.bf16.msra.mxu0 0
  %483 = vmatprep.subr.bf16.mxu0 0
  %484 = vmatpush1.bf16.msra.mxu0 0
  %485 = vmatprep.subr.bf16.mxu0 0
  %486 = vmatpush1.bf16.msra.mxu0 0
  %487 = vmatprep.subr.bf16.mxu0 0
  %488 = vmatpush1.bf16.msra.mxu0 0
  %489 = vmatprep.subr.bf16.mxu0 0
  %490 = vmatpush1.bf16.msra.mxu0 0
  %491 = vmatprep.mubr.bf16.mxu0 0
  %492 = vmatmul.mubr.bf16.gmra.mrb[0].mxu0 %v409
  %v493 = vpop.f32.mrb[0].mxu0
  %v494 = vadd.f32 0.0, %v493
  %v495 = vpop.f32.mrb[0].mxu0
  %v496 = vpop.f32.mrb[0].mxu0
  %v497 = vadd.f32 0.0, %v496
  %v498 = vpop.f32.mrb[0].mxu0
  %499 = vmatprep.mubr.bf16.mxu0 0
  %500 = vmatmul.mubr.bf16.gmra.mrb[0].mxu0 %v410
  %v501 = vpop.f32.mrb[0].mxu0
  %v502 = vadd.f32 0.0, %v501
  %v503 = vpop.f32.mrb[0].mxu0
  %v504 = vpop.f32.mrb[0].mxu0
  %v505 = vadd.f32 0.0, %v504
  %v506 = vpop.f32.mrb[0].mxu0
  %507 = vdwg.mxu0
  %v524 = vunpack.c.l.b16 %v374
  %v525 = vunpack.c.l.b16 %v375
  %v526 = vunpack.c.l.b16 %v376
  %v527 = vunpack.c.l.b16 %v377
  %v528 = vunpack.c.l.b16 %v378
  %v529 = vunpack.c.l.b16 %v379
  %v530 = vunpack.c.l.b16 %v380
  %v531 = vunpack.c.l.b16 %v381
  %v532 = vunpack.c.l.b16 %v382
  %v533 = vunpack.c.l.b16 %v383
  %v534 = vunpack.c.l.b16 %v384
  %v535 = vunpack.c.l.b16 %v385
  %v536 = vunpack.c.l.b16 %v386
  %v537 = vunpack.c.l.b16 %v387
  %v538 = vunpack.c.l.b16 %v388
  %v539 = vunpack.c.l.b16 %v389
  %v540 = vpack.c.b16 %v525, %v524
  %v541 = vpack.c.b16 %v527, %v526
  %v542 = vpack.c.b16 %v529, %v528
  %v543 = vpack.c.b16 %v531, %v530
  %v544 = vpack.c.b16 %v533, %v532
  %v545 = vpack.c.b16 %v535, %v534
  %v546 = vpack.c.b16 %v537, %v536
  %v547 = vpack.c.b16 %v539, %v538
  %556 = vmatprep.subr.bf16.mxu0 0
  %557 = vmatpush1.bf16.msra.mxu0 %v540
  %558 = vmatprep.subr.bf16.mxu0 0
  %559 = vmatpush1.bf16.msra.mxu0 %v541
  %560 = vmatprep.subr.bf16.mxu0 0
  %561 = vmatpush1.bf16.msra.mxu0 %v542
  %562 = vmatprep.subr.bf16.mxu0 0
  %563 = vmatpush1.bf16.msra.mxu0 %v543
  %564 = vmatprep.subr.bf16.mxu0 0
  %565 = vmatpush1.bf16.msra.mxu0 %v544
  %566 = vmatprep.subr.bf16.mxu0 0
  %567 = vmatpush1.bf16.msra.mxu0 %v545
  %568 = vmatprep.subr.bf16.mxu0 0
  %569 = vmatpush1.bf16.msra.mxu0 %v546
  %570 = vmatprep.subr.bf16.mxu0 0
  %571 = vmatpush1.bf16.msra.mxu0 %v547
  %572 = vmatprep.subr.bf16.mxu0 0
  %573 = vmatpush1.bf16.msra.mxu0 0
  %574 = vmatprep.subr.bf16.mxu0 0
  %575 = vmatpush1.bf16.msra.mxu0 0
  %576 = vmatprep.subr.bf16.mxu0 0
  %577 = vmatpush1.bf16.msra.mxu0 0
  %578 = vmatprep.subr.bf16.mxu0 0
  %579 = vmatpush1.bf16.msra.mxu0 0
  %580 = vmatprep.subr.bf16.mxu0 0
  %581 = vmatpush1.bf16.msra.mxu0 0
  %582 = vmatprep.subr.bf16.mxu0 0
  %583 = vmatpush1.bf16.msra.mxu0 0
  %584 = vmatprep.subr.bf16.mxu0 0
  %585 = vmatpush1.bf16.msra.mxu0 0
  %586 = vmatprep.subr.bf16.mxu0 0
  %587 = vmatpush1.bf16.msra.mxu0 0
  %588 = vmatprep.mubr.bf16.mxu0 0
  %589 = vmatmul.mubr.bf16.gmra.mrb[0].mxu0 %v390
  %v590 = vpop.f32.mrb[0].mxu0
  %v591 = vadd.f32 %v494, %v590
  %v592 = vpop.f32.mrb[0].mxu0
  %v593 = vpop.f32.mrb[0].mxu0
  %v594 = vadd.f32 %v497, %v593
  %v595 = vpop.f32.mrb[0].mxu0
  %596 = vmatprep.mubr.bf16.mxu0 0
  %597 = vmatmul.mubr.bf16.gmra.mrb[0].mxu0 %v391
  %v598 = vpop.f32.mrb[0].mxu0
  %v599 = vadd.f32 %v502, %v598
  %v600 = vpop.f32.mrb[0].mxu0
  %v601 = vpop.f32.mrb[0].mxu0
  %v602 = vadd.f32 %v505, %v601
  %v603 = vpop.f32.mrb[0].mxu0
  %604 = vdwg.mxu0
  %s605 = scalar_lea.vmem %s0, 192
  %v606 = vld [vmem:[%s605] sm:$0xf]
  %v607 = vld [vmem:[%s605 + $0x4] sm:$0xf]
  %v608 = vld [vmem:[%s605 + $0x8] sm:$0xf]
  %v609 = vld [vmem:[%s605 + $0xc] sm:$0xf]
  %v610 = vld [vmem:[%s605 + $0x10] sm:$0xf]
  %v611 = vld [vmem:[%s605 + $0x14] sm:$0xf]
  %v612 = vld [vmem:[%s605 + $0x18] sm:$0xf]
  %v613 = vld [vmem:[%s605 + $0x1c] sm:$0xf]
  %v614 = vld [vmem:[%s605 + $0x20] sm:$0xf]
  %v615 = vld [vmem:[%s605 + $0x24] sm:$0xf]
  %v616 = vld [vmem:[%s605 + $0x28] sm:$0xf]
  %v617 = vld [vmem:[%s605 + $0x2c] sm:$0xf]
  %v618 = vld [vmem:[%s605 + $0x30] sm:$0xf]
  %v619 = vld [vmem:[%s605 + $0x34] sm:$0xf]
  %v620 = vld [vmem:[%s605 + $0x38] sm:$0xf]
  %v621 = vld [vmem:[%s605 + $0x3c] sm:$0xf]
  %v622 = vpack.c.bf16 %v282, %v279
  %v623 = vpack.c.bf16 %v290, %v287
  %v624 = vpack.c.bf16 %v298, %v295
  %v625 = vpack.c.bf16 %v306, %v303
  %v626 = vpack.c.bf16 %v314, %v311
  %v627 = vpack.c.bf16 %v322, %v319
  %v644 = vunpack.c.l.b16 %v606
  %v645 = vunpack.c.l.b16 %v607
  %v646 = vunpack.c.l.b16 %v608
  %v647 = vunpack.c.l.b16 %v609
  %v648 = vunpack.c.l.b16 %v610
  %v649 = vunpack.c.l.b16 %v611
  %v650 = vunpack.c.l.b16 %v612
  %v651 = vunpack.c.l.b16 %v613
  %v652 = vunpack.c.l.b16 %v614
  %v653 = vunpack.c.l.b16 %v615
  %v654 = vunpack.c.l.b16 %v616
  %v655 = vunpack.c.l.b16 %v617
  %v656 = vunpack.c.l.b16 %v618
  %v657 = vunpack.c.l.b16 %v619
  %v658 = vunpack.c.l.b16 %v620
  %v659 = vunpack.c.l.b16 %v621
  %v660 = vpack.c.b16 %v645, %v644
  %v661 = vpack.c.b16 %v647, %v646
  %v662 = vpack.c.b16 %v649, %v648
  %v663 = vpack.c.b16 %v651, %v650
  %v664 = vpack.c.b16 %v653, %v652
  %v665 = vpack.c.b16 %v655, %v654
  %v666 = vpack.c.b16 %v657, %v656
  %v667 = vpack.c.b16 %v659, %v658
  %676 = vmatprep.subr.bf16.mxu0 0
  %677 = vmatpush1.bf16.msra.mxu0 %v660
  %678 = vmatprep.subr.bf16.mxu0 0
  %679 = vmatpush1.bf16.msra.mxu0 %v661
  %680 = vmatprep.subr.bf16.mxu0 0
  %681 = vmatpush1.bf16.msra.mxu0 %v662
  %682 = vmatprep.subr.bf16.mxu0 0
  %683 = vmatpush1.bf16.msra.mxu0 %v663
  %684 = vmatprep.subr.bf16.mxu0 0
  %685 = vmatpush1.bf16.msra.mxu0 %v664
  %686 = vmatprep.subr.bf16.mxu0 0
  %687 = vmatpush1.bf16.msra.mxu0 %v665
  %688 = vmatprep.subr.bf16.mxu0 0
  %689 = vmatpush1.bf16.msra.mxu0 %v666
  %690 = vmatprep.subr.bf16.mxu0 0
  %691 = vmatpush1.bf16.msra.mxu0 %v667
  %692 = vmatprep.subr.bf16.mxu0 0
  %693 = vmatpush1.bf16.msra.mxu0 0
  %694 = vmatprep.subr.bf16.mxu0 0
  %695 = vmatpush1.bf16.msra.mxu0 0
  %696 = vmatprep.subr.bf16.mxu0 0
  %697 = vmatpush1.bf16.msra.mxu0 0
  %698 = vmatprep.subr.bf16.mxu0 0
  %699 = vmatpush1.bf16.msra.mxu0 0
  %700 = vmatprep.subr.bf16.mxu0 0
  %701 = vmatpush1.bf16.msra.mxu0 0
  %702 = vmatprep.subr.bf16.mxu0 0
  %703 = vmatpush1.bf16.msra.mxu0 0
  %704 = vmatprep.subr.bf16.mxu0 0
  %705 = vmatpush1.bf16.msra.mxu0 0
  %706 = vmatprep.subr.bf16.mxu0 0
  %707 = vmatpush1.bf16.msra.mxu0 0
  %708 = vmatprep.mubr.bf16.mxu0 0
  %709 = vmatmul.mubr.bf16.gmra.mrb[0].mxu0 %v622
  %v710 = vpop.f32.mrb[0].mxu0
  %v711 = vadd.f32 0.0, %v710
  %v712 = vpop.f32.mrb[0].mxu0
  %v713 = vpop.f32.mrb[0].mxu0
  %v714 = vadd.f32 0.0, %v713
  %v715 = vpop.f32.mrb[0].mxu0
  %716 = vmatprep.mubr.bf16.mxu0 0
  %717 = vmatmul.mubr.bf16.gmra.mrb[0].mxu0 %v623
  %v718 = vpop.f32.mrb[0].mxu0
  %v719 = vadd.f32 0.0, %v718
  %v720 = vpop.f32.mrb[0].mxu0
  %v721 = vpop.f32.mrb[0].mxu0
  %v722 = vadd.f32 0.0, %v721
  %v723 = vpop.f32.mrb[0].mxu0
  %724 = vmatprep.mubr.bf16.mxu0 0
  %725 = vmatmul.mubr.bf16.gmra.mrb[0].mxu0 %v624
  %v726 = vpop.f32.mrb[0].mxu0
  %v727 = vadd.f32 0.0, %v726
  %v728 = vpop.f32.mrb[0].mxu0
  %v729 = vpop.f32.mrb[0].mxu0
  %v730 = vadd.f32 0.0, %v729
  %v731 = vpop.f32.mrb[0].mxu0
  %732 = vmatprep.mubr.bf16.mxu0 0
  %733 = vmatmul.mubr.bf16.gmra.mrb[0].mxu0 %v625
  %v734 = vpop.f32.mrb[0].mxu0
  %v735 = vadd.f32 0.0, %v734
  %v736 = vpop.f32.mrb[0].mxu0
  %v737 = vpop.f32.mrb[0].mxu0
  %v738 = vadd.f32 0.0, %v737
  %v739 = vpop.f32.mrb[0].mxu0
  %740 = vmatprep.mubr.bf16.mxu0 0
  %741 = vmatmul.mubr.bf16.gmra.mrb[0].mxu0 %v626
  %v742 = vpop.f32.mrb[0].mxu0
  %v743 = vadd.f32 0.0, %v742
  %v744 = vpop.f32.mrb[0].mxu0
  %v745 = vpop.f32.mrb[0].mxu0
  %v746 = vadd.f32 0.0, %v745
  %v747 = vpop.f32.mrb[0].mxu0
  %748 = vmatprep.mubr.bf16.mxu0 0
  %749 = vmatmul.mubr.bf16.gmra.mrb[0].mxu0 %v627
  %v750 = vpop.f32.mrb[0].mxu0
  %v751 = vadd.f32 0.0, %v750
  %v752 = vpop.f32.mrb[0].mxu0
  %v753 = vpop.f32.mrb[0].mxu0
  %v754 = vadd.f32 0.0, %v753
  %v755 = vpop.f32.mrb[0].mxu0
  %756 = vdwg.mxu0
  %s757 = scalar_lea.vmem %s0, 256
  %v758 = vld [vmem:[%s757] sm:$0xf]
  %v759 = vld [vmem:[%s757 + $0x4] sm:$0xf]
  %v760 = vld [vmem:[%s757 + $0x8] sm:$0xf]
  %v761 = vld [vmem:[%s757 + $0xc] sm:$0xf]
  %v762 = vld [vmem:[%s757 + $0x10] sm:$0xf]
  %v763 = vld [vmem:[%s757 + $0x14] sm:$0xf]
  %v764 = vld [vmem:[%s757 + $0x18] sm:$0xf]
  %v765 = vld [vmem:[%s757 + $0x1c] sm:$0xf]
  %v766 = vld [vmem:[%s757 + $0x20] sm:$0xf]
  %v767 = vld [vmem:[%s757 + $0x24] sm:$0xf]
  %v768 = vld [vmem:[%s757 + $0x28] sm:$0xf]
  %v769 = vld [vmem:[%s757 + $0x2c] sm:$0xf]
  %v770 = vld [vmem:[%s757 + $0x30] sm:$0xf]
  %v771 = vld [vmem:[%s757 + $0x34] sm:$0xf]
  %v772 = vld [vmem:[%s757 + $0x38] sm:$0xf]
  %v773 = vld [vmem:[%s757 + $0x3c] sm:$0xf]
  %v774 = vpack.c.bf16 %v594, %v591
  %v775 = vpack.c.bf16 %v602, %v599
  %v777 = vlaneseq
  %v778 = vshrl.u32 %v777, 7
  %v779 = vsub.s32 0, %v778
  %v780 = vrot.slane %v173, %v779
  %v798 = vunpack.c.l.b16 %v758
  %v799 = vunpack.c.l.b16 %v759
  %v800 = vunpack.c.l.b16 %v760
  %v801 = vunpack.c.l.b16 %v761
  %v802 = vunpack.c.l.b16 %v762
  %v803 = vunpack.c.l.b16 %v763
  %v804 = vunpack.c.l.b16 %v764
  %v805 = vunpack.c.l.b16 %v765
  %v806 = vunpack.c.l.b16 %v766
  %v807 = vunpack.c.l.b16 %v767
  %v808 = vunpack.c.l.b16 %v768
  %v809 = vunpack.c.l.b16 %v769
  %v810 = vunpack.c.l.b16 %v770
  %v811 = vunpack.c.l.b16 %v771
  %v812 = vunpack.c.l.b16 %v772
  %v813 = vunpack.c.l.b16 %v773
  %v814 = vpack.c.b16 %v799, %v798
  %v815 = vpack.c.b16 %v801, %v800
  %v816 = vpack.c.b16 %v803, %v802
  %v817 = vpack.c.b16 %v805, %v804
  %v818 = vpack.c.b16 %v807, %v806
  %v819 = vpack.c.b16 %v809, %v808
  %v820 = vpack.c.b16 %v811, %v810
  %v821 = vpack.c.b16 %v813, %v812
  %830 = vmatprep.subr.bf16.mxu0 0
  %831 = vmatpush1.bf16.msra.mxu0 %v814
  %832 = vmatprep.subr.bf16.mxu0 0
  %833 = vmatpush1.bf16.msra.mxu0 %v815
  %834 = vmatprep.subr.bf16.mxu0 0
  %835 = vmatpush1.bf16.msra.mxu0 %v816
  %836 = vmatprep.subr.bf16.mxu0 0
  %837 = vmatpush1.bf16.msra.mxu0 %v817
  %838 = vmatprep.subr.bf16.mxu0 0
  %839 = vmatpush1.bf16.msra.mxu0 %v818
  %840 = vmatprep.subr.bf16.mxu0 0
  %841 = vmatpush1.bf16.msra.mxu0 %v819
  %842 = vmatprep.subr.bf16.mxu0 0
  %843 = vmatpush1.bf16.msra.mxu0 %v820
  %844 = vmatprep.subr.bf16.mxu0 0
  %845 = vmatpush1.bf16.msra.mxu0 %v821
  %846 = vmatprep.subr.bf16.mxu0 0
  %847 = vmatpush1.bf16.msra.mxu0 0
  %848 = vmatprep.subr.bf16.mxu0 0
  %849 = vmatpush1.bf16.msra.mxu0 0
  %850 = vmatprep.subr.bf16.mxu0 0
  %851 = vmatpush1.bf16.msra.mxu0 0
  %852 = vmatprep.subr.bf16.mxu0 0
  %853 = vmatpush1.bf16.msra.mxu0 0
  %854 = vmatprep.subr.bf16.mxu0 0
  %855 = vmatpush1.bf16.msra.mxu0 0
  %856 = vmatprep.subr.bf16.mxu0 0
  %857 = vmatpush1.bf16.msra.mxu0 0
  %858 = vmatprep.subr.bf16.mxu0 0
  %859 = vmatpush1.bf16.msra.mxu0 0
  %860 = vmatprep.subr.bf16.mxu0 0
  %861 = vmatpush1.bf16.msra.mxu0 0
  %862 = vmatprep.mubr.bf16.mxu0 0
  %863 = vmatmul.mubr.bf16.gmra.mrb[0].mxu0 %v774
  %v864 = vpop.f32.mrb[0].mxu0
  %v865 = vadd.f32 %v780, %v864
  %v866 = vpop.f32.mrb[0].mxu0
  %v867 = vpop.f32.mrb[0].mxu0
  %v868 = vadd.f32 %v780, %v867
  %v869 = vpop.f32.mrb[0].mxu0
  %870 = vmatprep.mubr.bf16.mxu0 0
  %871 = vmatmul.mubr.bf16.gmra.mrb[0].mxu0 %v775
  %v872 = vpop.f32.mrb[0].mxu0
  %v873 = vadd.f32 %v780, %v872
  %v874 = vpop.f32.mrb[0].mxu0
  %v875 = vpop.f32.mrb[0].mxu0
  %v876 = vadd.f32 %v780, %v875
  %v877 = vpop.f32.mrb[0].mxu0
  %878 = vdwg.mxu0
  %v879 = vxor.u32 %v865, 2147483648
  %v880 = vxor.u32 %v868, 2147483648
  %v881 = vxor.u32 %v873, 2147483648
  %v882 = vxor.u32 %v876, 2147483648
  %v883 = vmul.f32 %v879, 1.442695
  %v884 = vpow.pop %v883
  %v885 = vmul.f32 %v880, 1.442695
  %v886 = vpow.pop %v885
  %v887 = vmul.f32 %v881, 1.442695
  %v888 = vpow.pop %v887
  %v889 = vmul.f32 %v882, 1.442695
  %v890 = vpow.pop %v889
  %v891 = vadd.f32 %v884, 1.0
  %v892 = vadd.f32 %v886, 1.0
  %v893 = vadd.f32 %v888, 1.0
  %v894 = vadd.f32 %v890, 1.0
  %v895 = vrcp.pop %v891
  %v896 = vmul.f32 1.0, %v895
  %v897 = vrcp.pop %v892
  %v898 = vmul.f32 1.0, %v897
  %v899 = vrcp.pop %v893
  %v900 = vmul.f32 1.0, %v899
  %v901 = vrcp.pop %v894
  %v902 = vmul.f32 1.0, %v901
  %v903 = vmul.f32 %v711, %v896
  %v904 = vmul.f32 %v714, %v898
  %v905 = vmul.f32 %v719, %v900
  %v906 = vmul.f32 %v722, %v902
  %v907 = vmul.f32 %v727, %v896
  %v908 = vmul.f32 %v730, %v898
  %v909 = vmul.f32 %v735, %v900
  %v910 = vmul.f32 %v738, %v902
  %v911 = vmul.f32 %v743, %v896
  %v912 = vmul.f32 %v746, %v898
  %v913 = vmul.f32 %v751, %v900
  %v914 = vmul.f32 %v754, %v902
  %s915 = scalar_lea.vmem %s0, 320
  %v916 = vld [vmem:[%s915] sm:$0xf]
  %v917 = vld [vmem:[%s915 + $0x4] sm:$0xf]
  %v918 = vld [vmem:[%s915 + $0x8] sm:$0xf]
  %v919 = vld [vmem:[%s915 + $0xc] sm:$0xf]
  %v920 = vld [vmem:[%s915 + $0x10] sm:$0xf]
  %v921 = vld [vmem:[%s915 + $0x14] sm:$0xf]
  %v922 = vld [vmem:[%s915 + $0x18] sm:$0xf]
  %v923 = vld [vmem:[%s915 + $0x1c] sm:$0xf]
  %v924 = vld [vmem:[%s915 + $0x20] sm:$0xf]
  %v925 = vld [vmem:[%s915 + $0x24] sm:$0xf]
  %v926 = vld [vmem:[%s915 + $0x28] sm:$0xf]
  %v927 = vld [vmem:[%s915 + $0x2c] sm:$0xf]
  %v928 = vld [vmem:[%s915 + $0x30] sm:$0xf]
  %v929 = vld [vmem:[%s915 + $0x34] sm:$0xf]
  %v930 = vld [vmem:[%s915 + $0x38] sm:$0xf]
  %v931 = vld [vmem:[%s915 + $0x3c] sm:$0xf]
  %v932 = vpack.c.bf16 %v904, %v903
  %v933 = vpack.c.bf16 %v906, %v905
  %v934 = vpack.c.bf16 %v908, %v907
  %v935 = vpack.c.bf16 %v910, %v909
  %v936 = vpack.c.bf16 %v912, %v911
  %v937 = vpack.c.bf16 %v914, %v913
  %v954 = vunpack.c.l.b16 %v916
  %v955 = vunpack.c.l.b16 %v917
  %v956 = vunpack.c.l.b16 %v918
  %v957 = vunpack.c.l.b16 %v919
  %v958 = vunpack.c.l.b16 %v920
  %v959 = vunpack.c.l.b16 %v921
  %v960 = vunpack.c.l.b16 %v922
  %v961 = vunpack.c.l.b16 %v923
  %v962 = vunpack.c.l.b16 %v924
  %v963 = vunpack.c.l.b16 %v925
  %v964 = vunpack.c.l.b16 %v926
  %v965 = vunpack.c.l.b16 %v927
  %v966 = vunpack.c.l.b16 %v928
  %v967 = vunpack.c.l.b16 %v929
  %v968 = vunpack.c.l.b16 %v930
  %v969 = vunpack.c.l.b16 %v931
  %v970 = vpack.c.b16 %v955, %v954
  %v971 = vpack.c.b16 %v957, %v956
  %v972 = vpack.c.b16 %v959, %v958
  %v973 = vpack.c.b16 %v961, %v960
  %v974 = vpack.c.b16 %v963, %v962
  %v975 = vpack.c.b16 %v965, %v964
  %v976 = vpack.c.b16 %v967, %v966
  %v977 = vpack.c.b16 %v969, %v968
  %986 = vmatprep.subr.bf16.mxu0 0
  %987 = vmatpush1.bf16.msra.mxu0 %v970
  %988 = vmatprep.subr.bf16.mxu0 0
  %989 = vmatpush1.bf16.msra.mxu0 %v971
  %990 = vmatprep.subr.bf16.mxu0 0
  %991 = vmatpush1.bf16.msra.mxu0 %v972
  %992 = vmatprep.subr.bf16.mxu0 0
  %993 = vmatpush1.bf16.msra.mxu0 %v973
  %994 = vmatprep.subr.bf16.mxu0 0
  %995 = vmatpush1.bf16.msra.mxu0 %v974
  %996 = vmatprep.subr.bf16.mxu0 0
  %997 = vmatpush1.bf16.msra.mxu0 %v975
  %998 = vmatprep.subr.bf16.mxu0 0
  %999 = vmatpush1.bf16.msra.mxu0 %v976
  %1000 = vmatprep.subr.bf16.mxu0 0
  %1001 = vmatpush1.bf16.msra.mxu0 %v977
  %1002 = vmatprep.subr.bf16.mxu0 0
  %1003 = vmatpush1.bf16.msra.mxu0 0
  %1004 = vmatprep.subr.bf16.mxu0 0
  %1005 = vmatpush1.bf16.msra.mxu0 0
  %1006 = vmatprep.subr.bf16.mxu0 0
  %1007 = vmatpush1.bf16.msra.mxu0 0
  %1008 = vmatprep.subr.bf16.mxu0 0
  %1009 = vmatpush1.bf16.msra.mxu0 0
  %1010 = vmatprep.subr.bf16.mxu0 0
  %1011 = vmatpush1.bf16.msra.mxu0 0
  %1012 = vmatprep.subr.bf16.mxu0 0
  %1013 = vmatpush1.bf16.msra.mxu0 0
  %1014 = vmatprep.subr.bf16.mxu0 0
  %1015 = vmatpush1.bf16.msra.mxu0 0
  %1016 = vmatprep.subr.bf16.mxu0 0
  %1017 = vmatpush1.bf16.msra.mxu0 0
  %1018 = vmatprep.mubr.bf16.mxu0 0
  %1019 = vmatmul.mubr.bf16.gmra.mrb[0].mxu0 %v932
  %v1020 = vpop.f32.mrb[0].mxu0
  %v1021 = vadd.f32 0.0, %v1020
  %v1022 = vpop.f32.mrb[0].mxu0
  %v1023 = vpop.f32.mrb[0].mxu0
  %v1024 = vadd.f32 0.0, %v1023
  %v1025 = vpop.f32.mrb[0].mxu0
  %1026 = vmatprep.mubr.bf16.mxu0 0
  %1027 = vmatmul.mubr.bf16.gmra.mrb[0].mxu0 %v933
  %v1028 = vpop.f32.mrb[0].mxu0
  %v1029 = vadd.f32 0.0, %v1028
  %v1030 = vpop.f32.mrb[0].mxu0
  %v1031 = vpop.f32.mrb[0].mxu0
  %v1032 = vadd.f32 0.0, %v1031
  %v1033 = vpop.f32.mrb[0].mxu0
  %1034 = vmatprep.mubr.bf16.mxu0 0
  %1035 = vmatmul.mubr.bf16.gmra.mrb[0].mxu0 %v934
  %v1036 = vpop.f32.mrb[0].mxu0
  %v1037 = vadd.f32 0.0, %v1036
  %v1038 = vpop.f32.mrb[0].mxu0
  %v1039 = vpop.f32.mrb[0].mxu0
  %v1040 = vadd.f32 0.0, %v1039
  %v1041 = vpop.f32.mrb[0].mxu0
  %1042 = vmatprep.mubr.bf16.mxu0 0
  %1043 = vmatmul.mubr.bf16.gmra.mrb[0].mxu0 %v935
  %v1044 = vpop.f32.mrb[0].mxu0
  %v1045 = vadd.f32 0.0, %v1044
  %v1046 = vpop.f32.mrb[0].mxu0
  %v1047 = vpop.f32.mrb[0].mxu0
  %v1048 = vadd.f32 0.0, %v1047
  %v1049 = vpop.f32.mrb[0].mxu0
  %1050 = vmatprep.mubr.bf16.mxu0 0
  %1051 = vmatmul.mubr.bf16.gmra.mrb[0].mxu0 %v936
  %v1052 = vpop.f32.mrb[0].mxu0
  %v1053 = vadd.f32 0.0, %v1052
  %v1054 = vpop.f32.mrb[0].mxu0
  %v1055 = vpop.f32.mrb[0].mxu0
  %v1056 = vadd.f32 0.0, %v1055
  %v1057 = vpop.f32.mrb[0].mxu0
  %1058 = vmatprep.mubr.bf16.mxu0 0
  %1059 = vmatmul.mubr.bf16.gmra.mrb[0].mxu0 %v937
  %v1060 = vpop.f32.mrb[0].mxu0
  %v1061 = vadd.f32 0.0, %v1060
  %v1062 = vpop.f32.mrb[0].mxu0
  %v1063 = vpop.f32.mrb[0].mxu0
  %v1064 = vadd.f32 0.0, %v1063
  %v1065 = vpop.f32.mrb[0].mxu0
  %1066 = vdwg.mxu0
  %v1067 = vmul.f32 %v903, %v1021
  %v1068 = vmul.f32 %v904, %v1024
  %v1069 = vmul.f32 %v905, %v1029
  %v1070 = vmul.f32 %v906, %v1032
  %v1071 = vmul.f32 %v907, %v1037
  %v1072 = vmul.f32 %v908, %v1040
  %v1073 = vmul.f32 %v909, %v1045
  %v1074 = vmul.f32 %v910, %v1048
  %v1075 = vadd.f32 %v1067, %v1071
  %v1076 = vadd.f32 %v1068, %v1072
  %v1077 = vadd.f32 %v1069, %v1073
  %v1078 = vadd.f32 %v1070, %v1074
  %v1079 = vmul.f32 %v911, %v1053
  %v1080 = vmul.f32 %v912, %v1056
  %v1081 = vmul.f32 %v913, %v1061
  %v1082 = vmul.f32 %v914, %v1064
  %v1083 = vadd.f32 %v1075, %v1079
  %v1084 = vadd.f32 %v1076, %v1080
  %v1085 = vadd.f32 %v1077, %v1081
  %v1086 = vadd.f32 %v1078, %v1082
  %v1087 = vmul.f32 %v1021, %v1021
  %v1088 = vmul.f32 %v1024, %v1024
  %v1089 = vmul.f32 %v1029, %v1029
  %v1090 = vmul.f32 %v1032, %v1032
  %v1091 = vmul.f32 %v1037, %v1037
  %v1092 = vmul.f32 %v1040, %v1040
  %v1093 = vmul.f32 %v1045, %v1045
  %v1094 = vmul.f32 %v1048, %v1048
  %v1095 = vadd.f32 %v1087, %v1091
  %v1096 = vadd.f32 %v1088, %v1092
  %v1097 = vadd.f32 %v1089, %v1093
  %v1098 = vadd.f32 %v1090, %v1094
  %v1099 = vmul.f32 %v1053, %v1053
  %v1100 = vmul.f32 %v1056, %v1056
  %v1101 = vmul.f32 %v1061, %v1061
  %v1102 = vmul.f32 %v1064, %v1064
  %v1103 = vadd.f32 %v1095, %v1099
  %v1104 = vadd.f32 %v1096, %v1100
  %v1105 = vadd.f32 %v1097, %v1101
  %v1106 = vadd.f32 %v1098, %v1102
  %vm1107 = vcmp.ge.f32.partialorder %v1083, 0.0
  %vm1108 = vcmp.ge.f32.partialorder %v1084, 0.0
  %vm1109 = vcmp.ge.f32.partialorder %v1085, 0.0
  %vm1110 = vcmp.ge.f32.partialorder %v1086, 0.0
  %v1111 = vadd.f32 %v1103, 1e-06
  %v1112 = vadd.f32 %v1104, 1e-06
  %v1113 = vadd.f32 %v1105, 1e-06
  %v1114 = vadd.f32 %v1106, 1e-06
  %v1115 = vrcp.pop %v1111
  %v1116 = vmul.f32 %v1083, %v1115
  %v1117 = vrcp.pop %v1112
  %v1118 = vmul.f32 %v1084, %v1117
  %v1119 = vrcp.pop %v1113
  %v1120 = vmul.f32 %v1085, %v1119
  %v1121 = vrcp.pop %v1114
  %v1122 = vmul.f32 %v1086, %v1121
  %v1123 = vsel %vm1107, 0.0, %v1116
  %v1124 = vsel %vm1108, 0.0, %v1118
  %v1125 = vsel %vm1109, 0.0, %v1120
  %v1126 = vsel %vm1110, 0.0, %v1122
  %v1127 = vmul.f32 %v1123, %v1021
  %v1128 = vmul.f32 %v1124, %v1024
  %v1129 = vmul.f32 %v1125, %v1029
  %v1130 = vmul.f32 %v1126, %v1032
  %v1131 = vsub.f32 %v903, %v1127
  %v1132 = vsub.f32 %v904, %v1128
  %v1133 = vsub.f32 %v905, %v1129
  %v1134 = vsub.f32 %v906, %v1130
  %v1135 = vmul.f32 %v1123, %v1037
  %v1136 = vmul.f32 %v1124, %v1040
  %v1137 = vmul.f32 %v1125, %v1045
  %v1138 = vmul.f32 %v1126, %v1048
  %v1139 = vsub.f32 %v907, %v1135
  %v1140 = vsub.f32 %v908, %v1136
  %v1141 = vsub.f32 %v909, %v1137
  %v1142 = vsub.f32 %v910, %v1138
  %v1143 = vmul.f32 %v1123, %v1053
  %v1144 = vmul.f32 %v1124, %v1056
  %v1145 = vmul.f32 %v1125, %v1061
  %v1146 = vmul.f32 %v1126, %v1064
  %v1147 = vsub.f32 %v911, %v1143
  %v1148 = vsub.f32 %v912, %v1144
  %v1149 = vsub.f32 %v913, %v1145
  %v1150 = vsub.f32 %v914, %v1146
  %v1151 = vmul.f32 %v903, 0.01
  %v1152 = vmul.f32 %v904, 0.01
  %v1153 = vmul.f32 %v905, 0.01
  %v1154 = vmul.f32 %v906, 0.01
  %v1155 = vmul.f32 %v907, 0.01
  %v1156 = vmul.f32 %v908, 0.01
  %v1157 = vmul.f32 %v909, 0.01
  %v1158 = vmul.f32 %v910, 0.01
  %v1159 = vmul.f32 %v911, 0.01
  %v1160 = vmul.f32 %v912, 0.01
  %v1161 = vmul.f32 %v913, 0.01
  %v1162 = vmul.f32 %v914, 0.01
  %v1163 = vmul.f32 %v1131, 0.99
  %v1164 = vmul.f32 %v1132, 0.99
  %v1165 = vmul.f32 %v1133, 0.99
  %v1166 = vmul.f32 %v1134, 0.99
  %v1167 = vmul.f32 %v1139, 0.99
  %v1168 = vmul.f32 %v1140, 0.99
  %v1169 = vmul.f32 %v1141, 0.99
  %v1170 = vmul.f32 %v1142, 0.99
  %v1171 = vmul.f32 %v1147, 0.99
  %v1172 = vmul.f32 %v1148, 0.99
  %v1173 = vmul.f32 %v1149, 0.99
  %v1174 = vmul.f32 %v1150, 0.99
  %v1175 = vadd.f32 %v1151, %v1163
  %v1176 = vadd.f32 %v1152, %v1164
  %v1177 = vadd.f32 %v1153, %v1165
  %v1178 = vadd.f32 %v1154, %v1166
  %v1179 = vadd.f32 %v1155, %v1167
  %v1180 = vadd.f32 %v1156, %v1168
  %v1181 = vadd.f32 %v1157, %v1169
  %v1182 = vadd.f32 %v1158, %v1170
  %v1183 = vadd.f32 %v1159, %v1171
  %v1184 = vadd.f32 %v1160, %v1172
  %v1185 = vadd.f32 %v1161, %v1173
  %v1186 = vadd.f32 %v1162, %v1174
  %vm1187 = vcmp.ge.f32.partialorder %v591, 0.0
  %vm1188 = vcmp.ge.f32.partialorder %v594, 0.0
  %vm1189 = vcmp.ge.f32.partialorder %v599, 0.0
  %vm1190 = vcmp.ge.f32.partialorder %v602, 0.0
  %v1191 = vmul.f32 %v591, 0.01
  %v1192 = vmul.f32 %v594, 0.01
  %v1193 = vmul.f32 %v599, 0.01
  %v1194 = vmul.f32 %v602, 0.01
  %v1195 = vsel %vm1187, %v591, %v1191
  %v1196 = vsel %vm1188, %v594, %v1192
  %v1197 = vsel %vm1189, %v599, %v1193
  %v1198 = vsel %vm1190, %v602, %v1194
  %v1199 = vpack.c.bf16 %v1196, %v1195
  %v1200 = vpack.c.bf16 %v1198, %v1197
  %v1201 = vld [vmem:[%s2 + $0x4] sm:$0xf]
  %v1202 = vld [vmem:[%s2 + $0x18] sm:$0xf]
  %v1203 = vld [vmem:[%s2 + $0x2c] sm:$0xf]
  %v1204 = vld [vmem:[%s2 + $0x40] sm:$0xf]
  %v1205 = vld [vmem:[%s2 + $0x8] sm:$0xf]
  %v1206 = vld [vmem:[%s2 + $0x1c] sm:$0xf]
  %v1207 = vld [vmem:[%s2 + $0x30] sm:$0xf]
  %v1208 = vld [vmem:[%s2 + $0x44] sm:$0xf]
  %v1209 = vunpack.c.l.bf16 %v1205
  %v1210 = vunpack.c.l.bf16 %v1206
  %v1211 = vunpack.c.l.bf16 %v1207
  %v1212 = vunpack.c.l.bf16 %v1208
  %v1213 = vld [vmem:[%s2 + $0xc] sm:$0xf]
  %v1214 = vld [vmem:[%s2 + $0x20] sm:$0xf]
  %v1215 = vld [vmem:[%s2 + $0x34] sm:$0xf]
  %v1216 = vld [vmem:[%s2 + $0x48] sm:$0xf]
  %v1217 = vunpack.c.l.bf16 %v1213
  %v1218 = vunpack.c.l.bf16 %v1214
  %v1219 = vunpack.c.l.bf16 %v1215
  %v1220 = vunpack.c.l.bf16 %v1216
  %v1221 = vld [vmem:[%s2 + $0x10] sm:$0xf]
  %v1222 = vld [vmem:[%s2 + $0x24] sm:$0xf]
  %v1223 = vld [vmem:[%s2 + $0x38] sm:$0xf]
  %v1224 = vld [vmem:[%s2 + $0x4c] sm:$0xf]
  %v1225 = vunpack.c.l.bf16 %v1221
  %v1226 = vunpack.c.l.bf16 %v1222
  %v1227 = vunpack.c.l.bf16 %v1223
  %v1228 = vunpack.c.l.bf16 %v1224
  %v1229 = vunpack.c.l.bf16 %v1201
  %v1230 = vunpack.c.l.bf16 %v1202
  %v1231 = vunpack.c.l.bf16 %v1203
  %v1232 = vunpack.c.l.bf16 %v1204
  %s1233 = scalar_lea.vmem %s0, 384
  %v1234 = vld [vmem:[%s1233] sm:$0xf]
  %v1235 = vld [vmem:[%s1233 + $0x4] sm:$0xf]
  %v1236 = vld [vmem:[%s1233 + $0x8] sm:$0xf]
  %v1237 = vld [vmem:[%s1233 + $0xc] sm:$0xf]
  %v1238 = vld [vmem:[%s1233 + $0x10] sm:$0xf]
  %v1239 = vld [vmem:[%s1233 + $0x14] sm:$0xf]
  %v1240 = vld [vmem:[%s1233 + $0x18] sm:$0xf]
  %v1241 = vld [vmem:[%s1233 + $0x1c] sm:$0xf]
  %v1242 = vld [vmem:[%s1233 + $0x20] sm:$0xf]
  %v1243 = vld [vmem:[%s1233 + $0x24] sm:$0xf]
  %v1244 = vld [vmem:[%s1233 + $0x28] sm:$0xf]
  %v1245 = vld [vmem:[%s1233 + $0x2c] sm:$0xf]
  %v1246 = vld [vmem:[%s1233 + $0x30] sm:$0xf]
  %v1247 = vld [vmem:[%s1233 + $0x34] sm:$0xf]
  %v1248 = vld [vmem:[%s1233 + $0x38] sm:$0xf]
  %v1249 = vld [vmem:[%s1233 + $0x3c] sm:$0xf]
  %s1250 = scalar_lea.vmem %s1, 1
  %v1251 = vld [vmem:[%s1250] sm:$0x1]
  %v1253 = vlaneseq
  %v1254 = vshrl.u32 %v1253, 7
  %v1255 = vsub.s32 0, %v1254
  %v1256 = vrot.slane %v1251, %v1255
  %v1274 = vunpack.c.l.b16 %v1234
  %v1275 = vunpack.c.l.b16 %v1235
  %v1276 = vunpack.c.l.b16 %v1236
  %v1277 = vunpack.c.l.b16 %v1237
  %v1278 = vunpack.c.l.b16 %v1238
  %v1279 = vunpack.c.l.b16 %v1239
  %v1280 = vunpack.c.l.b16 %v1240
  %v1281 = vunpack.c.l.b16 %v1241
  %v1282 = vunpack.c.l.b16 %v1242
  %v1283 = vunpack.c.l.b16 %v1243
  %v1284 = vunpack.c.l.b16 %v1244
  %v1285 = vunpack.c.l.b16 %v1245
  %v1286 = vunpack.c.l.b16 %v1246
  %v1287 = vunpack.c.l.b16 %v1247
  %v1288 = vunpack.c.l.b16 %v1248
  %v1289 = vunpack.c.l.b16 %v1249
  %v1290 = vpack.c.b16 %v1275, %v1274
  %v1291 = vpack.c.b16 %v1277, %v1276
  %v1292 = vpack.c.b16 %v1279, %v1278
  %v1293 = vpack.c.b16 %v1281, %v1280
  %v1294 = vpack.c.b16 %v1283, %v1282
  %v1295 = vpack.c.b16 %v1285, %v1284
  %v1296 = vpack.c.b16 %v1287, %v1286
  %v1297 = vpack.c.b16 %v1289, %v1288
  %1306 = vmatprep.subr.bf16.mxu0 0
  %1307 = vmatpush1.bf16.msra.mxu0 %v1290
  %1308 = vmatprep.subr.bf16.mxu0 0
  %1309 = vmatpush1.bf16.msra.mxu0 %v1291
  %1310 = vmatprep.subr.bf16.mxu0 0
  %1311 = vmatpush1.bf16.msra.mxu0 %v1292
  %1312 = vmatprep.subr.bf16.mxu0 0
  %1313 = vmatpush1.bf16.msra.mxu0 %v1293
  %1314 = vmatprep.subr.bf16.mxu0 0
  %1315 = vmatpush1.bf16.msra.mxu0 %v1294
  %1316 = vmatprep.subr.bf16.mxu0 0
  %1317 = vmatpush1.bf16.msra.mxu0 %v1295
  %1318 = vmatprep.subr.bf16.mxu0 0
  %1319 = vmatpush1.bf16.msra.mxu0 %v1296
  %1320 = vmatprep.subr.bf16.mxu0 0
  %1321 = vmatpush1.bf16.msra.mxu0 %v1297
  %1322 = vmatprep.subr.bf16.mxu0 0
  %1323 = vmatpush1.bf16.msra.mxu0 0
  %1324 = vmatprep.subr.bf16.mxu0 0
  %1325 = vmatpush1.bf16.msra.mxu0 0
  %1326 = vmatprep.subr.bf16.mxu0 0
  %1327 = vmatpush1.bf16.msra.mxu0 0
  %1328 = vmatprep.subr.bf16.mxu0 0
  %1329 = vmatpush1.bf16.msra.mxu0 0
  %1330 = vmatprep.subr.bf16.mxu0 0
  %1331 = vmatpush1.bf16.msra.mxu0 0
  %1332 = vmatprep.subr.bf16.mxu0 0
  %1333 = vmatpush1.bf16.msra.mxu0 0
  %1334 = vmatprep.subr.bf16.mxu0 0
  %1335 = vmatpush1.bf16.msra.mxu0 0
  %1336 = vmatprep.subr.bf16.mxu0 0
  %1337 = vmatpush1.bf16.msra.mxu0 0
  %1338 = vmatprep.mubr.bf16.mxu0 0
  %1339 = vmatmul.mubr.bf16.gmra.mrb[0].mxu0 %v1199
  %v1340 = vpop.f32.mrb[0].mxu0
  %v1341 = vadd.f32 %v1256, %v1340
  %v1342 = vpop.f32.mrb[0].mxu0
  %v1343 = vpop.f32.mrb[0].mxu0
  %v1344 = vadd.f32 %v1256, %v1343
  %v1345 = vpop.f32.mrb[0].mxu0
  %1346 = vmatprep.mubr.bf16.mxu0 0
  %1347 = vmatmul.mubr.bf16.gmra.mrb[0].mxu0 %v1200
  %v1348 = vpop.f32.mrb[0].mxu0
  %v1349 = vadd.f32 %v1256, %v1348
  %v1350 = vpop.f32.mrb[0].mxu0
  %v1351 = vpop.f32.mrb[0].mxu0
  %v1352 = vadd.f32 %v1256, %v1351
  %v1353 = vpop.f32.mrb[0].mxu0
  %1354 = vdwg.mxu0
  %v1355 = vmul.f32 %v1229, %v1341
  %v1356 = vmul.f32 %v1230, %v1344
  %v1357 = vmul.f32 %v1231, %v1349
  %v1358 = vmul.f32 %v1232, %v1352
  %s1359 = scalar_lea.vmem %s0, 448
  %v1360 = vld [vmem:[%s1359] sm:$0xf]
  %v1361 = vld [vmem:[%s1359 + $0x4] sm:$0xf]
  %v1362 = vld [vmem:[%s1359 + $0x8] sm:$0xf]
  %v1363 = vld [vmem:[%s1359 + $0xc] sm:$0xf]
  %v1364 = vld [vmem:[%s1359 + $0x10] sm:$0xf]
  %v1365 = vld [vmem:[%s1359 + $0x14] sm:$0xf]
  %v1366 = vld [vmem:[%s1359 + $0x18] sm:$0xf]
  %v1367 = vld [vmem:[%s1359 + $0x1c] sm:$0xf]
  %v1368 = vld [vmem:[%s1359 + $0x20] sm:$0xf]
  %v1369 = vld [vmem:[%s1359 + $0x24] sm:$0xf]
  %v1370 = vld [vmem:[%s1359 + $0x28] sm:$0xf]
  %v1371 = vld [vmem:[%s1359 + $0x2c] sm:$0xf]
  %v1372 = vld [vmem:[%s1359 + $0x30] sm:$0xf]
  %v1373 = vld [vmem:[%s1359 + $0x34] sm:$0xf]
  %v1374 = vld [vmem:[%s1359 + $0x38] sm:$0xf]
  %v1375 = vld [vmem:[%s1359 + $0x3c] sm:$0xf]
  %s1376 = scalar_lea.vmem %s1, 2
  %v1377 = vld [vmem:[%s1376] sm:$0x1]
  %v1379 = vlaneseq
  %v1380 = vshrl.u32 %v1379, 7
  %v1381 = vsub.s32 0, %v1380
  %v1382 = vrot.slane %v1377, %v1381
  %v1400 = vunpack.c.l.b16 %v1360
  %v1401 = vunpack.c.l.b16 %v1361
  %v1402 = vunpack.c.l.b16 %v1362
  %v1403 = vunpack.c.l.b16 %v1363
  %v1404 = vunpack.c.l.b16 %v1364
  %v1405 = vunpack.c.l.b16 %v1365
  %v1406 = vunpack.c.l.b16 %v1366
  %v1407 = vunpack.c.l.b16 %v1367
  %v1408 = vunpack.c.l.b16 %v1368
  %v1409 = vunpack.c.l.b16 %v1369
  %v1410 = vunpack.c.l.b16 %v1370
  %v1411 = vunpack.c.l.b16 %v1371
  %v1412 = vunpack.c.l.b16 %v1372
  %v1413 = vunpack.c.l.b16 %v1373
  %v1414 = vunpack.c.l.b16 %v1374
  %v1415 = vunpack.c.l.b16 %v1375
  %v1416 = vpack.c.b16 %v1401, %v1400
  %v1417 = vpack.c.b16 %v1403, %v1402
  %v1418 = vpack.c.b16 %v1405, %v1404
  %v1419 = vpack.c.b16 %v1407, %v1406
  %v1420 = vpack.c.b16 %v1409, %v1408
  %v1421 = vpack.c.b16 %v1411, %v1410
  %v1422 = vpack.c.b16 %v1413, %v1412
  %v1423 = vpack.c.b16 %v1415, %v1414
  %1432 = vmatprep.subr.bf16.mxu0 0
  %1433 = vmatpush1.bf16.msra.mxu0 %v1416
  %1434 = vmatprep.subr.bf16.mxu0 0
  %1435 = vmatpush1.bf16.msra.mxu0 %v1417
  %1436 = vmatprep.subr.bf16.mxu0 0
  %1437 = vmatpush1.bf16.msra.mxu0 %v1418
  %1438 = vmatprep.subr.bf16.mxu0 0
  %1439 = vmatpush1.bf16.msra.mxu0 %v1419
  %1440 = vmatprep.subr.bf16.mxu0 0
  %1441 = vmatpush1.bf16.msra.mxu0 %v1420
  %1442 = vmatprep.subr.bf16.mxu0 0
  %1443 = vmatpush1.bf16.msra.mxu0 %v1421
  %1444 = vmatprep.subr.bf16.mxu0 0
  %1445 = vmatpush1.bf16.msra.mxu0 %v1422
  %1446 = vmatprep.subr.bf16.mxu0 0
  %1447 = vmatpush1.bf16.msra.mxu0 %v1423
  %1448 = vmatprep.subr.bf16.mxu0 0
  %1449 = vmatpush1.bf16.msra.mxu0 0
  %1450 = vmatprep.subr.bf16.mxu0 0
  %1451 = vmatpush1.bf16.msra.mxu0 0
  %1452 = vmatprep.subr.bf16.mxu0 0
  %1453 = vmatpush1.bf16.msra.mxu0 0
  %1454 = vmatprep.subr.bf16.mxu0 0
  %1455 = vmatpush1.bf16.msra.mxu0 0
  %1456 = vmatprep.subr.bf16.mxu0 0
  %1457 = vmatpush1.bf16.msra.mxu0 0
  %1458 = vmatprep.subr.bf16.mxu0 0
  %1459 = vmatpush1.bf16.msra.mxu0 0
  %1460 = vmatprep.subr.bf16.mxu0 0
  %1461 = vmatpush1.bf16.msra.mxu0 0
  %1462 = vmatprep.subr.bf16.mxu0 0
  %1463 = vmatpush1.bf16.msra.mxu0 0
  %1464 = vmatprep.mubr.bf16.mxu0 0
  %1465 = vmatmul.mubr.bf16.gmra.mrb[0].mxu0 %v1199
  %v1466 = vpop.f32.mrb[0].mxu0
  %v1467 = vadd.f32 %v1382, %v1466
  %v1468 = vpop.f32.mrb[0].mxu0
  %v1469 = vpop.f32.mrb[0].mxu0
  %v1470 = vadd.f32 %v1382, %v1469
  %v1471 = vpop.f32.mrb[0].mxu0
  %1472 = vmatprep.mubr.bf16.mxu0 0
  %1473 = vmatmul.mubr.bf16.gmra.mrb[0].mxu0 %v1200
  %v1474 = vpop.f32.mrb[0].mxu0
  %v1475 = vadd.f32 %v1382, %v1474
  %v1476 = vpop.f32.mrb[0].mxu0
  %v1477 = vpop.f32.mrb[0].mxu0
  %v1478 = vadd.f32 %v1382, %v1477
  %v1479 = vpop.f32.mrb[0].mxu0
  %1480 = vdwg.mxu0
  %s1481 = scalar_lea.vmem %s0, 512
  %v1482 = vld [vmem:[%s1481] sm:$0xf]
  %v1483 = vld [vmem:[%s1481 + $0x4] sm:$0xf]
  %v1484 = vld [vmem:[%s1481 + $0x8] sm:$0xf]
  %v1485 = vld [vmem:[%s1481 + $0xc] sm:$0xf]
  %v1486 = vld [vmem:[%s1481 + $0x10] sm:$0xf]
  %v1487 = vld [vmem:[%s1481 + $0x14] sm:$0xf]
  %v1488 = vld [vmem:[%s1481 + $0x18] sm:$0xf]
  %v1489 = vld [vmem:[%s1481 + $0x1c] sm:$0xf]
  %v1490 = vld [vmem:[%s1481 + $0x20] sm:$0xf]
  %v1491 = vld [vmem:[%s1481 + $0x24] sm:$0xf]
  %v1492 = vld [vmem:[%s1481 + $0x28] sm:$0xf]
  %v1493 = vld [vmem:[%s1481 + $0x2c] sm:$0xf]
  %v1494 = vld [vmem:[%s1481 + $0x30] sm:$0xf]
  %v1495 = vld [vmem:[%s1481 + $0x34] sm:$0xf]
  %v1496 = vld [vmem:[%s1481 + $0x38] sm:$0xf]
  %v1497 = vld [vmem:[%s1481 + $0x3c] sm:$0xf]
  %s1498 = scalar_lea.vmem %s1, 3
  %v1499 = vld [vmem:[%s1498] sm:$0x1]
  %v1501 = vlaneseq
  %v1502 = vshrl.u32 %v1501, 7
  %v1503 = vsub.s32 0, %v1502
  %v1504 = vrot.slane %v1499, %v1503
  %v1510 = vunpack.c.l.b16 %v1201
  %v1511 = vunpack.c.l.b16 %v1202
  %v1512 = vunpack.c.l.b16 %v1203
  %v1513 = vunpack.c.l.b16 %v1204
  %v1514 = vpack.c.b16 %v1511, %v1510
  %v1515 = vpack.c.b16 %v1513, %v1512
  %v1534 = vunpack.c.l.b16 %v1482
  %v1535 = vunpack.c.l.b16 %v1483
  %v1536 = vunpack.c.l.b16 %v1484
  %v1537 = vunpack.c.l.b16 %v1485
  %v1538 = vunpack.c.l.b16 %v1486
  %v1539 = vunpack.c.l.b16 %v1487
  %v1540 = vunpack.c.l.b16 %v1488
  %v1541 = vunpack.c.l.b16 %v1489
  %v1542 = vunpack.c.l.b16 %v1490
  %v1543 = vunpack.c.l.b16 %v1491
  %v1544 = vunpack.c.l.b16 %v1492
  %v1545 = vunpack.c.l.b16 %v1493
  %v1546 = vunpack.c.l.b16 %v1494
  %v1547 = vunpack.c.l.b16 %v1495
  %v1548 = vunpack.c.l.b16 %v1496
  %v1549 = vunpack.c.l.b16 %v1497
  %v1550 = vpack.c.b16 %v1535, %v1534
  %v1551 = vpack.c.b16 %v1537, %v1536
  %v1552 = vpack.c.b16 %v1539, %v1538
  %v1553 = vpack.c.b16 %v1541, %v1540
  %v1554 = vpack.c.b16 %v1543, %v1542
  %v1555 = vpack.c.b16 %v1545, %v1544
  %v1556 = vpack.c.b16 %v1547, %v1546
  %v1557 = vpack.c.b16 %v1549, %v1548
  %1566 = vmatprep.subr.bf16.mxu0 0
  %1567 = vmatpush1.bf16.msra.mxu0 %v1550
  %1568 = vmatprep.subr.bf16.mxu0 0
  %1569 = vmatpush1.bf16.msra.mxu0 %v1551
  %1570 = vmatprep.subr.bf16.mxu0 0
  %1571 = vmatpush1.bf16.msra.mxu0 %v1552
  %1572 = vmatprep.subr.bf16.mxu0 0
  %1573 = vmatpush1.bf16.msra.mxu0 %v1553
  %1574 = vmatprep.subr.bf16.mxu0 0
  %1575 = vmatpush1.bf16.msra.mxu0 %v1554
  %1576 = vmatprep.subr.bf16.mxu0 0
  %1577 = vmatpush1.bf16.msra.mxu0 %v1555
  %1578 = vmatprep.subr.bf16.mxu0 0
  %1579 = vmatpush1.bf16.msra.mxu0 %v1556
  %1580 = vmatprep.subr.bf16.mxu0 0
  %1581 = vmatpush1.bf16.msra.mxu0 %v1557
  %1582 = vmatprep.subr.bf16.mxu0 0
  %1583 = vmatpush1.bf16.msra.mxu0 0
  %1584 = vmatprep.subr.bf16.mxu0 0
  %1585 = vmatpush1.bf16.msra.mxu0 0
  %1586 = vmatprep.subr.bf16.mxu0 0
  %1587 = vmatpush1.bf16.msra.mxu0 0
  %1588 = vmatprep.subr.bf16.mxu0 0
  %1589 = vmatpush1.bf16.msra.mxu0 0
  %1590 = vmatprep.subr.bf16.mxu0 0
  %1591 = vmatpush1.bf16.msra.mxu0 0
  %1592 = vmatprep.subr.bf16.mxu0 0
  %1593 = vmatpush1.bf16.msra.mxu0 0
  %1594 = vmatprep.subr.bf16.mxu0 0
  %1595 = vmatpush1.bf16.msra.mxu0 0
  %1596 = vmatprep.subr.bf16.mxu0 0
  %1597 = vmatpush1.bf16.msra.mxu0 0
  %1598 = vmatprep.mubr.bf16.mxu0 0
  %1599 = vmatmul.mubr.bf16.gmra.mrb[0].mxu0 %v1514
  %v1600 = vpop.f32.mrb[0].mxu0
  %v1601 = vadd.f32 %v1504, %v1600
  %v1602 = vpop.f32.mrb[0].mxu0
  %v1603 = vpop.f32.mrb[0].mxu0
  %v1604 = vadd.f32 %v1504, %v1603
  %v1605 = vpop.f32.mrb[0].mxu0
  %1606 = vmatprep.mubr.bf16.mxu0 0
  %1607 = vmatmul.mubr.bf16.gmra.mrb[0].mxu0 %v1515
  %v1608 = vpop.f32.mrb[0].mxu0
  %v1609 = vadd.f32 %v1504, %v1608
  %v1610 = vpop.f32.mrb[0].mxu0
  %v1611 = vpop.f32.mrb[0].mxu0
  %v1612 = vadd.f32 %v1504, %v1611
  %v1613 = vpop.f32.mrb[0].mxu0
  %1614 = vdwg.mxu0
  %s1615 = scalar_lea.vmem %s0, 576
  %v1616 = vld [vmem:[%s1615] sm:$0xf]
  %v1617 = vld [vmem:[%s1615 + $0x4] sm:$0xf]
  %v1618 = vld [vmem:[%s1615 + $0x8] sm:$0xf]
  %v1619 = vld [vmem:[%s1615 + $0xc] sm:$0xf]
  %v1620 = vld [vmem:[%s1615 + $0x10] sm:$0xf]
  %v1621 = vld [vmem:[%s1615 + $0x14] sm:$0xf]
  %v1622 = vld [vmem:[%s1615 + $0x18] sm:$0xf]
  %v1623 = vld [vmem:[%s1615 + $0x1c] sm:$0xf]
  %v1624 = vld [vmem:[%s1615 + $0x20] sm:$0xf]
  %v1625 = vld [vmem:[%s1615 + $0x24] sm:$0xf]
  %v1626 = vld [vmem:[%s1615 + $0x28] sm:$0xf]
  %v1627 = vld [vmem:[%s1615 + $0x2c] sm:$0xf]
  %v1628 = vld [vmem:[%s1615 + $0x30] sm:$0xf]
  %v1629 = vld [vmem:[%s1615 + $0x34] sm:$0xf]
  %v1630 = vld [vmem:[%s1615 + $0x38] sm:$0xf]
  %v1631 = vld [vmem:[%s1615 + $0x3c] sm:$0xf]
  %v1632 = vpack.c.bf16 %v1176, %v1175
  %v1633 = vpack.c.bf16 %v1178, %v1177
  %v1634 = vpack.c.bf16 %v1180, %v1179
  %v1635 = vpack.c.bf16 %v1182, %v1181
  %v1636 = vpack.c.bf16 %v1184, %v1183
  %v1637 = vpack.c.bf16 %v1186, %v1185
  %v1654 = vunpack.c.l.b16 %v1616
  %v1655 = vunpack.c.l.b16 %v1617
  %v1656 = vunpack.c.l.b16 %v1618
  %v1657 = vunpack.c.l.b16 %v1619
  %v1658 = vunpack.c.l.b16 %v1620
  %v1659 = vunpack.c.l.b16 %v1621
  %v1660 = vunpack.c.l.b16 %v1622
  %v1661 = vunpack.c.l.b16 %v1623
  %v1662 = vunpack.c.l.b16 %v1624
  %v1663 = vunpack.c.l.b16 %v1625
  %v1664 = vunpack.c.l.b16 %v1626
  %v1665 = vunpack.c.l.b16 %v1627
  %v1666 = vunpack.c.l.b16 %v1628
  %v1667 = vunpack.c.l.b16 %v1629
  %v1668 = vunpack.c.l.b16 %v1630
  %v1669 = vunpack.c.l.b16 %v1631
  %v1670 = vpack.c.b16 %v1655, %v1654
  %v1671 = vpack.c.b16 %v1657, %v1656
  %v1672 = vpack.c.b16 %v1659, %v1658
  %v1673 = vpack.c.b16 %v1661, %v1660
  %v1674 = vpack.c.b16 %v1663, %v1662
  %v1675 = vpack.c.b16 %v1665, %v1664
  %v1676 = vpack.c.b16 %v1667, %v1666
  %v1677 = vpack.c.b16 %v1669, %v1668
  %1686 = vmatprep.subr.bf16.mxu0 0
  %1687 = vmatpush1.bf16.msra.mxu0 %v1670
  %1688 = vmatprep.subr.bf16.mxu0 0
  %1689 = vmatpush1.bf16.msra.mxu0 %v1671
  %1690 = vmatprep.subr.bf16.mxu0 0
  %1691 = vmatpush1.bf16.msra.mxu0 %v1672
  %1692 = vmatprep.subr.bf16.mxu0 0
  %1693 = vmatpush1.bf16.msra.mxu0 %v1673
  %1694 = vmatprep.subr.bf16.mxu0 0
  %1695 = vmatpush1.bf16.msra.mxu0 %v1674
  %1696 = vmatprep.subr.bf16.mxu0 0
  %1697 = vmatpush1.bf16.msra.mxu0 %v1675
  %1698 = vmatprep.subr.bf16.mxu0 0
  %1699 = vmatpush1.bf16.msra.mxu0 %v1676
  %1700 = vmatprep.subr.bf16.mxu0 0
  %1701 = vmatpush1.bf16.msra.mxu0 %v1677
  %1702 = vmatprep.subr.bf16.mxu0 0
  %1703 = vmatpush1.bf16.msra.mxu0 0
  %1704 = vmatprep.subr.bf16.mxu0 0
  %1705 = vmatpush1.bf16.msra.mxu0 0
  %1706 = vmatprep.subr.bf16.mxu0 0
  %1707 = vmatpush1.bf16.msra.mxu0 0
  %1708 = vmatprep.subr.bf16.mxu0 0
  %1709 = vmatpush1.bf16.msra.mxu0 0
  %1710 = vmatprep.subr.bf16.mxu0 0
  %1711 = vmatpush1.bf16.msra.mxu0 0
  %1712 = vmatprep.subr.bf16.mxu0 0
  %1713 = vmatpush1.bf16.msra.mxu0 0
  %1714 = vmatprep.subr.bf16.mxu0 0
  %1715 = vmatpush1.bf16.msra.mxu0 0
  %1716 = vmatprep.subr.bf16.mxu0 0
  %1717 = vmatpush1.bf16.msra.mxu0 0
  %1718 = vmatprep.mubr.bf16.mxu0 0
  %1719 = vmatmul.mubr.bf16.gmra.mrb[0].mxu0 %v1632
  %v1720 = vpop.f32.mrb[0].mxu0
  %v1721 = vadd.f32 0.0, %v1720
  %v1722 = vpop.f32.mrb[0].mxu0
  %v1723 = vpop.f32.mrb[0].mxu0
  %v1724 = vadd.f32 0.0, %v1723
  %v1725 = vpop.f32.mrb[0].mxu0
  %1726 = vmatprep.mubr.bf16.mxu0 0
  %1727 = vmatmul.mubr.bf16.gmra.mrb[0].mxu0 %v1633
  %v1728 = vpop.f32.mrb[0].mxu0
  %v1729 = vadd.f32 0.0, %v1728
  %v1730 = vpop.f32.mrb[0].mxu0
  %v1731 = vpop.f32.mrb[0].mxu0
  %v1732 = vadd.f32 0.0, %v1731
  %v1733 = vpop.f32.mrb[0].mxu0
  %1734 = vmatprep.mubr.bf16.mxu0 0
  %1735 = vmatmul.mubr.bf16.gmra.mrb[0].mxu0 %v1634
  %v1736 = vpop.f32.mrb[0].mxu0
  %v1737 = vadd.f32 0.0, %v1736
  %v1738 = vpop.f32.mrb[0].mxu0
  %v1739 = vpop.f32.mrb[0].mxu0
  %v1740 = vadd.f32 0.0, %v1739
  %v1741 = vpop.f32.mrb[0].mxu0
  %1742 = vmatprep.mubr.bf16.mxu0 0
  %1743 = vmatmul.mubr.bf16.gmra.mrb[0].mxu0 %v1635
  %v1744 = vpop.f32.mrb[0].mxu0
  %v1745 = vadd.f32 0.0, %v1744
  %v1746 = vpop.f32.mrb[0].mxu0
  %v1747 = vpop.f32.mrb[0].mxu0
  %v1748 = vadd.f32 0.0, %v1747
  %v1749 = vpop.f32.mrb[0].mxu0
  %1750 = vmatprep.mubr.bf16.mxu0 0
  %1751 = vmatmul.mubr.bf16.gmra.mrb[0].mxu0 %v1636
  %v1752 = vpop.f32.mrb[0].mxu0
  %v1753 = vadd.f32 0.0, %v1752
  %v1754 = vpop.f32.mrb[0].mxu0
  %v1755 = vpop.f32.mrb[0].mxu0
  %v1756 = vadd.f32 0.0, %v1755
  %v1757 = vpop.f32.mrb[0].mxu0
  %1758 = vmatprep.mubr.bf16.mxu0 0
  %1759 = vmatmul.mubr.bf16.gmra.mrb[0].mxu0 %v1637
  %v1760 = vpop.f32.mrb[0].mxu0
  %v1761 = vadd.f32 0.0, %v1760
  %v1762 = vpop.f32.mrb[0].mxu0
  %v1763 = vpop.f32.mrb[0].mxu0
  %v1764 = vadd.f32 0.0, %v1763
  %v1765 = vpop.f32.mrb[0].mxu0
  %1766 = vdwg.mxu0
  %v1767 = vmul.f32 %v1467, %v1209
  %v1768 = vmul.f32 %v1470, %v1210
  %v1769 = vmul.f32 %v1475, %v1211
  %v1770 = vmul.f32 %v1478, %v1212
  %v1771 = vmul.f32 %v1601, %v1721
  %v1772 = vmul.f32 %v1604, %v1724
  %v1773 = vmul.f32 %v1609, %v1729
  %v1774 = vmul.f32 %v1612, %v1732
  %v1775 = vadd.f32 %v1767, %v1771
  %v1776 = vadd.f32 %v1768, %v1772
  %v1777 = vadd.f32 %v1769, %v1773
  %v1778 = vadd.f32 %v1770, %v1774
  %v1779 = vmul.f32 %v1467, %v1217
  %v1780 = vmul.f32 %v1470, %v1218
  %v1781 = vmul.f32 %v1475, %v1219
  %v1782 = vmul.f32 %v1478, %v1220
  %v1783 = vmul.f32 %v1601, %v1737
  %v1784 = vmul.f32 %v1604, %v1740
  %v1785 = vmul.f32 %v1609, %v1745
  %v1786 = vmul.f32 %v1612, %v1748
  %v1787 = vadd.f32 %v1779, %v1783
  %v1788 = vadd.f32 %v1780, %v1784
  %v1789 = vadd.f32 %v1781, %v1785
  %v1790 = vadd.f32 %v1782, %v1786
  %v1791 = vmul.f32 %v1467, %v1225
  %v1792 = vmul.f32 %v1470, %v1226
  %v1793 = vmul.f32 %v1475, %v1227
  %v1794 = vmul.f32 %v1478, %v1228
  %v1795 = vmul.f32 %v1601, %v1753
  %v1796 = vmul.f32 %v1604, %v1756
  %v1797 = vmul.f32 %v1609, %v1761
  %v1798 = vmul.f32 %v1612, %v1764
  %v1799 = vadd.f32 %v1791, %v1795
  %v1800 = vadd.f32 %v1792, %v1796
  %v1801 = vadd.f32 %v1793, %v1797
  %v1802 = vadd.f32 %v1794, %v1798
  %s1803 = scalar_lea.vmem %s1, 4
  %v1804 = vld [vmem:[%s1803] sm:$0x1]
  %s1805 = scalar_lea.vmem %s0, 640
  %v1806 = vld [vmem:[%s1805] sm:$0xf]
  %v1807 = vld [vmem:[%s1805 + $0x4] sm:$0xf]
  %v1808 = vld [vmem:[%s1805 + $0x8] sm:$0xf]
  %v1809 = vld [vmem:[%s1805 + $0xc] sm:$0xf]
  %v1810 = vld [vmem:[%s1805 + $0x10] sm:$0xf]
  %v1811 = vld [vmem:[%s1805 + $0x14] sm:$0xf]
  %v1812 = vld [vmem:[%s1805 + $0x18] sm:$0xf]
  %v1813 = vld [vmem:[%s1805 + $0x1c] sm:$0xf]
  %v1814 = vld [vmem:[%s1805 + $0x20] sm:$0xf]
  %v1815 = vld [vmem:[%s1805 + $0x24] sm:$0xf]
  %v1816 = vld [vmem:[%s1805 + $0x28] sm:$0xf]
  %v1817 = vld [vmem:[%s1805 + $0x2c] sm:$0xf]
  %v1818 = vld [vmem:[%s1805 + $0x30] sm:$0xf]
  %v1819 = vld [vmem:[%s1805 + $0x34] sm:$0xf]
  %v1820 = vld [vmem:[%s1805 + $0x38] sm:$0xf]
  %v1821 = vld [vmem:[%s1805 + $0x3c] sm:$0xf]
  %v1822 = vpack.c.bf16 %v1776, %v1775
  %v1823 = vpack.c.bf16 %v1778, %v1777
  %v1824 = vpack.c.bf16 %v1788, %v1787
  %v1825 = vpack.c.bf16 %v1790, %v1789
  %v1826 = vpack.c.bf16 %v1800, %v1799
  %v1827 = vpack.c.bf16 %v1802, %v1801
  %v1844 = vunpack.c.l.b16 %v1806
  %v1845 = vunpack.c.l.b16 %v1807
  %v1846 = vunpack.c.l.b16 %v1808
  %v1847 = vunpack.c.l.b16 %v1809
  %v1848 = vunpack.c.l.b16 %v1810
  %v1849 = vunpack.c.l.b16 %v1811
  %v1850 = vunpack.c.l.b16 %v1812
  %v1851 = vunpack.c.l.b16 %v1813
  %v1852 = vunpack.c.l.b16 %v1814
  %v1853 = vunpack.c.l.b16 %v1815
  %v1854 = vunpack.c.l.b16 %v1816
  %v1855 = vunpack.c.l.b16 %v1817
  %v1856 = vunpack.c.l.b16 %v1818
  %v1857 = vunpack.c.l.b16 %v1819
  %v1858 = vunpack.c.l.b16 %v1820
  %v1859 = vunpack.c.l.b16 %v1821
  %v1860 = vpack.c.b16 %v1845, %v1844
  %v1861 = vpack.c.b16 %v1847, %v1846
  %v1862 = vpack.c.b16 %v1849, %v1848
  %v1863 = vpack.c.b16 %v1851, %v1850
  %v1864 = vpack.c.b16 %v1853, %v1852
  %v1865 = vpack.c.b16 %v1855, %v1854
  %v1866 = vpack.c.b16 %v1857, %v1856
  %v1867 = vpack.c.b16 %v1859, %v1858
  %1876 = vmatprep.subr.bf16.mxu0 0
  %1877 = vmatpush1.bf16.msra.mxu0 %v1860
  %1878 = vmatprep.subr.bf16.mxu0 0
  %1879 = vmatpush1.bf16.msra.mxu0 %v1861
  %1880 = vmatprep.subr.bf16.mxu0 0
  %1881 = vmatpush1.bf16.msra.mxu0 %v1862
  %1882 = vmatprep.subr.bf16.mxu0 0
  %1883 = vmatpush1.bf16.msra.mxu0 %v1863
  %1884 = vmatprep.subr.bf16.mxu0 0
  %1885 = vmatpush1.bf16.msra.mxu0 %v1864
  %1886 = vmatprep.subr.bf16.mxu0 0
  %1887 = vmatpush1.bf16.msra.mxu0 %v1865
  %1888 = vmatprep.subr.bf16.mxu0 0
  %1889 = vmatpush1.bf16.msra.mxu0 %v1866
  %1890 = vmatprep.subr.bf16.mxu0 0
  %1891 = vmatpush1.bf16.msra.mxu0 %v1867
  %1892 = vmatprep.subr.bf16.mxu0 0
  %1893 = vmatpush1.bf16.msra.mxu0 0
  %1894 = vmatprep.subr.bf16.mxu0 0
  %1895 = vmatpush1.bf16.msra.mxu0 0
  %1896 = vmatprep.subr.bf16.mxu0 0
  %1897 = vmatpush1.bf16.msra.mxu0 0
  %1898 = vmatprep.subr.bf16.mxu0 0
  %1899 = vmatpush1.bf16.msra.mxu0 0
  %1900 = vmatprep.subr.bf16.mxu0 0
  %1901 = vmatpush1.bf16.msra.mxu0 0
  %1902 = vmatprep.subr.bf16.mxu0 0
  %1903 = vmatpush1.bf16.msra.mxu0 0
  %1904 = vmatprep.subr.bf16.mxu0 0
  %1905 = vmatpush1.bf16.msra.mxu0 0
  %1906 = vmatprep.subr.bf16.mxu0 0
  %1907 = vmatpush1.bf16.msra.mxu0 0
  %1908 = vmatprep.mubr.bf16.mxu0 0
  %1909 = vmatmul.mubr.bf16.gmra.mrb[0].mxu0 %v1822
  %v1910 = vpop.f32.mrb[0].mxu0
  %v1911 = vadd.f32 0.0, %v1910
  %v1912 = vpop.f32.mrb[0].mxu0
  %v1913 = vpop.f32.mrb[0].mxu0
  %v1914 = vadd.f32 0.0, %v1913
  %v1915 = vpop.f32.mrb[0].mxu0
  %1916 = vmatprep.mubr.bf16.mxu0 0
  %1917 = vmatmul.mubr.bf16.gmra.mrb[0].mxu0 %v1823
  %v1918 = vpop.f32.mrb[0].mxu0
  %v1919 = vadd.f32 0.0, %v1918
  %v1920 = vpop.f32.mrb[0].mxu0
  %v1921 = vpop.f32.mrb[0].mxu0
  %v1922 = vadd.f32 0.0, %v1921
  %v1923 = vpop.f32.mrb[0].mxu0
  %1924 = vmatprep.mubr.bf16.mxu0 0
  %1925 = vmatmul.mubr.bf16.gmra.mrb[0].mxu0 %v1824
  %v1926 = vpop.f32.mrb[0].mxu0
  %v1927 = vadd.f32 0.0, %v1926
  %v1928 = vpop.f32.mrb[0].mxu0
  %v1929 = vpop.f32.mrb[0].mxu0
  %v1930 = vadd.f32 0.0, %v1929
  %v1931 = vpop.f32.mrb[0].mxu0
  %1932 = vmatprep.mubr.bf16.mxu0 0
  %1933 = vmatmul.mubr.bf16.gmra.mrb[0].mxu0 %v1825
  %v1934 = vpop.f32.mrb[0].mxu0
  %v1935 = vadd.f32 0.0, %v1934
  %v1936 = vpop.f32.mrb[0].mxu0
  %v1937 = vpop.f32.mrb[0].mxu0
  %v1938 = vadd.f32 0.0, %v1937
  %v1939 = vpop.f32.mrb[0].mxu0
  %1940 = vmatprep.mubr.bf16.mxu0 0
  %1941 = vmatmul.mubr.bf16.gmra.mrb[0].mxu0 %v1826
  %v1942 = vpop.f32.mrb[0].mxu0
  %v1943 = vadd.f32 0.0, %v1942
  %v1944 = vpop.f32.mrb[0].mxu0
  %v1945 = vpop.f32.mrb[0].mxu0
  %v1946 = vadd.f32 0.0, %v1945
  %v1947 = vpop.f32.mrb[0].mxu0
  %1948 = vmatprep.mubr.bf16.mxu0 0
  %1949 = vmatmul.mubr.bf16.gmra.mrb[0].mxu0 %v1827
  %v1950 = vpop.f32.mrb[0].mxu0
  %v1951 = vadd.f32 0.0, %v1950
  %v1952 = vpop.f32.mrb[0].mxu0
  %v1953 = vpop.f32.mrb[0].mxu0
  %v1954 = vadd.f32 0.0, %v1953
  %v1955 = vpop.f32.mrb[0].mxu0
  %1956 = vdwg.mxu0
  %v1957 = vmul.f32 %v1911, %v1911
  %v1958 = vmul.f32 %v1914, %v1914
  %v1959 = vmul.f32 %v1919, %v1919
  %v1960 = vmul.f32 %v1922, %v1922
  %v1961 = vmul.f32 %v1927, %v1927
  %v1962 = vmul.f32 %v1930, %v1930
  %v1963 = vmul.f32 %v1935, %v1935
  %v1964 = vmul.f32 %v1938, %v1938
  %v1965 = vadd.f32 %v1957, %v1961
  %v1966 = vadd.f32 %v1958, %v1962
  %v1967 = vadd.f32 %v1959, %v1963
  %v1968 = vadd.f32 %v1960, %v1964
  %v1969 = vmul.f32 %v1943, %v1943
  %v1970 = vmul.f32 %v1946, %v1946
  %v1971 = vmul.f32 %v1951, %v1951
  %v1972 = vmul.f32 %v1954, %v1954
  %v1973 = vadd.f32 %v1965, %v1969
  %v1974 = vadd.f32 %v1966, %v1970
  %v1975 = vadd.f32 %v1967, %v1971
  %v1976 = vadd.f32 %v1968, %v1972
  %v1977 = vrsqrt.pop %v1973
  %v1978 = vmul.f32 %v1973, %v1977
  %vm1979 = vcmp.eq.f32.partialorder %v1973, inf
  %v1980 = vsel %vm1979, %v1973, %v1978
  %vm1981 = vcmp.eq.f32.partialorder %v1973, 0.0
  %v1982 = vand.u32 %v1973, 2147483648
  %v1983 = vsel %vm1981, %v1982, %v1980
  %v1984 = vrsqrt.pop %v1974
  %v1985 = vmul.f32 %v1974, %v1984
  %vm1986 = vcmp.eq.f32.partialorder %v1974, inf
  %v1987 = vsel %vm1986, %v1974, %v1985
  %vm1988 = vcmp.eq.f32.partialorder %v1974, 0.0
  %v1989 = vand.u32 %v1974, 2147483648
  %v1990 = vsel %vm1988, %v1989, %v1987
  %v1991 = vrsqrt.pop %v1975
  %v1992 = vmul.f32 %v1975, %v1991
  %vm1993 = vcmp.eq.f32.partialorder %v1975, inf
  %v1994 = vsel %vm1993, %v1975, %v1992
  %vm1995 = vcmp.eq.f32.partialorder %v1975, 0.0
  %v1996 = vand.u32 %v1975, 2147483648
  %v1997 = vsel %vm1995, %v1996, %v1994
  %v1998 = vrsqrt.pop %v1976
  %v1999 = vmul.f32 %v1976, %v1998
  %vm2000 = vcmp.eq.f32.partialorder %v1976, inf
  %v2001 = vsel %vm2000, %v1976, %v1999
  %vm2002 = vcmp.eq.f32.partialorder %v1976, 0.0
  %v2003 = vand.u32 %v1976, 2147483648
  %v2004 = vsel %vm2002, %v2003, %v2001
  %s2005 = scalar_lea.vmem %s0, 704
  %v2006 = vld [vmem:[%s2005] sm:$0xf]
  %v2007 = vld [vmem:[%s2005 + $0x4] sm:$0xf]
  %v2008 = vld [vmem:[%s2005 + $0x8] sm:$0xf]
  %v2009 = vld [vmem:[%s2005 + $0xc] sm:$0xf]
  %v2010 = vld [vmem:[%s2005 + $0x10] sm:$0xf]
  %v2011 = vld [vmem:[%s2005 + $0x14] sm:$0xf]
  %v2012 = vld [vmem:[%s2005 + $0x18] sm:$0xf]
  %v2013 = vld [vmem:[%s2005 + $0x1c] sm:$0xf]
  %v2014 = vld [vmem:[%s2005 + $0x20] sm:$0xf]
  %v2015 = vld [vmem:[%s2005 + $0x24] sm:$0xf]
  %v2016 = vld [vmem:[%s2005 + $0x28] sm:$0xf]
  %v2017 = vld [vmem:[%s2005 + $0x2c] sm:$0xf]
  %v2018 = vld [vmem:[%s2005 + $0x30] sm:$0xf]
  %v2019 = vld [vmem:[%s2005 + $0x34] sm:$0xf]
  %v2020 = vld [vmem:[%s2005 + $0x38] sm:$0xf]
  %v2021 = vld [vmem:[%s2005 + $0x3c] sm:$0xf]
  %v2022 = vpack.c.bf16 %v1990, %v1983
  %v2023 = vpack.c.bf16 %v2004, %v1997
  %s2024 = scalar_lea.vmem %s0, 768
  %v2025 = vld [vmem:[%s2024] sm:$0xf]
  %v2026 = vld [vmem:[%s2024 + $0x4] sm:$0xf]
  %v2027 = vld [vmem:[%s2024 + $0x8] sm:$0xf]
  %v2028 = vld [vmem:[%s2024 + $0xc] sm:$0xf]
  %v2029 = vld [vmem:[%s2024 + $0x10] sm:$0xf]
  %v2030 = vld [vmem:[%s2024 + $0x14] sm:$0xf]
  %v2031 = vld [vmem:[%s2024 + $0x18] sm:$0xf]
  %v2032 = vld [vmem:[%s2024 + $0x1c] sm:$0xf]
  %v2033 = vld [vmem:[%s2024 + $0x20] sm:$0xf]
  %v2034 = vld [vmem:[%s2024 + $0x24] sm:$0xf]
  %v2035 = vld [vmem:[%s2024 + $0x28] sm:$0xf]
  %v2036 = vld [vmem:[%s2024 + $0x2c] sm:$0xf]
  %v2037 = vld [vmem:[%s2024 + $0x30] sm:$0xf]
  %v2038 = vld [vmem:[%s2024 + $0x34] sm:$0xf]
  %v2039 = vld [vmem:[%s2024 + $0x38] sm:$0xf]
  %v2040 = vld [vmem:[%s2024 + $0x3c] sm:$0xf]
  %v2041 = vpack.c.bf16 %v1356, %v1355
  %v2042 = vpack.c.bf16 %v1358, %v1357
  %v2059 = vunpack.c.l.b16 %v2025
  %v2060 = vunpack.c.l.b16 %v2026
  %v2061 = vunpack.c.l.b16 %v2027
  %v2062 = vunpack.c.l.b16 %v2028
  %v2063 = vunpack.c.l.b16 %v2029
  %v2064 = vunpack.c.l.b16 %v2030
  %v2065 = vunpack.c.l.b16 %v2031
  %v2066 = vunpack.c.l.b16 %v2032
  %v2067 = vunpack.c.l.b16 %v2033
  %v2068 = vunpack.c.l.b16 %v2034
  %v2069 = vunpack.c.l.b16 %v2035
  %v2070 = vunpack.c.l.b16 %v2036
  %v2071 = vunpack.c.l.b16 %v2037
  %v2072 = vunpack.c.l.b16 %v2038
  %v2073 = vunpack.c.l.b16 %v2039
  %v2074 = vunpack.c.l.b16 %v2040
  %v2075 = vpack.c.b16 %v2060, %v2059
  %v2076 = vpack.c.b16 %v2062, %v2061
  %v2077 = vpack.c.b16 %v2064, %v2063
  %v2078 = vpack.c.b16 %v2066, %v2065
  %v2079 = vpack.c.b16 %v2068, %v2067
  %v2080 = vpack.c.b16 %v2070, %v2069
  %v2081 = vpack.c.b16 %v2072, %v2071
  %v2082 = vpack.c.b16 %v2074, %v2073
  %2091 = vmatprep.subr.bf16.mxu0 0
  %2092 = vmatpush1.bf16.msra.mxu0 %v2075
  %2093 = vmatprep.subr.bf16.mxu0 0
  %2094 = vmatpush1.bf16.msra.mxu0 %v2076
  %2095 = vmatprep.subr.bf16.mxu0 0
  %2096 = vmatpush1.bf16.msra.mxu0 %v2077
  %2097 = vmatprep.subr.bf16.mxu0 0
  %2098 = vmatpush1.bf16.msra.mxu0 %v2078
  %2099 = vmatprep.subr.bf16.mxu0 0
  %2100 = vmatpush1.bf16.msra.mxu0 %v2079
  %2101 = vmatprep.subr.bf16.mxu0 0
  %2102 = vmatpush1.bf16.msra.mxu0 %v2080
  %2103 = vmatprep.subr.bf16.mxu0 0
  %2104 = vmatpush1.bf16.msra.mxu0 %v2081
  %2105 = vmatprep.subr.bf16.mxu0 0
  %2106 = vmatpush1.bf16.msra.mxu0 %v2082
  %2107 = vmatprep.subr.bf16.mxu0 0
  %2108 = vmatpush1.bf16.msra.mxu0 0
  %2109 = vmatprep.subr.bf16.mxu0 0
  %2110 = vmatpush1.bf16.msra.mxu0 0
  %2111 = vmatprep.subr.bf16.mxu0 0
  %2112 = vmatpush1.bf16.msra.mxu0 0
  %2113 = vmatprep.subr.bf16.mxu0 0
  %2114 = vmatpush1.bf16.msra.mxu0 0
  %2115 = vmatprep.subr.bf16.mxu0 0
  %2116 = vmatpush1.bf16.msra.mxu0 0
  %2117 = vmatprep.subr.bf16.mxu0 0
  %2118 = vmatpush1.bf16.msra.mxu0 0
  %2119 = vmatprep.subr.bf16.mxu0 0
  %2120 = vmatpush1.bf16.msra.mxu0 0
  %2121 = vmatprep.subr.bf16.mxu0 0
  %2122 = vmatpush1.bf16.msra.mxu0 0
  %2123 = vmatprep.mubr.bf16.mxu0 0
  %2124 = vmatmul.mubr.bf16.gmra.mrb[0].mxu0 %v2041
  %v2125 = vpop.f32.mrb[0].mxu0
  %v2126 = vadd.f32 0.0, %v2125
  %v2127 = vpop.f32.mrb[0].mxu0
  %v2128 = vpop.f32.mrb[0].mxu0
  %v2129 = vadd.f32 0.0, %v2128
  %v2130 = vpop.f32.mrb[0].mxu0
  %2131 = vmatprep.mubr.bf16.mxu0 0
  %2132 = vmatmul.mubr.bf16.gmra.mrb[0].mxu0 %v2042
  %v2133 = vpop.f32.mrb[0].mxu0
  %v2134 = vadd.f32 0.0, %v2133
  %v2135 = vpop.f32.mrb[0].mxu0
  %v2136 = vpop.f32.mrb[0].mxu0
  %v2137 = vadd.f32 0.0, %v2136
  %v2138 = vpop.f32.mrb[0].mxu0
  %2139 = vdwg.mxu0
  %v2156 = vunpack.c.l.b16 %v2006
  %v2157 = vunpack.c.l.b16 %v2007
  %v2158 = vunpack.c.l.b16 %v2008
  %v2159 = vunpack.c.l.b16 %v2009
  %v2160 = vunpack.c.l.b16 %v2010
  %v2161 = vunpack.c.l.b16 %v2011
  %v2162 = vunpack.c.l.b16 %v2012
  %v2163 = vunpack.c.l.b16 %v2013
  %v2164 = vunpack.c.l.b16 %v2014
  %v2165 = vunpack.c.l.b16 %v2015
  %v2166 = vunpack.c.l.b16 %v2016
  %v2167 = vunpack.c.l.b16 %v2017
  %v2168 = vunpack.c.l.b16 %v2018
  %v2169 = vunpack.c.l.b16 %v2019
  %v2170 = vunpack.c.l.b16 %v2020
  %v2171 = vunpack.c.l.b16 %v2021
  %v2172 = vpack.c.b16 %v2157, %v2156
  %v2173 = vpack.c.b16 %v2159, %v2158
  %v2174 = vpack.c.b16 %v2161, %v2160
  %v2175 = vpack.c.b16 %v2163, %v2162
  %v2176 = vpack.c.b16 %v2165, %v2164
  %v2177 = vpack.c.b16 %v2167, %v2166
  %v2178 = vpack.c.b16 %v2169, %v2168
  %v2179 = vpack.c.b16 %v2171, %v2170
  %2188 = vmatprep.subr.bf16.mxu0 0
  %2189 = vmatpush1.bf16.msra.mxu0 %v2172
  %2190 = vmatprep.subr.bf16.mxu0 0
  %2191 = vmatpush1.bf16.msra.mxu0 %v2173
  %2192 = vmatprep.subr.bf16.mxu0 0
  %2193 = vmatpush1.bf16.msra.mxu0 %v2174
  %2194 = vmatprep.subr.bf16.mxu0 0
  %2195 = vmatpush1.bf16.msra.mxu0 %v2175
  %2196 = vmatprep.subr.bf16.mxu0 0
  %2197 = vmatpush1.bf16.msra.mxu0 %v2176
  %2198 = vmatprep.subr.bf16.mxu0 0
  %2199 = vmatpush1.bf16.msra.mxu0 %v2177
  %2200 = vmatprep.subr.bf16.mxu0 0
  %2201 = vmatpush1.bf16.msra.mxu0 %v2178
  %2202 = vmatprep.subr.bf16.mxu0 0
  %2203 = vmatpush1.bf16.msra.mxu0 %v2179
  %2204 = vmatprep.subr.bf16.mxu0 0
  %2205 = vmatpush1.bf16.msra.mxu0 0
  %2206 = vmatprep.subr.bf16.mxu0 0
  %2207 = vmatpush1.bf16.msra.mxu0 0
  %2208 = vmatprep.subr.bf16.mxu0 0
  %2209 = vmatpush1.bf16.msra.mxu0 0
  %2210 = vmatprep.subr.bf16.mxu0 0
  %2211 = vmatpush1.bf16.msra.mxu0 0
  %2212 = vmatprep.subr.bf16.mxu0 0
  %2213 = vmatpush1.bf16.msra.mxu0 0
  %2214 = vmatprep.subr.bf16.mxu0 0
  %2215 = vmatpush1.bf16.msra.mxu0 0
  %2216 = vmatprep.subr.bf16.mxu0 0
  %2217 = vmatpush1.bf16.msra.mxu0 0
  %2218 = vmatprep.subr.bf16.mxu0 0
  %2219 = vmatpush1.bf16.msra.mxu0 0
  %2220 = vmatprep.mubr.bf16.mxu0 0
  %2221 = vmatmul.mubr.bf16.gmra.mrb[0].mxu0 %v2022
  %v2222 = vpop.f32.mrb[0].mxu0
  %v2223 = vadd.f32 %v2126, %v2222
  %v2224 = vpop.f32.mrb[0].mxu0
  %v2225 = vpop.f32.mrb[0].mxu0
  %v2226 = vadd.f32 %v2129, %v2225
  %v2227 = vpop.f32.mrb[0].mxu0
  %2228 = vmatprep.mubr.bf16.mxu0 0
  %2229 = vmatmul.mubr.bf16.gmra.mrb[0].mxu0 %v2023
  %v2230 = vpop.f32.mrb[0].mxu0
  %v2231 = vadd.f32 %v2134, %v2230
  %v2232 = vpop.f32.mrb[0].mxu0
  %v2233 = vpop.f32.mrb[0].mxu0
  %v2234 = vadd.f32 %v2137, %v2233
  %v2235 = vpop.f32.mrb[0].mxu0
  %2236 = vdwg.mxu0
  %s2237 = scalar_lea.vmem %s0, 832
  %v2238 = vld [vmem:[%s2237] sm:$0xf]
  %v2239 = vld [vmem:[%s2237 + $0x4] sm:$0xf]
  %v2240 = vld [vmem:[%s2237 + $0x8] sm:$0xf]
  %v2241 = vld [vmem:[%s2237 + $0xc] sm:$0xf]
  %v2242 = vld [vmem:[%s2237 + $0x10] sm:$0xf]
  %v2243 = vld [vmem:[%s2237 + $0x14] sm:$0xf]
  %v2244 = vld [vmem:[%s2237 + $0x18] sm:$0xf]
  %v2245 = vld [vmem:[%s2237 + $0x1c] sm:$0xf]
  %v2246 = vld [vmem:[%s2237 + $0x20] sm:$0xf]
  %v2247 = vld [vmem:[%s2237 + $0x24] sm:$0xf]
  %v2248 = vld [vmem:[%s2237 + $0x28] sm:$0xf]
  %v2249 = vld [vmem:[%s2237 + $0x2c] sm:$0xf]
  %v2250 = vld [vmem:[%s2237 + $0x30] sm:$0xf]
  %v2251 = vld [vmem:[%s2237 + $0x34] sm:$0xf]
  %v2252 = vld [vmem:[%s2237 + $0x38] sm:$0xf]
  %v2253 = vld [vmem:[%s2237 + $0x3c] sm:$0xf]
  %v2254 = vpack.c.bf16 %v1914, %v1911
  %v2255 = vpack.c.bf16 %v1922, %v1919
  %v2256 = vpack.c.bf16 %v1930, %v1927
  %v2257 = vpack.c.bf16 %v1938, %v1935
  %v2258 = vpack.c.bf16 %v1946, %v1943
  %v2259 = vpack.c.bf16 %v1954, %v1951
  %v2276 = vunpack.c.l.b16 %v2238
  %v2277 = vunpack.c.l.b16 %v2239
  %v2278 = vunpack.c.l.b16 %v2240
  %v2279 = vunpack.c.l.b16 %v2241
  %v2280 = vunpack.c.l.b16 %v2242
  %v2281 = vunpack.c.l.b16 %v2243
  %v2282 = vunpack.c.l.b16 %v2244
  %v2283 = vunpack.c.l.b16 %v2245
  %v2284 = vunpack.c.l.b16 %v2246
  %v2285 = vunpack.c.l.b16 %v2247
  %v2286 = vunpack.c.l.b16 %v2248
  %v2287 = vunpack.c.l.b16 %v2249
  %v2288 = vunpack.c.l.b16 %v2250
  %v2289 = vunpack.c.l.b16 %v2251
  %v2290 = vunpack.c.l.b16 %v2252
  %v2291 = vunpack.c.l.b16 %v2253
  %v2292 = vpack.c.b16 %v2277, %v2276
  %v2293 = vpack.c.b16 %v2279, %v2278
  %v2294 = vpack.c.b16 %v2281, %v2280
  %v2295 = vpack.c.b16 %v2283, %v2282
  %v2296 = vpack.c.b16 %v2285, %v2284
  %v2297 = vpack.c.b16 %v2287, %v2286
  %v2298 = vpack.c.b16 %v2289, %v2288
  %v2299 = vpack.c.b16 %v2291, %v2290
  %2308 = vmatprep.subr.bf16.mxu0 0
  %2309 = vmatpush1.bf16.msra.mxu0 %v2292
  %2310 = vmatprep.subr.bf16.mxu0 0
  %2311 = vmatpush1.bf16.msra.mxu0 %v2293
  %2312 = vmatprep.subr.bf16.mxu0 0
  %2313 = vmatpush1.bf16.msra.mxu0 %v2294
  %2314 = vmatprep.subr.bf16.mxu0 0
  %2315 = vmatpush1.bf16.msra.mxu0 %v2295
  %2316 = vmatprep.subr.bf16.mxu0 0
  %2317 = vmatpush1.bf16.msra.mxu0 %v2296
  %2318 = vmatprep.subr.bf16.mxu0 0
  %2319 = vmatpush1.bf16.msra.mxu0 %v2297
  %2320 = vmatprep.subr.bf16.mxu0 0
  %2321 = vmatpush1.bf16.msra.mxu0 %v2298
  %2322 = vmatprep.subr.bf16.mxu0 0
  %2323 = vmatpush1.bf16.msra.mxu0 %v2299
  %2324 = vmatprep.subr.bf16.mxu0 0
  %2325 = vmatpush1.bf16.msra.mxu0 0
  %2326 = vmatprep.subr.bf16.mxu0 0
  %2327 = vmatpush1.bf16.msra.mxu0 0
  %2328 = vmatprep.subr.bf16.mxu0 0
  %2329 = vmatpush1.bf16.msra.mxu0 0
  %2330 = vmatprep.subr.bf16.mxu0 0
  %2331 = vmatpush1.bf16.msra.mxu0 0
  %2332 = vmatprep.subr.bf16.mxu0 0
  %2333 = vmatpush1.bf16.msra.mxu0 0
  %2334 = vmatprep.subr.bf16.mxu0 0
  %2335 = vmatpush1.bf16.msra.mxu0 0
  %2336 = vmatprep.subr.bf16.mxu0 0
  %2337 = vmatpush1.bf16.msra.mxu0 0
  %2338 = vmatprep.subr.bf16.mxu0 0
  %2339 = vmatpush1.bf16.msra.mxu0 0
  %2340 = vmatprep.mubr.bf16.mxu0 0
  %2341 = vmatmul.mubr.bf16.gmra.mrb[0].mxu0 %v2254
  %v2342 = vpop.f32.mrb[0].mxu0
  %v2343 = vadd.f32 0.0, %v2342
  %v2344 = vpop.f32.mrb[0].mxu0
  %v2345 = vpop.f32.mrb[0].mxu0
  %v2346 = vadd.f32 0.0, %v2345
  %v2347 = vpop.f32.mrb[0].mxu0
  %2348 = vmatprep.mubr.bf16.mxu0 0
  %2349 = vmatmul.mubr.bf16.gmra.mrb[0].mxu0 %v2255
  %v2350 = vpop.f32.mrb[0].mxu0
  %v2351 = vadd.f32 0.0, %v2350
  %v2352 = vpop.f32.mrb[0].mxu0
  %v2353 = vpop.f32.mrb[0].mxu0
  %v2354 = vadd.f32 0.0, %v2353
  %v2355 = vpop.f32.mrb[0].mxu0
  %2356 = vmatprep.mubr.bf16.mxu0 0
  %2357 = vmatmul.mubr.bf16.gmra.mrb[0].mxu0 %v2256
  %v2358 = vpop.f32.mrb[0].mxu0
  %v2359 = vadd.f32 0.0, %v2358
  %v2360 = vpop.f32.mrb[0].mxu0
  %v2361 = vpop.f32.mrb[0].mxu0
  %v2362 = vadd.f32 0.0, %v2361
  %v2363 = vpop.f32.mrb[0].mxu0
  %2364 = vmatprep.mubr.bf16.mxu0 0
  %2365 = vmatmul.mubr.bf16.gmra.mrb[0].mxu0 %v2257
  %v2366 = vpop.f32.mrb[0].mxu0
  %v2367 = vadd.f32 0.0, %v2366
  %v2368 = vpop.f32.mrb[0].mxu0
  %v2369 = vpop.f32.mrb[0].mxu0
  %v2370 = vadd.f32 0.0, %v2369
  %v2371 = vpop.f32.mrb[0].mxu0
  %2372 = vmatprep.mubr.bf16.mxu0 0
  %2373 = vmatmul.mubr.bf16.gmra.mrb[0].mxu0 %v2258
  %v2374 = vpop.f32.mrb[0].mxu0
  %v2375 = vadd.f32 0.0, %v2374
  %v2376 = vpop.f32.mrb[0].mxu0
  %v2377 = vpop.f32.mrb[0].mxu0
  %v2378 = vadd.f32 0.0, %v2377
  %v2379 = vpop.f32.mrb[0].mxu0
  %2380 = vmatprep.mubr.bf16.mxu0 0
  %2381 = vmatmul.mubr.bf16.gmra.mrb[0].mxu0 %v2259
  %v2382 = vpop.f32.mrb[0].mxu0
  %v2383 = vadd.f32 0.0, %v2382
  %v2384 = vpop.f32.mrb[0].mxu0
  %v2385 = vpop.f32.mrb[0].mxu0
  %v2386 = vadd.f32 0.0, %v2385
  %v2387 = vpop.f32.mrb[0].mxu0
  %2388 = vdwg.mxu0
  %s2389 = scalar_lea.vmem %s0, 896
  %v2390 = vld [vmem:[%s2389] sm:$0xf]
  %v2391 = vld [vmem:[%s2389 + $0x4] sm:$0xf]
  %v2392 = vld [vmem:[%s2389 + $0x8] sm:$0xf]
  %v2393 = vld [vmem:[%s2389 + $0xc] sm:$0xf]
  %v2394 = vld [vmem:[%s2389 + $0x10] sm:$0xf]
  %v2395 = vld [vmem:[%s2389 + $0x14] sm:$0xf]
  %v2396 = vld [vmem:[%s2389 + $0x18] sm:$0xf]
  %v2397 = vld [vmem:[%s2389 + $0x1c] sm:$0xf]
  %v2398 = vld [vmem:[%s2389 + $0x20] sm:$0xf]
  %v2399 = vld [vmem:[%s2389 + $0x24] sm:$0xf]
  %v2400 = vld [vmem:[%s2389 + $0x28] sm:$0xf]
  %v2401 = vld [vmem:[%s2389 + $0x2c] sm:$0xf]
  %v2402 = vld [vmem:[%s2389 + $0x30] sm:$0xf]
  %v2403 = vld [vmem:[%s2389 + $0x34] sm:$0xf]
  %v2404 = vld [vmem:[%s2389 + $0x38] sm:$0xf]
  %v2405 = vld [vmem:[%s2389 + $0x3c] sm:$0xf]
  %v2406 = vpack.c.bf16 %v2226, %v2223
  %v2407 = vpack.c.bf16 %v2234, %v2231
  %v2409 = vlaneseq
  %v2410 = vshrl.u32 %v2409, 7
  %v2411 = vsub.s32 0, %v2410
  %v2412 = vrot.slane %v1804, %v2411
  %v2430 = vunpack.c.l.b16 %v2390
  %v2431 = vunpack.c.l.b16 %v2391
  %v2432 = vunpack.c.l.b16 %v2392
  %v2433 = vunpack.c.l.b16 %v2393
  %v2434 = vunpack.c.l.b16 %v2394
  %v2435 = vunpack.c.l.b16 %v2395
  %v2436 = vunpack.c.l.b16 %v2396
  %v2437 = vunpack.c.l.b16 %v2397
  %v2438 = vunpack.c.l.b16 %v2398
  %v2439 = vunpack.c.l.b16 %v2399
  %v2440 = vunpack.c.l.b16 %v2400
  %v2441 = vunpack.c.l.b16 %v2401
  %v2442 = vunpack.c.l.b16 %v2402
  %v2443 = vunpack.c.l.b16 %v2403
  %v2444 = vunpack.c.l.b16 %v2404
  %v2445 = vunpack.c.l.b16 %v2405
  %v2446 = vpack.c.b16 %v2431, %v2430
  %v2447 = vpack.c.b16 %v2433, %v2432
  %v2448 = vpack.c.b16 %v2435, %v2434
  %v2449 = vpack.c.b16 %v2437, %v2436
  %v2450 = vpack.c.b16 %v2439, %v2438
  %v2451 = vpack.c.b16 %v2441, %v2440
  %v2452 = vpack.c.b16 %v2443, %v2442
  %v2453 = vpack.c.b16 %v2445, %v2444
  %2462 = vmatprep.subr.bf16.mxu0 0
  %2463 = vmatpush1.bf16.msra.mxu0 %v2446
  %2464 = vmatprep.subr.bf16.mxu0 0
  %2465 = vmatpush1.bf16.msra.mxu0 %v2447
  %2466 = vmatprep.subr.bf16.mxu0 0
  %2467 = vmatpush1.bf16.msra.mxu0 %v2448
  %2468 = vmatprep.subr.bf16.mxu0 0
  %2469 = vmatpush1.bf16.msra.mxu0 %v2449
  %2470 = vmatprep.subr.bf16.mxu0 0
  %2471 = vmatpush1.bf16.msra.mxu0 %v2450
  %2472 = vmatprep.subr.bf16.mxu0 0
  %2473 = vmatpush1.bf16.msra.mxu0 %v2451
  %2474 = vmatprep.subr.bf16.mxu0 0
  %2475 = vmatpush1.bf16.msra.mxu0 %v2452
  %2476 = vmatprep.subr.bf16.mxu0 0
  %2477 = vmatpush1.bf16.msra.mxu0 %v2453
  %2478 = vmatprep.subr.bf16.mxu0 0
  %2479 = vmatpush1.bf16.msra.mxu0 0
  %2480 = vmatprep.subr.bf16.mxu0 0
  %2481 = vmatpush1.bf16.msra.mxu0 0
  %2482 = vmatprep.subr.bf16.mxu0 0
  %2483 = vmatpush1.bf16.msra.mxu0 0
  %2484 = vmatprep.subr.bf16.mxu0 0
  %2485 = vmatpush1.bf16.msra.mxu0 0
  %2486 = vmatprep.subr.bf16.mxu0 0
  %2487 = vmatpush1.bf16.msra.mxu0 0
  %2488 = vmatprep.subr.bf16.mxu0 0
  %2489 = vmatpush1.bf16.msra.mxu0 0
  %2490 = vmatprep.subr.bf16.mxu0 0
  %2491 = vmatpush1.bf16.msra.mxu0 0
  %2492 = vmatprep.subr.bf16.mxu0 0
  %2493 = vmatpush1.bf16.msra.mxu0 0
  %2494 = vmatprep.mubr.bf16.mxu0 0
  %2495 = vmatmul.mubr.bf16.gmra.mrb[0].mxu0 %v2406
  %v2496 = vpop.f32.mrb[0].mxu0
  %v2497 = vadd.f32 %v2412, %v2496
  %v2498 = vpop.f32.mrb[0].mxu0
  %v2499 = vpop.f32.mrb[0].mxu0
  %v2500 = vadd.f32 %v2412, %v2499
  %v2501 = vpop.f32.mrb[0].mxu0
  %2502 = vmatprep.mubr.bf16.mxu0 0
  %2503 = vmatmul.mubr.bf16.gmra.mrb[0].mxu0 %v2407
  %v2504 = vpop.f32.mrb[0].mxu0
  %v2505 = vadd.f32 %v2412, %v2504
  %v2506 = vpop.f32.mrb[0].mxu0
  %v2507 = vpop.f32.mrb[0].mxu0
  %v2508 = vadd.f32 %v2412, %v2507
  %v2509 = vpop.f32.mrb[0].mxu0
  %2510 = vdwg.mxu0
  %v2511 = vxor.u32 %v2497, 2147483648
  %v2512 = vxor.u32 %v2500, 2147483648
  %v2513 = vxor.u32 %v2505, 2147483648
  %v2514 = vxor.u32 %v2508, 2147483648
  %v2515 = vmul.f32 %v2511, 1.442695
  %v2516 = vpow.pop %v2515
  %v2517 = vmul.f32 %v2512, 1.442695
  %v2518 = vpow.pop %v2517
  %v2519 = vmul.f32 %v2513, 1.442695
  %v2520 = vpow.pop %v2519
  %v2521 = vmul.f32 %v2514, 1.442695
  %v2522 = vpow.pop %v2521
  %v2523 = vadd.f32 %v2516, 1.0
  %v2524 = vadd.f32 %v2518, 1.0
  %v2525 = vadd.f32 %v2520, 1.0
  %v2526 = vadd.f32 %v2522, 1.0
  %v2527 = vrcp.pop %v2523
  %v2528 = vmul.f32 1.0, %v2527
  %v2529 = vrcp.pop %v2524
  %v2530 = vmul.f32 1.0, %v2529
  %v2531 = vrcp.pop %v2525
  %v2532 = vmul.f32 1.0, %v2531
  %v2533 = vrcp.pop %v2526
  %v2534 = vmul.f32 1.0, %v2533
  %v2535 = vmul.f32 %v2343, %v2528
  %v2536 = vmul.f32 %v2346, %v2530
  %v2537 = vmul.f32 %v2351, %v2532
  %v2538 = vmul.f32 %v2354, %v2534
  %v2539 = vmul.f32 %v2359, %v2528
  %v2540 = vmul.f32 %v2362, %v2530
  %v2541 = vmul.f32 %v2367, %v2532
  %v2542 = vmul.f32 %v2370, %v2534
  %v2543 = vmul.f32 %v2375, %v2528
  %v2544 = vmul.f32 %v2378, %v2530
  %v2545 = vmul.f32 %v2383, %v2532
  %v2546 = vmul.f32 %v2386, %v2534
  %2547 = vset.pattern.permute.xlu0 1
  %2548 = vperm.xlu0 %2547, %v18
  %v2549 = vpop.permute.xlu0 %2548
  %2551 = vset.pattern.permute.xlu0 1
  %2552 = vperm.xlu0 %2551, %v19
  %v2553 = vpop.permute.xlu0 %2552
  %2555 = vset.pattern.permute.xlu0 1
  %2556 = vperm.xlu0 %2555, %v20
  %v2557 = vpop.permute.xlu0 %2556
  %2559 = vset.pattern.permute.xlu0 1
  %2560 = vperm.xlu0 %2559, %v21
  %v2561 = vpop.permute.xlu0 %2560
  %v2563 = vmul.f32 %v2223, %v2549
  %v2564 = vmul.f32 %v2226, %v2553
  %v2565 = vmul.f32 %v2231, %v2557
  %v2566 = vmul.f32 %v2234, %v2561
  %v2567 = vmul.f32 %v2535, %v2549
  %v2568 = vmul.f32 %v2536, %v2553
  %v2569 = vmul.f32 %v2537, %v2557
  %v2570 = vmul.f32 %v2538, %v2561
  %v2571 = vmul.f32 %v2539, %v2549
  %v2572 = vmul.f32 %v2540, %v2553
  %v2573 = vmul.f32 %v2541, %v2557
  %v2574 = vmul.f32 %v2542, %v2561
  %v2575 = vmul.f32 %v2543, %v2549
  %v2576 = vmul.f32 %v2544, %v2553
  %v2577 = vmul.f32 %v2545, %v2557
  %v2578 = vmul.f32 %v2546, %v2561
  %2579 = vst [vmem:[%s4] sm:$0xff] %v2563
  %2580 = vst [vmem:[%s4 + $0x8] sm:$0xff] %v2567
  %2581 = vst [vmem:[%s4 + $0x10] sm:$0xff] %v2571
  %2582 = vst [vmem:[%s4 + $0x18] sm:$0xff] %v2575
  %2583 = vst [vmem:[%s4 + $0x20] sm:$0xff] %v2564
  %2584 = vst [vmem:[%s4 + $0x28] sm:$0xff] %v2568
  %2585 = vst [vmem:[%s4 + $0x30] sm:$0xff] %v2572
  %2586 = vst [vmem:[%s4 + $0x38] sm:$0xff] %v2576
  %2587 = vst [vmem:[%s4 + $0x40] sm:$0xff] %v2565
  %2588 = vst [vmem:[%s4 + $0x48] sm:$0xff] %v2569
  %2589 = vst [vmem:[%s4 + $0x50] sm:$0xff] %v2573
  %2590 = vst [vmem:[%s4 + $0x58] sm:$0xff] %v2577
  %2591 = vst [vmem:[%s4 + $0x60] sm:$0xff] %v2566
  %2592 = vst [vmem:[%s4 + $0x68] sm:$0xff] %v2570
  %2593 = vst [vmem:[%s4 + $0x70] sm:$0xff] %v2574
  %2594 = vst [vmem:[%s4 + $0x78] sm:$0xff] %v2578
  // Predicated region
  $region18: #{block_forward.4} parent=0 // pred_check
    _
  $region19: #{block_forward.4} parent=0 // pred_check_branch
    %2596 = sbr.rel (0) target = $region21
  $region20: #{block_forward.4} parent=0 // pred_region
    _
  $region21: #{block_forward.4} parent=0 // pred_fallthru
    _
  // Predicated region
  $region22: #{block_forward.4} parent=0 // pred_check
    _
  $region23: #{block_forward.4} parent=0 // pred_check_branch
    %2598 = sbr.rel (0) target = $region25
  $region24: #{block_forward.4} parent=0 // pred_region
    _
  $region25: #{block_forward.4} parent=0 // pred_fallthru
    _

</llo_original>
